<compile_context>
chip_gen: v6e
topology: v6e:2x2x1
jax: 0.10.0
libtpu: 0.0.40
codegen_flags: <defaults>
</compile_context>

<pallas_src>
import jax
import jax.numpy as jnp
import numpy as np
from jax import lax
from jax.experimental import pallas as pl
from jax.experimental.pallas import tpu as pltpu


def _round_up(v, m):
    return ((v + m - 1) // m) * m


def _silu(z):
    # z * sigmoid(z).  Reciprocal kept explicit; flip approx=True to move the
    # divide fully onto the EUP once the accuracy budget allows.
    return z * pl.reciprocal(1.0 + jnp.exp(-z))


# ------------------------------ fused kernel ------------------------------- #

def _egnn_fused_kernel(
    # node-level inputs
    x_ref, hin_ref,
    # edge-tile inputs
    row_ref, col_ref, ef_ref, emask_ref,
    # embedding weights
    embw_ref, embb_ref,
    # per-layer stacked weights (leading layer axis, blocked by the layer grid dim)
    we1_sq_ref, we1_hr_ref, we1_hc_ref, we1_ef_ref, be1_ref, we2_ref, be2_ref,
    wc1_ref, bc1_ref, wc2_ref, bc2_ref,
    wn1_h_ref, wn1_m_ref, bn1_ref, wn2_ref, bn2_ref,
    # packed lane-dense output [x | h | 0-pad]
    out_ref,
    # VMEM-resident state (persists across the whole (layer, edge-tile) grid)
    x_sc, h_sc, tbl_sc, seg_sc,
):
    f32 = jnp.float32
    bf16 = jnp.bfloat16
    layer_idx = pl.program_id(0)
    tile_idx = pl.program_id(1)
    n_layers = pl.num_programs(0)
    n_tiles = pl.num_programs(1)
    N, H = h_sc.shape
    TM = row_ref.shape[0]

    # ---- one-time init: load x, run the node embedding ----------------------
    @pl.when(jnp.logical_and(layer_idx == 0, tile_idx == 0))
    def _():
        x_sc[...] = x_ref[...]
        h_sc[...] = (
            jnp.dot(hin_ref[...], embw_ref[...], preferred_element_type=f32)
            + embb_ref[...]
        )

    # ---- per-layer init: fold edge-MLP h-projections through the gather -----
    # hWr / hWc are computed once per layer at node granularity ([N,H]x[H,H]);
    # the gather then just picks rows of [x | hWr | hWc] (exact bf16 one-hots).
    @pl.when(tile_idx == 0)
    def _():
        hcur = h_sc[...]
        hwr = jnp.dot(hcur, we1_hr_ref[0], preferred_element_type=f32)
        hwc = jnp.dot(hcur, we1_hc_ref[0], preferred_element_type=f32)
        tbl_sc[...] = jnp.concatenate([x_sc[...], hwr, hwc], axis=-1).astype(bf16)
        seg_sc[...] = jnp.zeros_like(seg_sc)

    # ---- edge tile: merged gather -> edge/coord MLPs -> fused scatter-add ---
    rc = jnp.concatenate([row_ref[...], col_ref[...]], axis=0)          # [2TM,1]
    node_ids = lax.broadcasted_iota(jnp.int32, (2 * TM, N), 1)
    onehot = (rc == node_ids).astype(bf16)                              # [2TM,N]

    gathered = jnp.dot(onehot, tbl_sc[...],
                       preferred_element_type=f32)                      # [2TM,3+2H]
    x_row = gathered[:TM, 0:3]
    x_col = gathered[TM:, 0:3]
    hwr_row = gathered[:TM, 3:3 + H]
    hwc_col = gathered[TM:, 3 + H:3 + 2 * H]

    rij = x_row - x_col                                                 # [TM,3]
    sq = jnp.sum(rij * rij, axis=-1, keepdims=True)                     # [TM,1]

    # First edge-MLP linear: the K=1 |rij|^2 column is a VPU broadcast, the h
    # terms were pre-folded through the gather; only the tiny ef projection
    # remains an MXU matmul.
    pre1 = (
        sq * we1_sq_ref[0]
        + hwr_row
        + hwc_col
        + jnp.dot(ef_ref[...], we1_ef_ref[0], preferred_element_type=f32)
        + be1_ref[0]
    )
    message = _silu(
        jnp.dot(_silu(pre1), we2_ref[0], preferred_element_type=f32) + be2_ref[0]
    )                                                                   # [TM,H]

    c1 = _silu(jnp.dot(message, wc1_ref[0], preferred_element_type=f32)
               + bc1_ref[0])
    coord_msg = jnp.dot(c1, wc2_ref[0], preferred_element_type=f32) + bc2_ref[0]
    f = rij * coord_msg                                                 # [TM,3]

    # Single fused scatter: [f | message | 1] * edge_mask aggregated with one
    # bf16 one-hot^T matmul.  The trailing ones column accumulates the degree.
    emask = emask_ref[...]                                              # [TM,1]
    fm = jnp.concatenate([f, message, jnp.ones_like(emask)], axis=-1) * emask
    seg_sc[...] += lax.dot_general(
        onehot[:TM], fm.astype(bf16), (((0,), (0,)), ((), ())),
        preferred_element_type=f32)                                     # [N,4+H]

    # ---- per-layer finalize: mean/sum aggregation + node update -------------
    @pl.when(tile_idx == n_tiles - 1)
    def _():
        seg = seg_sc[...]
        seg_f = seg[:, 0:3]
        tot_msg = seg[:, 3:3 + H]
        cnt = seg[:, 3 + H:4 + H]
        tot_f = jnp.clip(seg_f / jnp.maximum(cnt, 1.0), -100.0, 100.0)
        x_sc[...] = x_sc[...] + tot_f

        hcur = h_sc[...]
        pre_n = (
            jnp.dot(hcur, wn1_h_ref[0], preferred_element_type=f32)
            + jnp.dot(tot_msg, wn1_m_ref[0], preferred_element_type=f32)
            + bn1_ref[0]
        )
        h_sc[...] = (jnp.dot(_silu(pre_n), wn2_ref[0],
                             preferred_element_type=f32) + bn2_ref[0])

    # ---- write the packed, lane-dense output once at the very end ------------
    @pl.when(jnp.logical_and(layer_idx == n_layers - 1, tile_idx == n_tiles - 1))
    def _():
        parts = [x_sc[...], h_sc[...]]
        padw = out_ref.shape[1] - (3 + H)
        if padw > 0:
            parts.append(jnp.zeros((N, padw), f32))
        out_ref[...] = jnp.concatenate(parts, axis=-1)


# --------------------------------- wrapper --------------------------------- #

def egnn_forward(x, h, edge_index, edge_fea, emb_w, emb_b, layer_params, *,
                 edge_tile=256):
    """Fused EGNN forward: embedding + all layers in one pallas_call."""
    N = x.shape[0]
    F = h.shape[1]
    H = emb_w.shape[1]
    E = edge_fea.shape[1]
    L = len(layer_params)
    row, col = edge_index
    M = int(row.shape[0])

    # Edge tile: multiple of 8 sublanes.  Budget VMEM for the [2*tile, N] bf16
    # one-hot plus double-buffered edge blocks: on v7x (64 MiB VMEM / 32 MiB
    # scoped default) prefer ~256; v5e/v6e can afford 512 for moderate N.
    tile = max(8, min(_round_up(edge_tile, 8), _round_up(M, 8)))
    m_pad = _round_up(M, tile)
    n_tiles = m_pad // tile
    pad = m_pad - M

    row2d = jnp.pad(row.astype(jnp.int32)[:, None], ((0, pad), (0, 0)))
    col2d = jnp.pad(col.astype(jnp.int32)[:, None], ((0, pad), (0, 0)))
    ef = jnp.pad(edge_fea.astype(jnp.float32), ((0, pad), (0, 0)))
    emask = jnp.pad(jnp.ones((M, 1), jnp.float32), ((0, pad), (0, 0)))

    # Split each layer's first-linear weights so the h projections can be folded
    # through the gather, then stack all per-layer weights along a leading axis.
    kinds = [[] for _ in range(16)]
    for p in layer_params:
        (we1, be1, we2, be2, wc1, bc1, wc2, bc2, wn1, bn1, wn2, bn2) = p
        parts = (we1[0:1], we1[1:1 + H], we1[1 + H:1 + 2 * H], we1[1 + 2 * H:],
                 be1, we2, be2, wc1, bc1, wc2, bc2,
                 wn1[:H], wn1[H:], bn1, wn2, bn2)
        for lst, arr in zip(kinds, parts):
            lst.append(arr)
    stacked = [jnp.stack(lst, axis=0) for lst in kinds]

    out_w = _round_up(3 + H, 128)   # lane-dense packed output width

    node_spec = lambda shp: pl.BlockSpec(shp, lambda l, t: (0, 0))
    edge_spec = lambda w: pl.BlockSpec((tile, w), lambda l, t: (t, 0))
    wspec = lambda a, b: pl.BlockSpec((1, a, b), lambda l, t: (l, 0, 0))

    in_specs = [
        node_spec((N, 3)),        # x
        node_spec((N, F)),        # h_in
        edge_spec(1),             # row index
        edge_spec(1),             # col index
        edge_spec(E),             # edge features
        edge_spec(1),             # edge validity mask (for padded edges)
        node_spec((F, H)),        # emb_w
        node_spec((1, H)),        # emb_b
        wspec(1, H),              # we1_sq
        wspec(H, H),              # we1_hr
        wspec(H, H),              # we1_hc
        wspec(E, H),              # we1_ef
        wspec(1, H),              # be1
        wspec(H, H),              # we2
        wspec(1, H),              # be2
        wspec(H, H),              # wc1
        wspec(1, H),              # bc1
        wspec(H, 1),              # wc2
        wspec(1, 1),              # bc2
        wspec(H, H),              # wn1_h
        wspec(H, H),              # wn1_m
        wspec(1, H),              # bn1
        wspec(H, H),              # wn2
        wspec(1, H),              # bn2
    ]

    grid_spec = pltpu.PrefetchScalarGridSpec(
        num_scalar_prefetch=0,
        grid=(L, n_tiles),
        in_specs=in_specs,
        out_specs=pl.BlockSpec((N, out_w), lambda l, t: (0, 0)),
        scratch_shapes=[
            pltpu.VMEM((N, 3), jnp.float32),            # x state
            pltpu.VMEM((N, H), jnp.float32),            # h state
            pltpu.VMEM((N, 3 + 2 * H), jnp.bfloat16),   # gather table [x|hWr|hWc]
            pltpu.VMEM((N, 4 + H), jnp.float32),        # [seg_f|seg_msg|cnt] accum
        ],
    )

    packed = pl.pallas_call(
        _egnn_fused_kernel,
        out_shape=jax.ShapeDtypeStruct((N, out_w), jnp.float32),
        grid_spec=grid_spec,
        compiler_params=pltpu.CompilerParams(
            # Both axes carry VMEM-resident state (layer chaining + scatter
            # accumulation) so they must stay sequential.
            # TODO(synk): per-core partial accumulators would let the edge axis be
            #             "parallel" for v7x's 2 TensorCores.
            dimension_semantics=("arbitrary", "arbitrary")),
    )(x.astype(jnp.float32), h.astype(jnp.float32), row2d, col2d, ef, emask,
      emb_w, emb_b, *stacked)

    return packed[:, 0:3], packed[:, 3:3 + H]


# ----------------------- deterministic parameter init ---------------------- #

def _linear(key, fan_in, fan_out):
    kw, kb = jax.random.split(key)
    w = jax.random.normal(kw, (fan_in, fan_out), jnp.float32) / np.sqrt(fan_in)
    b = jax.random.normal(kb, (1, fan_out), jnp.float32) * 0.05
    return w, b


def make_layer_params(key, hidden, in_edge_nf):
    ks = jax.random.split(key, 6)
    edge_in = 1 + 2 * hidden + in_edge_nf   # n_vector_input^2 + 2H + in_edge_nf
    we1, be1 = _linear(ks[0], edge_in, hidden)
    we2, be2 = _linear(ks[1], hidden, hidden)
    wc1, bc1 = _linear(ks[2], hidden, hidden)
    wc2, bc2 = _linear(ks[3], hidden, 1)
    wn1, bn1 = _linear(ks[4], 2 * hidden, hidden)
    wn2, bn2 = _linear(ks[5], hidden, hidden)
    return (we1, be1, we2, be2, wc1, bc1, wc2, bc2, wn1, bn1, wn2, bn2)


# ----------------------------- pure-JAX reference --------------------------- #

def _ref_layer(x, h, row, col, ef, p):
    (we1, be1, we2, be2, wc1, bc1, wc2, bc2, wn1, bn1, wn2, bn2) = p

    def silu(z):
        return z * jax.nn.sigmoid(z)

    rij = x[row] - x[col]
    sq = jnp.sum(rij * rij, axis=-1, keepdims=True)
    scalar = jnp.concatenate([sq, h[row], h[col], ef], axis=-1)
    msg = silu(silu(scalar @ we1 + be1) @ we2 + be2)
    cm = silu(msg @ wc1 + bc1) @ wc2 + bc2
    f = rij * cm
    N = x.shape[0]
    seg_f = jnp.zeros((N, 3), jnp.float32).at[row].add(f)
    cnt = jnp.zeros((N, 3), jnp.float32).at[row].add(jnp.ones_like(f))
    tot_f = jnp.clip(seg_f / jnp.maximum(cnt, 1.0), -100.0, 100.0)
    x = x + tot_f
    tot_msg = jnp.zeros((N, h.shape[1]), jnp.float32).at[row].add(msg)
    nm = jnp.concatenate([h, tot_msg], axis=-1)
    h = silu(nm @ wn1 + bn1) @ wn2 + bn2
    return x, h


def _ref_forward(x, h, row, col, ef, emb_w, emb_b, layer_params):
    h = h @ emb_w + emb_b
    for p in layer_params:
        x, h = _ref_layer(x, h, row, col, ef, p)
    return x, h


# ---------------------------------- main ------------------------------------ #

if __name__ == "__main__":
    key = jax.random.PRNGKey(0)
    N, in_node_nf, in_edge_nf, hidden, n_layers = 8, 8, 4, 32, 2
    k1, k2, k3, k4, k5 = jax.random.split(key, 5)

    x = jax.random.normal(k1, (N, 3), jnp.float32)
    h_in = jax.random.normal(k2, (N, in_node_nf), jnp.float32)

    # fully connected edge set without self-loops: M = N*(N-1)
    rows_np, cols_np = np.meshgrid(np.arange(N), np.arange(N), indexing="ij")
    mask = rows_np != cols_np
    row = jnp.asarray(rows_np[mask], jnp.int32)
    col = jnp.asarray(cols_np[mask], jnp.int32)
    M = int(row.shape[0])
    edge_fea = jax.random.normal(k3, (M, in_edge_nf), jnp.float32)

    emb_w, emb_b = _linear(k4, in_node_nf, hidden)
    layer_keys = jax.random.split(k5, n_layers)
    layer_params = [make_layer_params(k, hidden, in_edge_nf) for k in layer_keys]

    # edge_tile=16 exercises multi-tile accumulation + padded-edge masking
    # (M=56 -> 4 tiles of 16 with 8 masked padding edges).
    x_out, h_out = egnn_forward(x, h_in, (row, col), edge_fea, emb_w, emb_b,
                                layer_params, edge_tile=16)
    jax.block_until_ready((x_out, h_out))

    with jax.default_matmul_precision("highest"):
        x_ref, h_ref = _ref_forward(x, h_in, row, col, edge_fea, emb_w, emb_b,
                                    layer_params)

    # bf16 MXU gathers/scatters round the gathered node-table / scattered edge
    # values to bf16 (~2^-9 relative), hence the slightly looser tolerance than
    # a pure-f32 kernel.
    np.testing.assert_allclose(np.asarray(x_out), np.asarray(x_ref),
                               rtol=4e-2, atol=5e-2)
    np.testing.assert_allclose(np.asarray(h_out), np.asarray(h_ref),
                               rtol=4e-2, atol=5e-2)

    print("KERNEL_OK")
</pallas_src>

<mosaic_0001>
module attributes {stable_mosaic.version = 11 : i64} {
  func.func @_egnn_fused_kernel(%arg0: i32, %arg1: i32, %arg2: memref<8x3xf32, #tpu.memory_space<vmem>>, %arg3: memref<8x8xf32, #tpu.memory_space<vmem>>, %arg4: memref<16x1xi32, #tpu.memory_space<vmem>>, %arg5: memref<16x1xi32, #tpu.memory_space<vmem>>, %arg6: memref<16x4xf32, #tpu.memory_space<vmem>>, %arg7: memref<16x1xf32, #tpu.memory_space<vmem>>, %arg8: memref<8x32xf32, #tpu.memory_space<vmem>>, %arg9: memref<1x32xf32, #tpu.memory_space<vmem>>, %arg10: memref<1x1x32xf32, #tpu.memory_space<vmem>>, %arg11: memref<1x32x32xf32, #tpu.memory_space<vmem>>, %arg12: memref<1x32x32xf32, #tpu.memory_space<vmem>>, %arg13: memref<1x4x32xf32, #tpu.memory_space<vmem>>, %arg14: memref<1x1x32xf32, #tpu.memory_space<vmem>>, %arg15: memref<1x32x32xf32, #tpu.memory_space<vmem>>, %arg16: memref<1x1x32xf32, #tpu.memory_space<vmem>>, %arg17: memref<1x32x32xf32, #tpu.memory_space<vmem>>, %arg18: memref<1x1x32xf32, #tpu.memory_space<vmem>>, %arg19: memref<1x32x1xf32, #tpu.memory_space<vmem>>, %arg20: memref<1x1x1xf32, #tpu.memory_space<vmem>>, %arg21: memref<1x32x32xf32, #tpu.memory_space<vmem>>, %arg22: memref<1x32x32xf32, #tpu.memory_space<vmem>>, %arg23: memref<1x1x32xf32, #tpu.memory_space<vmem>>, %arg24: memref<1x32x32xf32, #tpu.memory_space<vmem>>, %arg25: memref<1x1x32xf32, #tpu.memory_space<vmem>>, %arg26: memref<8x128xf32, #tpu.memory_space<vmem>>, %arg27: memref<8x3xf32, #tpu.memory_space<vmem>>, %arg28: memref<8x32xf32, #tpu.memory_space<vmem>>, %arg29: memref<8x67xbf16, #tpu.memory_space<vmem>>, %arg30: memref<8x36xf32, #tpu.memory_space<vmem>>) attributes {dimension_semantics = [#tpu.dimension_semantics<arbitrary>, #tpu.dimension_semantics<arbitrary>], iteration_bounds = array<i64: 2, 4>, scalar_prefetch = 0 : i64, scratch_operands = 4 : i64, tpu.core_type = #tpu.core_type<tc>, window_params = [{pipeline_mode = #tpu.pipeline_mode<synchronous>, transform_indices = @transform_0, window_bounds = array<i64: 8, 3>}, {pipeline_mode = #tpu.pipeline_mode<synchronous>, transform_indices = @transform_1, window_bounds = array<i64: 8, 8>}, {transform_indices = @transform_2, window_bounds = array<i64: 16, 1>}, {transform_indices = @transform_3, window_bounds = array<i64: 16, 1>}, {transform_indices = @transform_4, window_bounds = array<i64: 16, 4>}, {transform_indices = @transform_5, window_bounds = array<i64: 16, 1>}, {pipeline_mode = #tpu.pipeline_mode<synchronous>, transform_indices = @transform_6, window_bounds = array<i64: 8, 32>}, {pipeline_mode = #tpu.pipeline_mode<synchronous>, transform_indices = @transform_7, window_bounds = array<i64: 1, 32>}, {transform_indices = @transform_8, window_bounds = array<i64: 1, 1, 32>}, {transform_indices = @transform_9, window_bounds = array<i64: 1, 32, 32>}, {transform_indices = @transform_10, window_bounds = array<i64: 1, 32, 32>}, {transform_indices = @transform_11, window_bounds = array<i64: 1, 4, 32>}, {transform_indices = @transform_12, window_bounds = array<i64: 1, 1, 32>}, {transform_indices = @transform_13, window_bounds = array<i64: 1, 32, 32>}, {transform_indices = @transform_14, window_bounds = array<i64: 1, 1, 32>}, {transform_indices = @transform_15, window_bounds = array<i64: 1, 32, 32>}, {transform_indices = @transform_16, window_bounds = array<i64: 1, 1, 32>}, {transform_indices = @transform_17, window_bounds = array<i64: 1, 32, 1>}, {transform_indices = @transform_18, window_bounds = array<i64: 1, 1, 1>}, {transform_indices = @transform_19, window_bounds = array<i64: 1, 32, 32>}, {transform_indices = @transform_20, window_bounds = array<i64: 1, 32, 32>}, {transform_indices = @transform_21, window_bounds = array<i64: 1, 1, 32>}, {transform_indices = @transform_22, window_bounds = array<i64: 1, 32, 32>}, {transform_indices = @transform_23, window_bounds = array<i64: 1, 1, 32>}, {pipeline_mode = #tpu.pipeline_mode<synchronous>, transform_indices = @transform_24, window_bounds = array<i64: 8, 128>}]} {
    %c0_i32 = arith.constant 0 : i32
    %0 = arith.cmpi eq, %arg0, %c0_i32 : i32
    %c0_i32_0 = arith.constant 0 : i32
    %1 = arith.cmpi eq, %arg1, %c0_i32_0 : i32
    %2 = arith.andi %0, %1 : i1
    %3 = arith.extui %2 : i1 to i32
    %c0_i32_1 = arith.constant 0 : i32
    %4 = arith.cmpi ne, %3, %c0_i32_1 : i32
    scf.if %4 {
      %c0_60 = arith.constant 0 : index
      %c0_61 = arith.constant 0 : index
      %106 = vector.load %arg2[%c0_60, %c0_61] : memref<8x3xf32, #tpu.memory_space<vmem>>, vector<8x3xf32>
      %c0_62 = arith.constant 0 : index
      %c0_63 = arith.constant 0 : index
      %107 = vector.load %arg27[%c0_62, %c0_63] : memref<8x3xf32, #tpu.memory_space<vmem>>, vector<8x3xf32>
      tpu.vector_store %arg27[%c0_62, %c0_63], %106 {strides = array<i32>} : memref<8x3xf32, #tpu.memory_space<vmem>>, vector<8x3xf32>,
      %c0_64 = arith.constant 0 : index
      %c0_65 = arith.constant 0 : index
      %108 = vector.load %arg3[%c0_64, %c0_65] : memref<8x8xf32, #tpu.memory_space<vmem>>, vector<8x8xf32>
      %c0_66 = arith.constant 0 : index
      %c0_67 = arith.constant 0 : index
      %109 = vector.load %arg8[%c0_66, %c0_67] : memref<8x32xf32, #tpu.memory_space<vmem>>, vector<8x32xf32>
      %cst_68 = arith.constant dense<0.000000e+00> : vector<8x32xf32>
      %110 = tpu.matmul %108, %109, %cst_68 {dimension_numbers = #tpu.dot_dimension_numbers<[1], [0], [0], [1], [0, 0, 1, 1], [], []>} : vector<8x8xf32>, vector<8x32xf32>, vector<8x32xf32> -> vector<8x32xf32>
      %c0_69 = arith.constant 0 : index
      %c0_70 = arith.constant 0 : index
      %111 = vector.load %arg9[%c0_69, %c0_70] : memref<1x32xf32, #tpu.memory_space<vmem>>, vector<1x32xf32>
      %112 = vector.broadcast %111 : vector<1x32xf32> to vector<8x32xf32>
      %113 = arith.addf %110, %112 : vector<8x32xf32>
      %c0_71 = arith.constant 0 : index
      %c0_72 = arith.constant 0 : index
      %114 = vector.load %arg28[%c0_71, %c0_72] : memref<8x32xf32, #tpu.memory_space<vmem>>, vector<8x32xf32>
      tpu.vector_store %arg28[%c0_71, %c0_72], %113 {strides = array<i32>} : memref<8x32xf32, #tpu.memory_space<vmem>>, vector<8x32xf32>,
    } else {
    }
    %c0_i32_2 = arith.constant 0 : i32
    %5 = arith.cmpi eq, %arg1, %c0_i32_2 : i32
    %6 = arith.extui %5 : i1 to i32
    %c0_i32_3 = arith.constant 0 : i32
    %7 = arith.cmpi ne, %6, %c0_i32_3 : i32
    scf.if %7 {
      %c0_60 = arith.constant 0 : index
      %c0_61 = arith.constant 0 : index
      %106 = vector.load %arg28[%c0_60, %c0_61] : memref<8x32xf32, #tpu.memory_space<vmem>>, vector<8x32xf32>
      %c0_62 = arith.constant 0 : index
      %c0_63 = arith.constant 0 : index
      %c0_64 = arith.constant 0 : index
      %107 = vector.load %arg11[%c0_62, %c0_63, %c0_64] : memref<1x32x32xf32, #tpu.memory_space<vmem>>, vector<1x32x32xf32>
      %108 = vector.shape_cast %107 : vector<1x32x32xf32> to vector<32x32xf32>
      %cst_65 = arith.constant dense<0.000000e+00> : vector<8x32xf32>
      %109 = tpu.matmul %106, %108, %cst_65 {dimension_numbers = #tpu.dot_dimension_numbers<[1], [0], [0], [1], [0, 0, 1, 1], [], []>} : vector<8x32xf32>, vector<32x32xf32>, vector<8x32xf32> -> vector<8x32xf32>
      %c0_66 = arith.constant 0 : index
      %c0_67 = arith.constant 0 : index
      %c0_68 = arith.constant 0 : index
      %110 = vector.load %arg12[%c0_66, %c0_67, %c0_68] : memref<1x32x32xf32, #tpu.memory_space<vmem>>, vector<1x32x32xf32>
      %111 = vector.shape_cast %110 : vector<1x32x32xf32> to vector<32x32xf32>
      %cst_69 = arith.constant dense<0.000000e+00> : vector<8x32xf32>
      %112 = tpu.matmul %106, %111, %cst_69 {dimension_numbers = #tpu.dot_dimension_numbers<[1], [0], [0], [1], [0, 0, 1, 1], [], []>} : vector<8x32xf32>, vector<32x32xf32>, vector<8x32xf32> -> vector<8x32xf32>
      %c0_70 = arith.constant 0 : index
      %c0_71 = arith.constant 0 : index
      %113 = vector.load %arg27[%c0_70, %c0_71] : memref<8x3xf32, #tpu.memory_space<vmem>>, vector<8x3xf32>
      %114 = tpu.concatenate %113, %109, %112 in 1 : vector<8x3xf32>, vector<8x32xf32>, vector<8x32xf32> -> vector<8x67xf32>
      %115 = arith.truncf %114 : vector<8x67xf32> to vector<8x67xbf16>
      %c0_72 = arith.constant 0 : index
      %c0_73 = arith.constant 0 : index
      %116 = vector.load %arg29[%c0_72, %c0_73] : memref<8x67xbf16, #tpu.memory_space<vmem>>, vector<8x67xbf16>
      tpu.vector_store %arg29[%c0_72, %c0_73], %115 {strides = array<i32>} : memref<8x67xbf16, #tpu.memory_space<vmem>>, vector<8x67xbf16>,
      %cst_74 = arith.constant 0.000000e+00 : f32
      %117 = vector.broadcast %cst_74 : f32 to vector<8x36xf32>
      %c0_75 = arith.constant 0 : index
      %c0_76 = arith.constant 0 : index
      %118 = vector.load %arg30[%c0_75, %c0_76] : memref<8x36xf32, #tpu.memory_space<vmem>>, vector<8x36xf32>
      tpu.vector_store %arg30[%c0_75, %c0_76], %117 {strides = array<i32>} : memref<8x36xf32, #tpu.memory_space<vmem>>, vector<8x36xf32>,
    } else {
    }
    %c0 = arith.constant 0 : index
    %c0_4 = arith.constant 0 : index
    %8 = vector.load %arg4[%c0, %c0_4] : memref<16x1xi32, #tpu.memory_space<vmem>>, vector<16x1xi32>
    %c0_5 = arith.constant 0 : index
    %c0_6 = arith.constant 0 : index
    %9 = vector.load %arg5[%c0_5, %c0_6] : memref<16x1xi32, #tpu.memory_space<vmem>>, vector<16x1xi32>
    %10 = tpu.concatenate %8, %9 in 0 : vector<16x1xi32>, vector<16x1xi32> -> vector<32x1xi32>
    %11 = tpu.iota {dimensions = array<i32: 1>} : vector<32x8xi32>
    %12 = vector.broadcast %10 : vector<32x1xi32> to vector<32x8xi32>
    %13 = arith.cmpi eq, %12, %11 : vector<32x8xi32>
    %14 = arith.extui %13 : vector<32x8xi1> to vector<32x8xi32>
    %15 = arith.sitofp %14 : vector<32x8xi32> to vector<32x8xf32>
    %16 = arith.truncf %15 : vector<32x8xf32> to vector<32x8xbf16>
    %c0_7 = arith.constant 0 : index
    %c0_8 = arith.constant 0 : index
    %17 = vector.load %arg29[%c0_7, %c0_8] : memref<8x67xbf16, #tpu.memory_space<vmem>>, vector<8x67xbf16>
    %cst = arith.constant dense<0.000000e+00> : vector<32x67xf32>
    %18 = tpu.matmul %16, %17, %cst {dimension_numbers = #tpu.dot_dimension_numbers<[1], [0], [0], [1], [0, 0, 1, 1], [], []>} : vector<32x8xbf16>, vector<8x67xbf16>, vector<32x67xf32> -> vector<32x67xf32>
    %19 = vector.extract_strided_slice %18 {offsets = [0, 0], sizes = [16, 3], strides = [1, 1]} : vector<32x67xf32> to vector<16x3xf32>
    %20 = vector.extract_strided_slice %18 {offsets = [16, 0], sizes = [16, 3], strides = [1, 1]} : vector<32x67xf32> to vector<16x3xf32>
    %21 = vector.extract_strided_slice %18 {offsets = [0, 3], sizes = [16, 32], strides = [1, 1]} : vector<32x67xf32> to vector<16x32xf32>
    %22 = vector.extract_strided_slice %18 {offsets = [16, 35], sizes = [16, 32], strides = [1, 1]} : vector<32x67xf32> to vector<16x32xf32>
    %23 = arith.subf %19, %20 : vector<16x3xf32>
    %24 = arith.mulf %23, %23 : vector<16x3xf32>
    %cst_9 = arith.constant dense<0.000000e+00> : vector<16xf32>
    %25 = vector.multi_reduction <add>, %24, %cst_9 [1] : vector<16x3xf32> to vector<16xf32>
    %26 = vector.shape_cast %25 : vector<16xf32> to vector<16x1xf32>
    %c0_10 = arith.constant 0 : index
    %c0_11 = arith.constant 0 : index
    %c0_12 = arith.constant 0 : index
    %27 = vector.load %arg10[%c0_10, %c0_11, %c0_12] : memref<1x1x32xf32, #tpu.memory_space<vmem>>, vector<1x1x32xf32>
    %28 = vector.shape_cast %27 : vector<1x1x32xf32> to vector<1x32xf32>
    %29 = vector.broadcast %26 : vector<16x1xf32> to vector<16x32xf32>
    %30 = vector.broadcast %28 : vector<1x32xf32> to vector<16x32xf32>
    %31 = arith.mulf %29, %30 : vector<16x32xf32>
    %32 = arith.addf %31, %21 : vector<16x32xf32>
    %33 = arith.addf %32, %22 : vector<16x32xf32>
    %c0_13 = arith.constant 0 : index
    %c0_14 = arith.constant 0 : index
    %34 = vector.load %arg6[%c0_13, %c0_14] : memref<16x4xf32, #tpu.memory_space<vmem>>, vector<16x4xf32>
    %c0_15 = arith.constant 0 : index
    %c0_16 = arith.constant 0 : index
    %c0_17 = arith.constant 0 : index
    %35 = vector.load %arg13[%c0_15, %c0_16, %c0_17] : memref<1x4x32xf32, #tpu.memory_space<vmem>>, vector<1x4x32xf32>
    %36 = vector.shape_cast %35 : vector<1x4x32xf32> to vector<4x32xf32>
    %cst_18 = arith.constant dense<0.000000e+00> : vector<16x32xf32>
    %37 = tpu.matmul %34, %36, %cst_18 {dimension_numbers = #tpu.dot_dimension_numbers<[1], [0], [0], [1], [0, 0, 1, 1], [], []>} : vector<16x4xf32>, vector<4x32xf32>, vector<16x32xf32> -> vector<16x32xf32>
    %38 = arith.addf %33, %37 : vector<16x32xf32>
    %c0_19 = arith.constant 0 : index
    %c0_20 = arith.constant 0 : index
    %c0_21 = arith.constant 0 : index
    %39 = vector.load %arg14[%c0_19, %c0_20, %c0_21] : memref<1x1x32xf32, #tpu.memory_space<vmem>>, vector<1x1x32xf32>
    %40 = vector.shape_cast %39 : vector<1x1x32xf32> to vector<1x32xf32>
    %41 = vector.broadcast %40 : vector<1x32xf32> to vector<16x32xf32>
    %42 = arith.addf %38, %41 : vector<16x32xf32>
    %cst_22 = arith.constant 0.000000e+00 : f32
    %43 = vector.broadcast %cst_22 : f32 to vector<16x32xf32>
    %44 = arith.subf %43, %42 : vector<16x32xf32>
    %45 = math.exp %44 : vector<16x32xf32>
    %cst_23 = arith.constant 1.000000e+00 : f32
    %46 = vector.broadcast %cst_23 : f32 to vector<16x32xf32>
    %47 = arith.addf %46, %45 : vector<16x32xf32>
    %48 = tpu.reciprocal %47 : vector<16x32xf32> -> vector<16x32xf32>
    %49 = arith.mulf %42, %48 : vector<16x32xf32>
    %c0_24 = arith.constant 0 : index
    %c0_25 = arith.constant 0 : index
    %c0_26 = arith.constant 0 : index
    %50 = vector.load %arg15[%c0_24, %c0_25, %c0_26] : memref<1x32x32xf32, #tpu.memory_space<vmem>>, vector<1x32x32xf32>
    %51 = vector.shape_cast %50 : vector<1x32x32xf32> to vector<32x32xf32>
    %cst_27 = arith.constant dense<0.000000e+00> : vector<16x32xf32>
    %52 = tpu.matmul %49, %51, %cst_27 {dimension_numbers = #tpu.dot_dimension_numbers<[1], [0], [0], [1], [0, 0, 1, 1], [], []>} : vector<16x32xf32>, vector<32x32xf32>, vector<16x32xf32> -> vector<16x32xf32>
    %c0_28 = arith.constant 0 : index
    %c0_29 = arith.constant 0 : index
    %c0_30 = arith.constant 0 : index
    %53 = vector.load %arg16[%c0_28, %c0_29, %c0_30] : memref<1x1x32xf32, #tpu.memory_space<vmem>>, vector<1x1x32xf32>
    %54 = vector.shape_cast %53 : vector<1x1x32xf32> to vector<1x32xf32>
    %55 = vector.broadcast %54 : vector<1x32xf32> to vector<16x32xf32>
    %56 = arith.addf %52, %55 : vector<16x32xf32>
    %cst_31 = arith.constant 0.000000e+00 : f32
    %57 = vector.broadcast %cst_31 : f32 to vector<16x32xf32>
    %58 = arith.subf %57, %56 : vector<16x32xf32>
    %59 = math.exp %58 : vector<16x32xf32>
    %cst_32 = arith.constant 1.000000e+00 : f32
    %60 = vector.broadcast %cst_32 : f32 to vector<16x32xf32>
    %61 = arith.addf %60, %59 : vector<16x32xf32>
    %62 = tpu.reciprocal %61 : vector<16x32xf32> -> vector<16x32xf32>
    %63 = arith.mulf %56, %62 : vector<16x32xf32>
    %c0_33 = arith.constant 0 : index
    %c0_34 = arith.constant 0 : index
    %c0_35 = arith.constant 0 : index
    %64 = vector.load %arg17[%c0_33, %c0_34, %c0_35] : memref<1x32x32xf32, #tpu.memory_space<vmem>>, vector<1x32x32xf32>
    %65 = vector.shape_cast %64 : vector<1x32x32xf32> to vector<32x32xf32>
    %cst_36 = arith.constant dense<0.000000e+00> : vector<16x32xf32>
    %66 = tpu.matmul %63, %65, %cst_36 {dimension_numbers = #tpu.dot_dimension_numbers<[1], [0], [0], [1], [0, 0, 1, 1], [], []>} : vector<16x32xf32>, vector<32x32xf32>, vector<16x32xf32> -> vector<16x32xf32>
    %c0_37 = arith.constant 0 : index
    %c0_38 = arith.constant 0 : index
    %c0_39 = arith.constant 0 : index
    %67 = vector.load %arg18[%c0_37, %c0_38, %c0_39] : memref<1x1x32xf32, #tpu.memory_space<vmem>>, vector<1x1x32xf32>
    %68 = vector.shape_cast %67 : vector<1x1x32xf32> to vector<1x32xf32>
    %69 = vector.broadcast %68 : vector<1x32xf32> to vector<16x32xf32>
    %70 = arith.addf %66, %69 : vector<16x32xf32>
    %cst_40 = arith.constant 0.000000e+00 : f32
    %71 = vector.broadcast %cst_40 : f32 to vector<16x32xf32>
    %72 = arith.subf %71, %70 : vector<16x32xf32>
    %73 = math.exp %72 : vector<16x32xf32>
    %cst_41 = arith.constant 1.000000e+00 : f32
    %74 = vector.broadcast %cst_41 : f32 to vector<16x32xf32>
    %75 = arith.addf %74, %73 : vector<16x32xf32>
    %76 = tpu.reciprocal %75 : vector<16x32xf32> -> vector<16x32xf32>
    %77 = arith.mulf %70, %76 : vector<16x32xf32>
    %c0_42 = arith.constant 0 : index
    %c0_43 = arith.constant 0 : index
    %c0_44 = arith.constant 0 : index
    %78 = vector.load %arg19[%c0_42, %c0_43, %c0_44] : memref<1x32x1xf32, #tpu.memory_space<vmem>>, vector<1x32x1xf32>
    %79 = vector.shape_cast %78 : vector<1x32x1xf32> to vector<32x1xf32>
    %cst_45 = arith.constant dense<0.000000e+00> : vector<16x1xf32>
    %80 = tpu.matmul %77, %79, %cst_45 {dimension_numbers = #tpu.dot_dimension_numbers<[1], [0], [0], [1], [0, 0, 1, 1], [], []>} : vector<16x32xf32>, vector<32x1xf32>, vector<16x1xf32> -> vector<16x1xf32>
    %c0_46 = arith.constant 0 : index
    %c0_47 = arith.constant 0 : index
    %c0_48 = arith.constant 0 : index
    %81 = vector.load %arg20[%c0_46, %c0_47, %c0_48] : memref<1x1x1xf32, #tpu.memory_space<vmem>>, vector<1x1x1xf32>
    %82 = vector.shape_cast %81 : vector<1x1x1xf32> to vector<1x1xf32>
    %83 = vector.broadcast %82 : vector<1x1xf32> to vector<16x1xf32>
    %84 = arith.addf %80, %83 : vector<16x1xf32>
    %85 = vector.broadcast %84 : vector<16x1xf32> to vector<16x3xf32>
    %86 = arith.mulf %23, %85 : vector<16x3xf32>
    %c0_49 = arith.constant 0 : index
    %c0_50 = arith.constant 0 : index
    %87 = vector.load %arg7[%c0_49, %c0_50] : memref<16x1xf32, #tpu.memory_space<vmem>>, vector<16x1xf32>
    %cst_51 = arith.constant 1.000000e+00 : f32
    %88 = vector.broadcast %cst_51 : f32 to vector<16x1xf32>
    %89 = tpu.concatenate %86, %63, %88 in 1 : vector<16x3xf32>, vector<16x32xf32>, vector<16x1xf32> -> vector<16x36xf32>
    %90 = vector.broadcast %87 : vector<16x1xf32> to vector<16x36xf32>
    %91 = arith.mulf %89, %90 : vector<16x36xf32>
    %c0_52 = arith.constant 0 : index
    %c0_53 = arith.constant 0 : index
    %92 = vector.load %arg30[%c0_52, %c0_53] : memref<8x36xf32, #tpu.memory_space<vmem>>, vector<8x36xf32>
    %93 = vector.extract_strided_slice %16 {offsets = [0, 0], sizes = [16, 8], strides = [1, 1]} : vector<32x8xbf16> to vector<16x8xbf16>
    %94 = arith.truncf %91 : vector<16x36xf32> to vector<16x36xbf16>
    %cst_54 = arith.constant dense<0.000000e+00> : vector<8x36xf32>
    %95 = tpu.matmul %93, %94, %cst_54 {dimension_numbers = #tpu.dot_dimension_numbers<[0], [0], [1], [1], [0, 1, 1, 1], [], []>} : vector<16x8xbf16>, vector<16x36xbf16>, vector<8x36xf32> -> vector<8x36xf32>
    %96 = arith.addf %92, %95 : vector<8x36xf32>
    %c0_55 = arith.constant 0 : index
    %c0_56 = arith.constant 0 : index
    %97 = vector.load %arg30[%c0_55, %c0_56] : memref<8x36xf32, #tpu.memory_space<vmem>>, vector<8x36xf32>
    tpu.vector_store %arg30[%c0_55, %c0_56], %96 {strides = array<i32>} : memref<8x36xf32, #tpu.memory_space<vmem>>, vector<8x36xf32>,
    %c3_i32 = arith.constant 3 : i32
    %98 = arith.cmpi eq, %arg1, %c3_i32 : i32
    %99 = arith.extui %98 : i1 to i32
    %c0_i32_57 = arith.constant 0 : i32
    %100 = arith.cmpi ne, %99, %c0_i32_57 : i32
    scf.if %100 {
      %c0_60 = arith.constant 0 : index
      %c0_61 = arith.constant 0 : index
      %106 = vector.load %arg30[%c0_60, %c0_61] : memref<8x36xf32, #tpu.memory_space<vmem>>, vector<8x36xf32>
      %107 = vector.extract_strided_slice %106 {offsets = [0, 0], sizes = [8, 3], strides = [1, 1]} : vector<8x36xf32> to vector<8x3xf32>
      %108 = vector.extract_strided_slice %106 {offsets = [0, 3], sizes = [8, 32], strides = [1, 1]} : vector<8x36xf32> to vector<8x32xf32>
      %109 = vector.extract_strided_slice %106 {offsets = [0, 35], sizes = [8, 1], strides = [1, 1]} : vector<8x36xf32> to vector<8x1xf32>
      %cst_62 = arith.constant 1.000000e+00 : f32
      %110 = vector.broadcast %cst_62 : f32 to vector<8x1xf32>
      %111 = arith.maximumf %109, %110 : vector<8x1xf32>
      %112 = vector.broadcast %111 : vector<8x1xf32> to vector<8x3xf32>
      %113 = arith.divf %107, %112 : vector<8x3xf32>
      %cst_63 = arith.constant -1.000000e+02 : f32
      %cst_64 = arith.constant 1.000000e+02 : f32
      %114 = vector.broadcast %cst_63 : f32 to vector<8x3xf32>
      %115 = arith.maximumf %114, %113 : vector<8x3xf32>
      %116 = vector.broadcast %cst_64 : f32 to vector<8x3xf32>
      %117 = arith.minimumf %116, %115 : vector<8x3xf32>
      %c0_65 = arith.constant 0 : index
      %c0_66 = arith.constant 0 : index
      %118 = vector.load %arg27[%c0_65, %c0_66] : memref<8x3xf32, #tpu.memory_space<vmem>>, vector<8x3xf32>
      %119 = arith.addf %118, %117 : vector<8x3xf32>
      %c0_67 = arith.constant 0 : index
      %c0_68 = arith.constant 0 : index
      %120 = vector.load %arg27[%c0_67, %c0_68] : memref<8x3xf32, #tpu.memory_space<vmem>>, vector<8x3xf32>
      tpu.vector_store %arg27[%c0_67, %c0_68], %119 {strides = array<i32>} : memref<8x3xf32, #tpu.memory_space<vmem>>, vector<8x3xf32>,
      %c0_69 = arith.constant 0 : index
      %c0_70 = arith.constant 0 : index
      %121 = vector.load %arg28[%c0_69, %c0_70] : memref<8x32xf32, #tpu.memory_space<vmem>>, vector<8x32xf32>
      %c0_71 = arith.constant 0 : index
      %c0_72 = arith.constant 0 : index
      %c0_73 = arith.constant 0 : index
      %122 = vector.load %arg21[%c0_71, %c0_72, %c0_73] : memref<1x32x32xf32, #tpu.memory_space<vmem>>, vector<1x32x32xf32>
      %123 = vector.shape_cast %122 : vector<1x32x32xf32> to vector<32x32xf32>
      %cst_74 = arith.constant dense<0.000000e+00> : vector<8x32xf32>
      %124 = tpu.matmul %121, %123, %cst_74 {dimension_numbers = #tpu.dot_dimension_numbers<[1], [0], [0], [1], [0, 0, 1, 1], [], []>} : vector<8x32xf32>, vector<32x32xf32>, vector<8x32xf32> -> vector<8x32xf32>
      %c0_75 = arith.constant 0 : index
      %c0_76 = arith.constant 0 : index
      %c0_77 = arith.constant 0 : index
      %125 = vector.load %arg22[%c0_75, %c0_76, %c0_77] : memref<1x32x32xf32, #tpu.memory_space<vmem>>, vector<1x32x32xf32>
      %126 = vector.shape_cast %125 : vector<1x32x32xf32> to vector<32x32xf32>
      %cst_78 = arith.constant dense<0.000000e+00> : vector<8x32xf32>
      %127 = tpu.matmul %108, %126, %cst_78 {dimension_numbers = #tpu.dot_dimension_numbers<[1], [0], [0], [1], [0, 0, 1, 1], [], []>} : vector<8x32xf32>, vector<32x32xf32>, vector<8x32xf32> -> vector<8x32xf32>
      %128 = arith.addf %124, %127 : vector<8x32xf32>
      %c0_79 = arith.constant 0 : index
      %c0_80 = arith.constant 0 : index
      %c0_81 = arith.constant 0 : index
      %129 = vector.load %arg23[%c0_79, %c0_80, %c0_81] : memref<1x1x32xf32, #tpu.memory_space<vmem>>, vector<1x1x32xf32>
      %130 = vector.shape_cast %129 : vector<1x1x32xf32> to vector<1x32xf32>
      %131 = vector.broadcast %130 : vector<1x32xf32> to vector<8x32xf32>
      %132 = arith.addf %128, %131 : vector<8x32xf32>
      %cst_82 = arith.constant 0.000000e+00 : f32
      %133 = vector.broadcast %cst_82 : f32 to vector<8x32xf32>
      %134 = arith.subf %133, %132 : vector<8x32xf32>
      %135 = math.exp %134 : vector<8x32xf32>
      %cst_83 = arith.constant 1.000000e+00 : f32
      %136 = vector.broadcast %cst_83 : f32 to vector<8x32xf32>
      %137 = arith.addf %136, %135 : vector<8x32xf32>
      %138 = tpu.reciprocal %137 : vector<8x32xf32> -> vector<8x32xf32>
      %139 = arith.mulf %132, %138 : vector<8x32xf32>
      %c0_84 = arith.constant 0 : index
      %c0_85 = arith.constant 0 : index
      %c0_86 = arith.constant 0 : index
      %140 = vector.load %arg24[%c0_84, %c0_85, %c0_86] : memref<1x32x32xf32, #tpu.memory_space<vmem>>, vector<1x32x32xf32>
      %141 = vector.shape_cast %140 : vector<1x32x32xf32> to vector<32x32xf32>
      %cst_87 = arith.constant dense<0.000000e+00> : vector<8x32xf32>
      %142 = tpu.matmul %139, %141, %cst_87 {dimension_numbers = #tpu.dot_dimension_numbers<[1], [0], [0], [1], [0, 0, 1, 1], [], []>} : vector<8x32xf32>, vector<32x32xf32>, vector<8x32xf32> -> vector<8x32xf32>
      %c0_88 = arith.constant 0 : index
      %c0_89 = arith.constant 0 : index
      %c0_90 = arith.constant 0 : index
      %143 = vector.load %arg25[%c0_88, %c0_89, %c0_90] : memref<1x1x32xf32, #tpu.memory_space<vmem>>, vector<1x1x32xf32>
      %144 = vector.shape_cast %143 : vector<1x1x32xf32> to vector<1x32xf32>
      %145 = vector.broadcast %144 : vector<1x32xf32> to vector<8x32xf32>
      %146 = arith.addf %142, %145 : vector<8x32xf32>
      %c0_91 = arith.constant 0 : index
      %c0_92 = arith.constant 0 : index
      %147 = vector.load %arg28[%c0_91, %c0_92] : memref<8x32xf32, #tpu.memory_space<vmem>>, vector<8x32xf32>
      tpu.vector_store %arg28[%c0_91, %c0_92], %146 {strides = array<i32>} : memref<8x32xf32, #tpu.memory_space<vmem>>, vector<8x32xf32>,
    } else {
    }
    %c1_i32 = arith.constant 1 : i32
    %101 = arith.cmpi eq, %arg0, %c1_i32 : i32
    %c3_i32_58 = arith.constant 3 : i32
    %102 = arith.cmpi eq, %arg1, %c3_i32_58 : i32
    %103 = arith.andi %101, %102 : i1
    %104 = arith.extui %103 : i1 to i32
    %c0_i32_59 = arith.constant 0 : i32
    %105 = arith.cmpi ne, %104, %c0_i32_59 : i32
    scf.if %105 {
      %c0_60 = arith.constant 0 : index
      %c0_61 = arith.constant 0 : index
      %106 = vector.load %arg27[%c0_60, %c0_61] : memref<8x3xf32, #tpu.memory_space<vmem>>, vector<8x3xf32>
      %c0_62 = arith.constant 0 : index
      %c0_63 = arith.constant 0 : index
      %107 = vector.load %arg28[%c0_62, %c0_63] : memref<8x32xf32, #tpu.memory_space<vmem>>, vector<8x32xf32>
      %cst_64 = arith.constant 0.000000e+00 : f32
      %108 = vector.broadcast %cst_64 : f32 to vector<8x93xf32>
      %109 = tpu.concatenate %106, %107, %108 in 1 : vector<8x3xf32>, vector<8x32xf32>, vector<8x93xf32> -> vector<8x128xf32>
      %c0_65 = arith.constant 0 : index
      %c0_66 = arith.constant 0 : index
      %110 = vector.load %arg26[%c0_65, %c0_66] : memref<8x128xf32, #tpu.memory_space<vmem>>, vector<8x128xf32>
      tpu.vector_store %arg26[%c0_65, %c0_66], %109 {strides = array<i32>} : memref<8x128xf32, #tpu.memory_space<vmem>>, vector<8x128xf32>,
    } else {
    }
    return
  }
  func.func @transform_0(%arg0: i32, %arg1: i32) -> (i32, i32) {
    %c0_i32 = arith.constant 0 : i32
    %c0_i32_0 = arith.constant 0 : i32
    %c0_i32_1 = arith.constant 0 : i32
    return %c0_i32, %c0_i32_0 : i32, i32
  }
  func.func @transform_1(%arg0: i32, %arg1: i32) -> (i32, i32) {
    %c0_i32 = arith.constant 0 : i32
    %c0_i32_0 = arith.constant 0 : i32
    %c0_i32_1 = arith.constant 0 : i32
    return %c0_i32, %c0_i32_0 : i32, i32
  }
  func.func @transform_2(%arg0: i32, %arg1: i32) -> (i32, i32) {
    %c0_i32 = arith.constant 0 : i32
    %c0_i32_0 = arith.constant 0 : i32
    return %arg1, %c0_i32 : i32, i32
  }
  func.func @transform_3(%arg0: i32, %arg1: i32) -> (i32, i32) {
    %c0_i32 = arith.constant 0 : i32
    %c0_i32_0 = arith.constant 0 : i32
    return %arg1, %c0_i32 : i32, i32
  }
  func.func @transform_4(%arg0: i32, %arg1: i32) -> (i32, i32) {
    %c0_i32 = arith.constant 0 : i32
    %c0_i32_0 = arith.constant 0 : i32
    return %arg1, %c0_i32 : i32, i32
  }
  func.func @transform_5(%arg0: i32, %arg1: i32) -> (i32, i32) {
    %c0_i32 = arith.constant 0 : i32
    %c0_i32_0 = arith.constant 0 : i32
    return %arg1, %c0_i32 : i32, i32
  }
  func.func @transform_6(%arg0: i32, %arg1: i32) -> (i32, i32) {
    %c0_i32 = arith.constant 0 : i32
    %c0_i32_0 = arith.constant 0 : i32
    %c0_i32_1 = arith.constant 0 : i32
    return %c0_i32, %c0_i32_0 : i32, i32
  }
  func.func @transform_7(%arg0: i32, %arg1: i32) -> (i32, i32) {
    %c0_i32 = arith.constant 0 : i32
    %c0_i32_0 = arith.constant 0 : i32
    %c0_i32_1 = arith.constant 0 : i32
    return %c0_i32, %c0_i32_0 : i32, i32
  }
  func.func @transform_8(%arg0: i32, %arg1: i32) -> (i32, i32, i32) {
    %c0_i32 = arith.constant 0 : i32
    %c0_i32_0 = arith.constant 0 : i32
    %c0_i32_1 = arith.constant 0 : i32
    return %arg0, %c0_i32, %c0_i32_0 : i32, i32, i32
  }
  func.func @transform_9(%arg0: i32, %arg1: i32) -> (i32, i32, i32) {
    %c0_i32 = arith.constant 0 : i32
    %c0_i32_0 = arith.constant 0 : i32
    %c0_i32_1 = arith.constant 0 : i32
    return %arg0, %c0_i32, %c0_i32_0 : i32, i32, i32
  }
  func.func @transform_10(%arg0: i32, %arg1: i32) -> (i32, i32, i32) {
    %c0_i32 = arith.constant 0 : i32
    %c0_i32_0 = arith.constant 0 : i32
    %c0_i32_1 = arith.constant 0 : i32
    return %arg0, %c0_i32, %c0_i32_0 : i32, i32, i32
  }
  func.func @transform_11(%arg0: i32, %arg1: i32) -> (i32, i32, i32) {
    %c0_i32 = arith.constant 0 : i32
    %c0_i32_0 = arith.constant 0 : i32
    %c0_i32_1 = arith.constant 0 : i32
    return %arg0, %c0_i32, %c0_i32_0 : i32, i32, i32
  }
  func.func @transform_12(%arg0: i32, %arg1: i32) -> (i32, i32, i32) {
    %c0_i32 = arith.constant 0 : i32
    %c0_i32_0 = arith.constant 0 : i32
    %c0_i32_1 = arith.constant 0 : i32
    return %arg0, %c0_i32, %c0_i32_0 : i32, i32, i32
  }
  func.func @transform_13(%arg0: i32, %arg1: i32) -> (i32, i32, i32) {
    %c0_i32 = arith.constant 0 : i32
    %c0_i32_0 = arith.constant 0 : i32
    %c0_i32_1 = arith.constant 0 : i32
    return %arg0, %c0_i32, %c0_i32_0 : i32, i32, i32
  }
  func.func @transform_14(%arg0: i32, %arg1: i32) -> (i32, i32, i32) {
    %c0_i32 = arith.constant 0 : i32
    %c0_i32_0 = arith.constant 0 : i32
    %c0_i32_1 = arith.constant 0 : i32
    return %arg0, %c0_i32, %c0_i32_0 : i32, i32, i32
  }
  func.func @transform_15(%arg0: i32, %arg1: i32) -> (i32, i32, i32) {
    %c0_i32 = arith.constant 0 : i32
    %c0_i32_0 = arith.constant 0 : i32
    %c0_i32_1 = arith.constant 0 : i32
    return %arg0, %c0_i32, %c0_i32_0 : i32, i32, i32
  }
  func.func @transform_16(%arg0: i32, %arg1: i32) -> (i32, i32, i32) {
    %c0_i32 = arith.constant 0 : i32
    %c0_i32_0 = arith.constant 0 : i32
    %c0_i32_1 = arith.constant 0 : i32
    return %arg0, %c0_i32, %c0_i32_0 : i32, i32, i32
  }
  func.func @transform_17(%arg0: i32, %arg1: i32) -> (i32, i32, i32) {
    %c0_i32 = arith.constant 0 : i32
    %c0_i32_0 = arith.constant 0 : i32
    %c0_i32_1 = arith.constant 0 : i32
    return %arg0, %c0_i32, %c0_i32_0 : i32, i32, i32
  }
  func.func @transform_18(%arg0: i32, %arg1: i32) -> (i32, i32, i32) {
    %c0_i32 = arith.constant 0 : i32
    %c0_i32_0 = arith.constant 0 : i32
    %c0_i32_1 = arith.constant 0 : i32
    return %arg0, %c0_i32, %c0_i32_0 : i32, i32, i32
  }
  func.func @transform_19(%arg0: i32, %arg1: i32) -> (i32, i32, i32) {
    %c0_i32 = arith.constant 0 : i32
    %c0_i32_0 = arith.constant 0 : i32
    %c0_i32_1 = arith.constant 0 : i32
    return %arg0, %c0_i32, %c0_i32_0 : i32, i32, i32
  }
  func.func @transform_20(%arg0: i32, %arg1: i32) -> (i32, i32, i32) {
    %c0_i32 = arith.constant 0 : i32
    %c0_i32_0 = arith.constant 0 : i32
    %c0_i32_1 = arith.constant 0 : i32
    return %arg0, %c0_i32, %c0_i32_0 : i32, i32, i32
  }
  func.func @transform_21(%arg0: i32, %arg1: i32) -> (i32, i32, i32) {
    %c0_i32 = arith.constant 0 : i32
    %c0_i32_0 = arith.constant 0 : i32
    %c0_i32_1 = arith.constant 0 : i32
    return %arg0, %c0_i32, %c0_i32_0 : i32, i32, i32
  }
  func.func @transform_22(%arg0: i32, %arg1: i32) -> (i32, i32, i32) {
    %c0_i32 = arith.constant 0 : i32
    %c0_i32_0 = arith.constant 0 : i32
    %c0_i32_1 = arith.constant 0 : i32
    return %arg0, %c0_i32, %c0_i32_0 : i32, i32, i32
  }
  func.func @transform_23(%arg0: i32, %arg1: i32) -> (i32, i32, i32) {
    %c0_i32 = arith.constant 0 : i32
    %c0_i32_0 = arith.constant 0 : i32
    %c0_i32_1 = arith.constant 0 : i32
    return %arg0, %c0_i32, %c0_i32_0 : i32, i32, i32
  }
  func.func @transform_24(%arg0: i32, %arg1: i32) -> (i32, i32) {
    %c0_i32 = arith.constant 0 : i32
    %c0_i32_0 = arith.constant 0 : i32
    %c0_i32_1 = arith.constant 0 : i32
    return %c0_i32, %c0_i32_0 : i32, i32
  }
}

</mosaic_0001>

<llo_original>
// kernel: tpu_custom_call.1
$region0: #{tpu_custom_call.1}
  #allocation0 [shape = 'u32[]', space=smem, size = 0x4, offset = 0x4, fixed_abs, tag = 'smem constant byte address 0x4 - core index']
  #allocation1 [shape = 'u32[144,128]{1,0:T(1,128)}', space=vmem, size = 0x12000, scoped, tag = 'internal scratch']
  #allocation2 [shape = 'f32[8,3]{1,0:T(8,128)}', space=vmem, size = 0x1000, scoped, tag = 'scratch operand']
  #allocation3 [shape = 'f32[8,32]{1,0:T(8,128)}', space=vmem, size = 0x1000, scoped, tag = 'scratch operand']
  #allocation4 [shape = 'bf16[8,67]{1,0:T(8,128)(2,1)}', space=vmem, size = 0x800, scoped, tag = 'scratch operand']
  #allocation5 [shape = 'f32[8,36]{1,0:T(8,128)}', space=vmem, size = 0x1000, scoped, tag = 'scratch operand']
  %s0 = inlined_call_operand.vmem [shape: f32[8,3], index: 0, kind: input, shape index: {}]
  %s1 = inlined_call_operand.hbm [shape: f32[8,8], index: 1, kind: input, shape index: {}]
  %s2 = inlined_call_operand.vmem [shape: s32[64,1], index: 2, kind: input, shape index: {}]
  %s3 = inlined_call_operand.vmem [shape: s32[64,1], index: 3, kind: input, shape index: {}]
  %s4 = inlined_call_operand.vmem [shape: f32[64,4], index: 4, kind: input, shape index: {}]
  %s5 = inlined_call_operand.vmem [shape: f32[64,1], index: 5, kind: input, shape index: {}]
  %s6 = inlined_call_operand.hbm [shape: f32[8,32], index: 6, kind: input, shape index: {}]
  %s7 = inlined_call_operand.hbm [shape: f32[1,32], index: 7, kind: input, shape index: {}]
  %s8 = inlined_call_operand.hbm [shape: f32[2,1,32], index: 8, kind: input, shape index: {}]
  %s9 = inlined_call_operand.vmem [shape: f32[2,32,32], index: 9, kind: input, shape index: {}]
  %s10 = inlined_call_operand.vmem [shape: f32[2,32,32], index: 10, kind: input, shape index: {}]
  %s11 = inlined_call_operand.hbm [shape: f32[2,4,32], index: 11, kind: input, shape index: {}]
  %s12 = inlined_call_operand.hbm [shape: f32[2,1,32], index: 12, kind: input, shape index: {}]
  %s13 = inlined_call_operand.vmem [shape: f32[2,32,32], index: 13, kind: input, shape index: {}]
  %s14 = inlined_call_operand.hbm [shape: f32[2,1,32], index: 14, kind: input, shape index: {}]
  %s15 = inlined_call_operand.vmem [shape: f32[2,32,32], index: 15, kind: input, shape index: {}]
  %s16 = inlined_call_operand.hbm [shape: f32[2,1,32], index: 16, kind: input, shape index: {}]
  %s17 = inlined_call_operand.vmem [shape: f32[2,32,1], index: 17, kind: input, shape index: {}]
  %s18 = inlined_call_operand.vmem [shape: f32[2,1,1], index: 18, kind: input, shape index: {}]
  %s19 = inlined_call_operand.vmem [shape: f32[2,32,32], index: 19, kind: input, shape index: {}]
  %s20 = inlined_call_operand.hbm [shape: f32[2,32,32], index: 20, kind: input, shape index: {}]
  %s21 = inlined_call_operand.hbm [shape: f32[2,1,32], index: 21, kind: input, shape index: {}]
  %s22 = inlined_call_operand.vmem [shape: f32[2,32,32], index: 22, kind: input, shape index: {}]
  %s23 = inlined_call_operand.hbm [shape: f32[2,1,32], index: 23, kind: input, shape index: {}]
  %s24 = inlined_call_operand.hbm [shape: f32[8,128], index: 24, kind: output, shape index: {}]
  %s25 = sld [smem:[#allocation0]]
  $region189: #{tpu_custom_call.1} parent=0
    _
  %s27 = ssub.s32 1, %s25
  %s28 = scalar_select 0, %s27, %s25
  $region1: #{tpu_custom_call.1} parent=0
    #allocation6 [shape = 'u8[4096]{0}', space=vmem, size = 0x1000, scoped, tag = 'input window, operand 1, single buffered']
    #allocation7 [shape = 's32[2]{0}', space=sflag, size = 0x8, scoped, tag = 'scoped memory for tpu_custom_call.1']
    #allocation8 [shape = 's32[2]{0}', space=sflag, size = 0x8, scoped, tag = 'scoped memory for tpu_custom_call.1']
    #allocation9 [shape = 'u8[4096]{0}', space=vmem, size = 0x1000, scoped, tag = 'input window, operand 6, single buffered']
    #allocation10 [shape = 's32[1]{0}', space=sflag, size = 0x4, scoped, tag = 'scoped memory for tpu_custom_call.1']
    #allocation11 [shape = 'u8[512]{0}', space=vmem, size = 0x400, scoped, tag = 'input window, operand 7, single buffered']
    #allocation12 [shape = 'u8[1024]{0}', space=vmem, size = 0x400, scoped, tag = 'input window, operand 8']
    #allocation13 [shape = 's32[2]{0}', space=sflag, size = 0x8, scoped, tag = 'scoped memory for tpu_custom_call.1']
    #allocation14 [shape = 'u8[4096]{0}', space=vmem, size = 0x1000, scoped, tag = 'input window, operand 11']
    #allocation15 [shape = 'u8[1024]{0}', space=vmem, size = 0x400, scoped, tag = 'input window, operand 12']
    #allocation16 [shape = 's32[2]{0}', space=sflag, size = 0x8, scoped, tag = 'scoped memory for tpu_custom_call.1']
    #allocation17 [shape = 'u8[1024]{0}', space=vmem, size = 0x400, scoped, tag = 'input window, operand 14']
    #allocation18 [shape = 'u8[1024]{0}', space=vmem, size = 0x400, scoped, tag = 'input window, operand 16']
    #allocation19 [shape = 's32[2]{0}', space=sflag, size = 0x8, scoped, tag = 'scoped memory for tpu_custom_call.1']
    #allocation20 [shape = 'u8[32768]{0}', space=vmem, size = 0x8000, scoped, tag = 'input window, operand 20']
    #allocation21 [shape = 'u8[1024]{0}', space=vmem, size = 0x400, scoped, tag = 'input window, operand 21']
    #allocation22 [shape = 's32[2]{0}', space=sflag, size = 0x8, scoped, tag = 'scoped memory for tpu_custom_call.1']
    #allocation23 [shape = 'u8[1024]{0}', space=vmem, size = 0x400, scoped, tag = 'input window, operand 23']
    #allocation24 [shape = 'u8[4096]{0}', space=vmem, size = 0x1000, scoped, tag = 'output window, operand 0, single buffered']
    %29 = vsyncpa [#allocation7], 0
    %30 = vsyncpa [#allocation10], 0
    %31 = vsyncpa [#allocation13], 0
    %s32 = scalar_lea.sflag [#allocation13], 1
    %33 = vsyncpa %s32, 0
    %34 = vsyncpa [#allocation16], 0
    %s35 = scalar_lea.sflag [#allocation16], 1
    %36 = vsyncpa %s35, 0
    %37 = vsyncpa [#allocation19], 0
    %s38 = scalar_lea.sflag [#allocation19], 1
    %39 = vsyncpa %s38, 0
    %40 = vsyncpa [#allocation22], 0
    %s41 = scalar_lea.sflag [#allocation22], 1
    %42 = vsyncpa %s41, 0
    %43 = vsyncpa [#allocation8], 0
    loop: start=0, step=1, limit=10
    $region2: #{tpu_custom_call.1} parent=1 // loop_pre_header
      _
    $region3: #{tpu_custom_call.1} parent=1 // loop_header
      %s45 = sphi 0, %s49
      %p46 = scmp.ge.s32.totalorder %s45, 10
      %s52 = sphi 0, %s64
      %s53 = sphi 0, %s60
      %s54 = sphi 0, %s52
      %s55 = sphi 0, %s53
      %s56 = sphi 0, %s54
      %s57 = sphi 0, %s55
      %s65 = sphi 0, %s65
      %s67 = sphi 0, %s65
      %s68 = sphi 0, %s67
      %s82 = sphi 0, %s68
      %s86 = sphi 0, %s86
      %s88 = sphi 0, %s86
      %s89 = sphi 0, %s88
      %s103 = sphi 0, %s89
      %s109 = sphi 0, %s111
      %s112 = sphi 0, %s109
      %s113 = sphi 0, %s112
      %s129 = sphi 0, %s113
      %s135 = sphi 0, %s137
      %s138 = sphi 0, %s135
      %s139 = sphi 0, %s138
      %s155 = sphi 0, %s139
      %s161 = sphi 0, %s163
      %s164 = sphi 0, %s161
      %s165 = sphi 0, %s164
      %s181 = sphi 0, %s165
      %s187 = sphi 0, %s189
      %s190 = sphi 0, %s187
      %s191 = sphi 0, %s190
      %s207 = sphi 0, %s191
      %s211 = sphi 0, %s211
      %s213 = sphi 0, %s211
      %s214 = sphi 0, %s213
      %s228 = sphi 0, %s214
      %s232 = sphi 0, %s232
      %s234 = sphi 0, %s232
      %s235 = sphi 0, %s234
      %s249 = sphi 0, %s235
      %s255 = sphi 0, %s257
      %s258 = sphi 0, %s255
      %s259 = sphi 0, %s258
      %s275 = sphi 0, %s259
      %s281 = sphi 0, %s283
      %s284 = sphi 0, %s281
      %s285 = sphi 0, %s284
      %s301 = sphi 0, %s285
      %s307 = sphi 0, %s309
      %s310 = sphi 0, %s307
      %s311 = sphi 0, %s310
      %s327 = sphi 0, %s311
      %s333 = sphi 0, %s335
      %s336 = sphi 0, %s333
      %s337 = sphi 0, %s336
      %s353 = sphi 0, %s337
      %s359 = sphi 0, %s361
      %s362 = sphi 0, %s359
      %s363 = sphi 0, %s362
      %s379 = sphi 0, %s363
      %s385 = sphi 0, %s387
      %s388 = sphi 0, %s385
      %s389 = sphi 0, %s388
      %s405 = sphi 0, %s389
      %s411 = sphi 0, %s413
      %s414 = sphi 0, %s411
      %s415 = sphi 0, %s414
      %s431 = sphi 0, %s415
      %s437 = sphi 0, %s439
      %s440 = sphi 0, %s437
      %s441 = sphi 0, %s440
      %s457 = sphi 0, %s441
      %s463 = sphi 0, %s465
      %s466 = sphi 0, %s463
      %s467 = sphi 0, %s466
      %s483 = sphi 0, %s467
      %s489 = sphi 0, %s491
      %s492 = sphi 0, %s489
      %s493 = sphi 0, %s492
      %s509 = sphi 0, %s493
      %s515 = sphi 0, %s517
      %s518 = sphi 0, %s515
      %s519 = sphi 0, %s518
      %s535 = sphi 0, %s519
      %s541 = sphi 0, %s543
      %s544 = sphi 0, %s541
      %s545 = sphi 0, %s544
      %s561 = sphi 0, %s545
      %s567 = sphi 0, %s569
      %s570 = sphi 0, %s567
      %s571 = sphi 0, %s570
      %s587 = sphi 0, %s571
      %s593 = sphi 0, %s595
      %s596 = sphi 0, %s593
      %s597 = sphi 0, %s596
      %s613 = sphi 0, %s597
      %s619 = sphi 0, %s621
      %s622 = sphi 0, %s619
      %s623 = sphi 0, %s622
      %s639 = sphi 0, %s623
      %s645 = sphi 0, %s647
      %s648 = sphi 0, %s645
      %s649 = sphi 0, %s648
      %s665 = sphi 0, %s649
      %s669 = sphi 0, %s669
      %s671 = sphi 0, %s669
      %s672 = sphi 0, %s671
      %s686 = sphi 0, %s672
    $region4: #{tpu_custom_call.1} parent=1 // loop_header_branch
      %48 = sbr.rel (%p46) target = $region8
    $region5: #{tpu_custom_call.1} parent=1 // loop_body
      %s50 = ssub.s32 %s45, 1
      %s51 = ssub.s32 %s45, 2
      %s58 = sadd.s32 1, %s53
      %p59 = scmp.ge.s32.totalorder %s58, 4
      %s60 = scalar_select %p59, 0, %s58
      %s61 = sadd.s32 1, %s52
      %s62 = scalar_select %p59, %s61, %s52
      %p63 = scmp.ge.s32.totalorder %s62, 2
      %s64 = scalar_select %p63, 0, %s62
      %s66 = sadd.s32 %s65, 1
      %p69 = scmp.eq.s32.totalorder %s45, 7
      %p70 = scmp.ne.s32.totalorder %s65, %s67
      %p71 = scmp.eq.s32.totalorder %s45, 0
      %p72 = por %p70, %p71
      %p73 = scmp.ne.s32.totalorder %s65, %s67
      %p74 = scmp.eq.s32.totalorder %s50, 7
      %p75 = por %p73, %p74
      %p76 = scmp.ne.s32.totalorder %s67, %s68
      %p77 = scmp.eq.s32.totalorder %s50, 0
      %p78 = por %p76, %p77
      %p79 = scmp.ne.s32.totalorder %s67, %s68
      %p80 = scmp.eq.s32.totalorder %s51, 7
      %p81 = por %p79, %p80
      %p83 = scmp.ne.s32.totalorder %s68, %s82
      %p84 = scmp.eq.s32.totalorder %s51, 0
      %p85 = por %p83, %p84
      %s87 = sadd.s32 %s86, 1
      %p90 = scmp.eq.s32.totalorder %s45, 7
      %p91 = scmp.ne.s32.totalorder %s86, %s88
      %p92 = scmp.eq.s32.totalorder %s45, 0
      %p93 = por %p91, %p92
      %p94 = scmp.ne.s32.totalorder %s86, %s88
      %p95 = scmp.eq.s32.totalorder %s50, 7
      %p96 = por %p94, %p95
      %p97 = scmp.ne.s32.totalorder %s88, %s89
      %p98 = scmp.eq.s32.totalorder %s50, 0
      %p99 = por %p97, %p98
      %p100 = scmp.ne.s32.totalorder %s88, %s89
      %p101 = scmp.eq.s32.totalorder %s51, 7
      %p102 = por %p100, %p101
      %p104 = scmp.ne.s32.totalorder %s89, %s103
      %p105 = scmp.eq.s32.totalorder %s51, 0
      %p106 = por %p104, %p105
      %s107 = ssub.s32 %s53, %s60
      %p108 = scmp.eq.s32.totalorder %s107, 0
      %s110 = sadd.s32 %s109, 1
      %s111 = scalar_select %p108, %s109, %s110
      %p114 = pneg %p108
      %p115 = scmp.eq.s32.totalorder %s45, 7
      %p116 = por %p114, %p115
      %p117 = scmp.ne.s32.totalorder %s109, %s112
      %p118 = scmp.eq.s32.totalorder %s45, 0
      %p119 = por %p117, %p118
      %p120 = scmp.ne.s32.totalorder %s109, %s112
      %p121 = scmp.eq.s32.totalorder %s50, 7
      %p122 = por %p120, %p121
      %p123 = scmp.ne.s32.totalorder %s112, %s113
      %p124 = scmp.eq.s32.totalorder %s50, 0
      %p125 = por %p123, %p124
      %p126 = scmp.ne.s32.totalorder %s112, %s113
      %p127 = scmp.eq.s32.totalorder %s51, 7
      %p128 = por %p126, %p127
      %p130 = scmp.ne.s32.totalorder %s113, %s129
      %p131 = scmp.eq.s32.totalorder %s51, 0
      %p132 = por %p130, %p131
      %s133 = ssub.s32 %s53, %s60
      %p134 = scmp.eq.s32.totalorder %s133, 0
      %s136 = sadd.s32 %s135, 1
      %s137 = scalar_select %p134, %s135, %s136
      %p140 = pneg %p134
      %p141 = scmp.eq.s32.totalorder %s45, 7
      %p142 = por %p140, %p141
      %p143 = scmp.ne.s32.totalorder %s135, %s138
      %p144 = scmp.eq.s32.totalorder %s45, 0
      %p145 = por %p143, %p144
      %p146 = scmp.ne.s32.totalorder %s135, %s138
      %p147 = scmp.eq.s32.totalorder %s50, 7
      %p148 = por %p146, %p147
      %p149 = scmp.ne.s32.totalorder %s138, %s139
      %p150 = scmp.eq.s32.totalorder %s50, 0
      %p151 = por %p149, %p150
      %p152 = scmp.ne.s32.totalorder %s138, %s139
      %p153 = scmp.eq.s32.totalorder %s51, 7
      %p154 = por %p152, %p153
      %p156 = scmp.ne.s32.totalorder %s139, %s155
      %p157 = scmp.eq.s32.totalorder %s51, 0
      %p158 = por %p156, %p157
      %s159 = ssub.s32 %s53, %s60
      %p160 = scmp.eq.s32.totalorder %s159, 0
      %s162 = sadd.s32 %s161, 1
      %s163 = scalar_select %p160, %s161, %s162
      %p166 = pneg %p160
      %p167 = scmp.eq.s32.totalorder %s45, 7
      %p168 = por %p166, %p167
      %p169 = scmp.ne.s32.totalorder %s161, %s164
      %p170 = scmp.eq.s32.totalorder %s45, 0
      %p171 = por %p169, %p170
      %p172 = scmp.ne.s32.totalorder %s161, %s164
      %p173 = scmp.eq.s32.totalorder %s50, 7
      %p174 = por %p172, %p173
      %p175 = scmp.ne.s32.totalorder %s164, %s165
      %p176 = scmp.eq.s32.totalorder %s50, 0
      %p177 = por %p175, %p176
      %p178 = scmp.ne.s32.totalorder %s164, %s165
      %p179 = scmp.eq.s32.totalorder %s51, 7
      %p180 = por %p178, %p179
      %p182 = scmp.ne.s32.totalorder %s165, %s181
      %p183 = scmp.eq.s32.totalorder %s51, 0
      %p184 = por %p182, %p183
      %s185 = ssub.s32 %s53, %s60
      %p186 = scmp.eq.s32.totalorder %s185, 0
      %s188 = sadd.s32 %s187, 1
      %s189 = scalar_select %p186, %s187, %s188
      %p192 = pneg %p186
      %p193 = scmp.eq.s32.totalorder %s45, 7
      %p194 = por %p192, %p193
      %p195 = scmp.ne.s32.totalorder %s187, %s190
      %p196 = scmp.eq.s32.totalorder %s45, 0
      %p197 = por %p195, %p196
      %p198 = scmp.ne.s32.totalorder %s187, %s190
      %p199 = scmp.eq.s32.totalorder %s50, 7
      %p200 = por %p198, %p199
      %p201 = scmp.ne.s32.totalorder %s190, %s191
      %p202 = scmp.eq.s32.totalorder %s50, 0
      %p203 = por %p201, %p202
      %p204 = scmp.ne.s32.totalorder %s190, %s191
      %p205 = scmp.eq.s32.totalorder %s51, 7
      %p206 = por %p204, %p205
      %p208 = scmp.ne.s32.totalorder %s191, %s207
      %p209 = scmp.eq.s32.totalorder %s51, 0
      %p210 = por %p208, %p209
      %s212 = sadd.s32 %s211, 1
      %p215 = scmp.eq.s32.totalorder %s45, 7
      %p216 = scmp.ne.s32.totalorder %s211, %s213
      %p217 = scmp.eq.s32.totalorder %s45, 0
      %p218 = por %p216, %p217
      %p219 = scmp.ne.s32.totalorder %s211, %s213
      %p220 = scmp.eq.s32.totalorder %s50, 7
      %p221 = por %p219, %p220
      %p222 = scmp.ne.s32.totalorder %s213, %s214
      %p223 = scmp.eq.s32.totalorder %s50, 0
      %p224 = por %p222, %p223
      %p225 = scmp.ne.s32.totalorder %s213, %s214
      %p226 = scmp.eq.s32.totalorder %s51, 7
      %p227 = por %p225, %p226
      %p229 = scmp.ne.s32.totalorder %s214, %s228
      %p230 = scmp.eq.s32.totalorder %s51, 0
      %p231 = por %p229, %p230
      %s233 = sadd.s32 %s232, 1
      %p236 = scmp.eq.s32.totalorder %s45, 7
      %p237 = scmp.ne.s32.totalorder %s232, %s234
      %p238 = scmp.eq.s32.totalorder %s45, 0
      %p239 = por %p237, %p238
      %p240 = scmp.ne.s32.totalorder %s232, %s234
      %p241 = scmp.eq.s32.totalorder %s50, 7
      %p242 = por %p240, %p241
      %p243 = scmp.ne.s32.totalorder %s234, %s235
      %p244 = scmp.eq.s32.totalorder %s50, 0
      %p245 = por %p243, %p244
      %p246 = scmp.ne.s32.totalorder %s234, %s235
      %p247 = scmp.eq.s32.totalorder %s51, 7
      %p248 = por %p246, %p247
      %p250 = scmp.ne.s32.totalorder %s235, %s249
      %p251 = scmp.eq.s32.totalorder %s51, 0
      %p252 = por %p250, %p251
      %s253 = ssub.s32 %s52, %s64
      %p254 = scmp.eq.s32.totalorder %s253, 0
      %s256 = sadd.s32 %s255, 1
      %s257 = scalar_select %p254, %s255, %s256
      %p260 = pneg %p254
      %p261 = scmp.eq.s32.totalorder %s45, 7
      %p262 = por %p260, %p261
      %p263 = scmp.ne.s32.totalorder %s255, %s258
      %p264 = scmp.eq.s32.totalorder %s45, 0
      %p265 = por %p263, %p264
      %p266 = scmp.ne.s32.totalorder %s255, %s258
      %p267 = scmp.eq.s32.totalorder %s50, 7
      %p268 = por %p266, %p267
      %p269 = scmp.ne.s32.totalorder %s258, %s259
      %p270 = scmp.eq.s32.totalorder %s50, 0
      %p271 = por %p269, %p270
      %p272 = scmp.ne.s32.totalorder %s258, %s259
      %p273 = scmp.eq.s32.totalorder %s51, 7
      %p274 = por %p272, %p273
      %p276 = scmp.ne.s32.totalorder %s259, %s275
      %p277 = scmp.eq.s32.totalorder %s51, 0
      %p278 = por %p276, %p277
      %s279 = ssub.s32 %s52, %s64
      %p280 = scmp.eq.s32.totalorder %s279, 0
      %s282 = sadd.s32 %s281, 1
      %s283 = scalar_select %p280, %s281, %s282
      %p286 = pneg %p280
      %p287 = scmp.eq.s32.totalorder %s45, 7
      %p288 = por %p286, %p287
      %p289 = scmp.ne.s32.totalorder %s281, %s284
      %p290 = scmp.eq.s32.totalorder %s45, 0
      %p291 = por %p289, %p290
      %p292 = scmp.ne.s32.totalorder %s281, %s284
      %p293 = scmp.eq.s32.totalorder %s50, 7
      %p294 = por %p292, %p293
      %p295 = scmp.ne.s32.totalorder %s284, %s285
      %p296 = scmp.eq.s32.totalorder %s50, 0
      %p297 = por %p295, %p296
      %p298 = scmp.ne.s32.totalorder %s284, %s285
      %p299 = scmp.eq.s32.totalorder %s51, 7
      %p300 = por %p298, %p299
      %p302 = scmp.ne.s32.totalorder %s285, %s301
      %p303 = scmp.eq.s32.totalorder %s51, 0
      %p304 = por %p302, %p303
      %s305 = ssub.s32 %s52, %s64
      %p306 = scmp.eq.s32.totalorder %s305, 0
      %s308 = sadd.s32 %s307, 1
      %s309 = scalar_select %p306, %s307, %s308
      %p312 = pneg %p306
      %p313 = scmp.eq.s32.totalorder %s45, 7
      %p314 = por %p312, %p313
      %p315 = scmp.ne.s32.totalorder %s307, %s310
      %p316 = scmp.eq.s32.totalorder %s45, 0
      %p317 = por %p315, %p316
      %p318 = scmp.ne.s32.totalorder %s307, %s310
      %p319 = scmp.eq.s32.totalorder %s50, 7
      %p320 = por %p318, %p319
      %p321 = scmp.ne.s32.totalorder %s310, %s311
      %p322 = scmp.eq.s32.totalorder %s50, 0
      %p323 = por %p321, %p322
      %p324 = scmp.ne.s32.totalorder %s310, %s311
      %p325 = scmp.eq.s32.totalorder %s51, 7
      %p326 = por %p324, %p325
      %p328 = scmp.ne.s32.totalorder %s311, %s327
      %p329 = scmp.eq.s32.totalorder %s51, 0
      %p330 = por %p328, %p329
      %s331 = ssub.s32 %s52, %s64
      %p332 = scmp.eq.s32.totalorder %s331, 0
      %s334 = sadd.s32 %s333, 1
      %s335 = scalar_select %p332, %s333, %s334
      %p338 = pneg %p332
      %p339 = scmp.eq.s32.totalorder %s45, 7
      %p340 = por %p338, %p339
      %p341 = scmp.ne.s32.totalorder %s333, %s336
      %p342 = scmp.eq.s32.totalorder %s45, 0
      %p343 = por %p341, %p342
      %p344 = scmp.ne.s32.totalorder %s333, %s336
      %p345 = scmp.eq.s32.totalorder %s50, 7
      %p346 = por %p344, %p345
      %p347 = scmp.ne.s32.totalorder %s336, %s337
      %p348 = scmp.eq.s32.totalorder %s50, 0
      %p349 = por %p347, %p348
      %p350 = scmp.ne.s32.totalorder %s336, %s337
      %p351 = scmp.eq.s32.totalorder %s51, 7
      %p352 = por %p350, %p351
      %p354 = scmp.ne.s32.totalorder %s337, %s353
      %p355 = scmp.eq.s32.totalorder %s51, 0
      %p356 = por %p354, %p355
      %s357 = ssub.s32 %s52, %s64
      %p358 = scmp.eq.s32.totalorder %s357, 0
      %s360 = sadd.s32 %s359, 1
      %s361 = scalar_select %p358, %s359, %s360
      %p364 = pneg %p358
      %p365 = scmp.eq.s32.totalorder %s45, 7
      %p366 = por %p364, %p365
      %p367 = scmp.ne.s32.totalorder %s359, %s362
      %p368 = scmp.eq.s32.totalorder %s45, 0
      %p369 = por %p367, %p368
      %p370 = scmp.ne.s32.totalorder %s359, %s362
      %p371 = scmp.eq.s32.totalorder %s50, 7
      %p372 = por %p370, %p371
      %p373 = scmp.ne.s32.totalorder %s362, %s363
      %p374 = scmp.eq.s32.totalorder %s50, 0
      %p375 = por %p373, %p374
      %p376 = scmp.ne.s32.totalorder %s362, %s363
      %p377 = scmp.eq.s32.totalorder %s51, 7
      %p378 = por %p376, %p377
      %p380 = scmp.ne.s32.totalorder %s363, %s379
      %p381 = scmp.eq.s32.totalorder %s51, 0
      %p382 = por %p380, %p381
      %s383 = ssub.s32 %s52, %s64
      %p384 = scmp.eq.s32.totalorder %s383, 0
      %s386 = sadd.s32 %s385, 1
      %s387 = scalar_select %p384, %s385, %s386
      %p390 = pneg %p384
      %p391 = scmp.eq.s32.totalorder %s45, 7
      %p392 = por %p390, %p391
      %p393 = scmp.ne.s32.totalorder %s385, %s388
      %p394 = scmp.eq.s32.totalorder %s45, 0
      %p395 = por %p393, %p394
      %p396 = scmp.ne.s32.totalorder %s385, %s388
      %p397 = scmp.eq.s32.totalorder %s50, 7
      %p398 = por %p396, %p397
      %p399 = scmp.ne.s32.totalorder %s388, %s389
      %p400 = scmp.eq.s32.totalorder %s50, 0
      %p401 = por %p399, %p400
      %p402 = scmp.ne.s32.totalorder %s388, %s389
      %p403 = scmp.eq.s32.totalorder %s51, 7
      %p404 = por %p402, %p403
      %p406 = scmp.ne.s32.totalorder %s389, %s405
      %p407 = scmp.eq.s32.totalorder %s51, 0
      %p408 = por %p406, %p407
      %s409 = ssub.s32 %s52, %s64
      %p410 = scmp.eq.s32.totalorder %s409, 0
      %s412 = sadd.s32 %s411, 1
      %s413 = scalar_select %p410, %s411, %s412
      %p416 = pneg %p410
      %p417 = scmp.eq.s32.totalorder %s45, 7
      %p418 = por %p416, %p417
      %p419 = scmp.ne.s32.totalorder %s411, %s414
      %p420 = scmp.eq.s32.totalorder %s45, 0
      %p421 = por %p419, %p420
      %p422 = scmp.ne.s32.totalorder %s411, %s414
      %p423 = scmp.eq.s32.totalorder %s50, 7
      %p424 = por %p422, %p423
      %p425 = scmp.ne.s32.totalorder %s414, %s415
      %p426 = scmp.eq.s32.totalorder %s50, 0
      %p427 = por %p425, %p426
      %p428 = scmp.ne.s32.totalorder %s414, %s415
      %p429 = scmp.eq.s32.totalorder %s51, 7
      %p430 = por %p428, %p429
      %p432 = scmp.ne.s32.totalorder %s415, %s431
      %p433 = scmp.eq.s32.totalorder %s51, 0
      %p434 = por %p432, %p433
      %s435 = ssub.s32 %s52, %s64
      %p436 = scmp.eq.s32.totalorder %s435, 0
      %s438 = sadd.s32 %s437, 1
      %s439 = scalar_select %p436, %s437, %s438
      %p442 = pneg %p436
      %p443 = scmp.eq.s32.totalorder %s45, 7
      %p444 = por %p442, %p443
      %p445 = scmp.ne.s32.totalorder %s437, %s440
      %p446 = scmp.eq.s32.totalorder %s45, 0
      %p447 = por %p445, %p446
      %p448 = scmp.ne.s32.totalorder %s437, %s440
      %p449 = scmp.eq.s32.totalorder %s50, 7
      %p450 = por %p448, %p449
      %p451 = scmp.ne.s32.totalorder %s440, %s441
      %p452 = scmp.eq.s32.totalorder %s50, 0
      %p453 = por %p451, %p452
      %p454 = scmp.ne.s32.totalorder %s440, %s441
      %p455 = scmp.eq.s32.totalorder %s51, 7
      %p456 = por %p454, %p455
      %p458 = scmp.ne.s32.totalorder %s441, %s457
      %p459 = scmp.eq.s32.totalorder %s51, 0
      %p460 = por %p458, %p459
      %s461 = ssub.s32 %s52, %s64
      %p462 = scmp.eq.s32.totalorder %s461, 0
      %s464 = sadd.s32 %s463, 1
      %s465 = scalar_select %p462, %s463, %s464
      %p468 = pneg %p462
      %p469 = scmp.eq.s32.totalorder %s45, 7
      %p470 = por %p468, %p469
      %p471 = scmp.ne.s32.totalorder %s463, %s466
      %p472 = scmp.eq.s32.totalorder %s45, 0
      %p473 = por %p471, %p472
      %p474 = scmp.ne.s32.totalorder %s463, %s466
      %p475 = scmp.eq.s32.totalorder %s50, 7
      %p476 = por %p474, %p475
      %p477 = scmp.ne.s32.totalorder %s466, %s467
      %p478 = scmp.eq.s32.totalorder %s50, 0
      %p479 = por %p477, %p478
      %p480 = scmp.ne.s32.totalorder %s466, %s467
      %p481 = scmp.eq.s32.totalorder %s51, 7
      %p482 = por %p480, %p481
      %p484 = scmp.ne.s32.totalorder %s467, %s483
      %p485 = scmp.eq.s32.totalorder %s51, 0
      %p486 = por %p484, %p485
      %s487 = ssub.s32 %s52, %s64
      %p488 = scmp.eq.s32.totalorder %s487, 0
      %s490 = sadd.s32 %s489, 1
      %s491 = scalar_select %p488, %s489, %s490
      %p494 = pneg %p488
      %p495 = scmp.eq.s32.totalorder %s45, 7
      %p496 = por %p494, %p495
      %p497 = scmp.ne.s32.totalorder %s489, %s492
      %p498 = scmp.eq.s32.totalorder %s45, 0
      %p499 = por %p497, %p498
      %p500 = scmp.ne.s32.totalorder %s489, %s492
      %p501 = scmp.eq.s32.totalorder %s50, 7
      %p502 = por %p500, %p501
      %p503 = scmp.ne.s32.totalorder %s492, %s493
      %p504 = scmp.eq.s32.totalorder %s50, 0
      %p505 = por %p503, %p504
      %p506 = scmp.ne.s32.totalorder %s492, %s493
      %p507 = scmp.eq.s32.totalorder %s51, 7
      %p508 = por %p506, %p507
      %p510 = scmp.ne.s32.totalorder %s493, %s509
      %p511 = scmp.eq.s32.totalorder %s51, 0
      %p512 = por %p510, %p511
      %s513 = ssub.s32 %s52, %s64
      %p514 = scmp.eq.s32.totalorder %s513, 0
      %s516 = sadd.s32 %s515, 1
      %s517 = scalar_select %p514, %s515, %s516
      %p520 = pneg %p514
      %p521 = scmp.eq.s32.totalorder %s45, 7
      %p522 = por %p520, %p521
      %p523 = scmp.ne.s32.totalorder %s515, %s518
      %p524 = scmp.eq.s32.totalorder %s45, 0
      %p525 = por %p523, %p524
      %p526 = scmp.ne.s32.totalorder %s515, %s518
      %p527 = scmp.eq.s32.totalorder %s50, 7
      %p528 = por %p526, %p527
      %p529 = scmp.ne.s32.totalorder %s518, %s519
      %p530 = scmp.eq.s32.totalorder %s50, 0
      %p531 = por %p529, %p530
      %p532 = scmp.ne.s32.totalorder %s518, %s519
      %p533 = scmp.eq.s32.totalorder %s51, 7
      %p534 = por %p532, %p533
      %p536 = scmp.ne.s32.totalorder %s519, %s535
      %p537 = scmp.eq.s32.totalorder %s51, 0
      %p538 = por %p536, %p537
      %s539 = ssub.s32 %s52, %s64
      %p540 = scmp.eq.s32.totalorder %s539, 0
      %s542 = sadd.s32 %s541, 1
      %s543 = scalar_select %p540, %s541, %s542
      %p546 = pneg %p540
      %p547 = scmp.eq.s32.totalorder %s45, 7
      %p548 = por %p546, %p547
      %p549 = scmp.ne.s32.totalorder %s541, %s544
      %p550 = scmp.eq.s32.totalorder %s45, 0
      %p551 = por %p549, %p550
      %p552 = scmp.ne.s32.totalorder %s541, %s544
      %p553 = scmp.eq.s32.totalorder %s50, 7
      %p554 = por %p552, %p553
      %p555 = scmp.ne.s32.totalorder %s544, %s545
      %p556 = scmp.eq.s32.totalorder %s50, 0
      %p557 = por %p555, %p556
      %p558 = scmp.ne.s32.totalorder %s544, %s545
      %p559 = scmp.eq.s32.totalorder %s51, 7
      %p560 = por %p558, %p559
      %p562 = scmp.ne.s32.totalorder %s545, %s561
      %p563 = scmp.eq.s32.totalorder %s51, 0
      %p564 = por %p562, %p563
      %s565 = ssub.s32 %s52, %s64
      %p566 = scmp.eq.s32.totalorder %s565, 0
      %s568 = sadd.s32 %s567, 1
      %s569 = scalar_select %p566, %s567, %s568
      %p572 = pneg %p566
      %p573 = scmp.eq.s32.totalorder %s45, 7
      %p574 = por %p572, %p573
      %p575 = scmp.ne.s32.totalorder %s567, %s570
      %p576 = scmp.eq.s32.totalorder %s45, 0
      %p577 = por %p575, %p576
      %p578 = scmp.ne.s32.totalorder %s567, %s570
      %p579 = scmp.eq.s32.totalorder %s50, 7
      %p580 = por %p578, %p579
      %p581 = scmp.ne.s32.totalorder %s570, %s571
      %p582 = scmp.eq.s32.totalorder %s50, 0
      %p583 = por %p581, %p582
      %p584 = scmp.ne.s32.totalorder %s570, %s571
      %p585 = scmp.eq.s32.totalorder %s51, 7
      %p586 = por %p584, %p585
      %p588 = scmp.ne.s32.totalorder %s571, %s587
      %p589 = scmp.eq.s32.totalorder %s51, 0
      %p590 = por %p588, %p589
      %s591 = ssub.s32 %s52, %s64
      %p592 = scmp.eq.s32.totalorder %s591, 0
      %s594 = sadd.s32 %s593, 1
      %s595 = scalar_select %p592, %s593, %s594
      %p598 = pneg %p592
      %p599 = scmp.eq.s32.totalorder %s45, 7
      %p600 = por %p598, %p599
      %p601 = scmp.ne.s32.totalorder %s593, %s596
      %p602 = scmp.eq.s32.totalorder %s45, 0
      %p603 = por %p601, %p602
      %p604 = scmp.ne.s32.totalorder %s593, %s596
      %p605 = scmp.eq.s32.totalorder %s50, 7
      %p606 = por %p604, %p605
      %p607 = scmp.ne.s32.totalorder %s596, %s597
      %p608 = scmp.eq.s32.totalorder %s50, 0
      %p609 = por %p607, %p608
      %p610 = scmp.ne.s32.totalorder %s596, %s597
      %p611 = scmp.eq.s32.totalorder %s51, 7
      %p612 = por %p610, %p611
      %p614 = scmp.ne.s32.totalorder %s597, %s613
      %p615 = scmp.eq.s32.totalorder %s51, 0
      %p616 = por %p614, %p615
      %s617 = ssub.s32 %s52, %s64
      %p618 = scmp.eq.s32.totalorder %s617, 0
      %s620 = sadd.s32 %s619, 1
      %s621 = scalar_select %p618, %s619, %s620
      %p624 = pneg %p618
      %p625 = scmp.eq.s32.totalorder %s45, 7
      %p626 = por %p624, %p625
      %p627 = scmp.ne.s32.totalorder %s619, %s622
      %p628 = scmp.eq.s32.totalorder %s45, 0
      %p629 = por %p627, %p628
      %p630 = scmp.ne.s32.totalorder %s619, %s622
      %p631 = scmp.eq.s32.totalorder %s50, 7
      %p632 = por %p630, %p631
      %p633 = scmp.ne.s32.totalorder %s622, %s623
      %p634 = scmp.eq.s32.totalorder %s50, 0
      %p635 = por %p633, %p634
      %p636 = scmp.ne.s32.totalorder %s622, %s623
      %p637 = scmp.eq.s32.totalorder %s51, 7
      %p638 = por %p636, %p637
      %p640 = scmp.ne.s32.totalorder %s623, %s639
      %p641 = scmp.eq.s32.totalorder %s51, 0
      %p642 = por %p640, %p641
      %s643 = ssub.s32 %s52, %s64
      %p644 = scmp.eq.s32.totalorder %s643, 0
      %s646 = sadd.s32 %s645, 1
      %s647 = scalar_select %p644, %s645, %s646
      %p650 = pneg %p644
      %p651 = scmp.eq.s32.totalorder %s45, 7
      %p652 = por %p650, %p651
      %p653 = scmp.ne.s32.totalorder %s645, %s648
      %p654 = scmp.eq.s32.totalorder %s45, 0
      %p655 = por %p653, %p654
      %p656 = scmp.ne.s32.totalorder %s645, %s648
      %p657 = scmp.eq.s32.totalorder %s50, 7
      %p658 = por %p656, %p657
      %p659 = scmp.ne.s32.totalorder %s648, %s649
      %p660 = scmp.eq.s32.totalorder %s50, 0
      %p661 = por %p659, %p660
      %p662 = scmp.ne.s32.totalorder %s648, %s649
      %p663 = scmp.eq.s32.totalorder %s51, 7
      %p664 = por %p662, %p663
      %p666 = scmp.ne.s32.totalorder %s649, %s665
      %p667 = scmp.eq.s32.totalorder %s51, 0
      %p668 = por %p666, %p667
      %s670 = sadd.s32 %s669, 1
      %p673 = scmp.eq.s32.totalorder %s45, 7
      %p674 = scmp.ne.s32.totalorder %s669, %s671
      %p675 = scmp.eq.s32.totalorder %s45, 0
      %p676 = por %p674, %p675
      %p677 = scmp.ne.s32.totalorder %s669, %s671
      %p678 = scmp.eq.s32.totalorder %s50, 7
      %p679 = por %p677, %p678
      %p680 = scmp.ne.s32.totalorder %s671, %s672
      %p681 = scmp.eq.s32.totalorder %s50, 0
      %p682 = por %p680, %p681
      %p683 = scmp.ne.s32.totalorder %s671, %s672
      %p684 = scmp.eq.s32.totalorder %s51, 7
      %p685 = por %p683, %p684
      %p687 = scmp.ne.s32.totalorder %s672, %s686
      %p688 = scmp.eq.s32.totalorder %s51, 0
      %p689 = por %p687, %p688
      %p690 = scmp.le.s32.totalorder 1, %s45
      %p691 = scmp.lt.s32.totalorder %s45, 9
      %p692 = pnand %p690, %p691
      %p693 = pneg %p692
      // Predicated region
      $region9: #{tpu_custom_call.1} parent=5 // pred_check
        _
      $region10: #{tpu_custom_call.1} parent=5 // pred_check_branch
        %695 = sbr.rel (%p692) target = $region12
      $region11: #{tpu_custom_call.1} parent=5 // pred_region
        %s696 = ssub.s32 %s45, 1
        // Predicated region
        $region13: #{tpu_custom_call.1} parent=11 // pred_check
          %p697 = pneg %p78
        $region14: #{tpu_custom_call.1} parent=11 // pred_check_branch
          %699 = sbr.rel (%p697) target = $region16
        $region15: #{tpu_custom_call.1} parent=11 // pred_region
          _
        $region16: #{tpu_custom_call.1} parent=11 // pred_fallthru
          _
        // Predicated region
        $region17: #{tpu_custom_call.1} parent=11 // pred_check
          %p700 = pneg %p99
        $region18: #{tpu_custom_call.1} parent=11 // pred_check_branch
          %702 = sbr.rel (%p700) target = $region20
        $region19: #{tpu_custom_call.1} parent=11 // pred_region
          %s704 = ssub.s32 128, 128
          %705 = vsyncadd [#allocation7], %s704
          %s707 = sshll.u32 [#allocation6], 4
          %s708 = int_to_ptr.vmem [resolvable:$true] %s707
          %710 = dma.hbm_to_vmem [thread:$0]  %s1, 128, %s708, [#allocation7]
        $region20: #{tpu_custom_call.1} parent=11 // pred_fallthru
          _
        // Predicated region
        $region21: #{tpu_custom_call.1} parent=11 // pred_check
          %p711 = pneg %p224
        $region22: #{tpu_custom_call.1} parent=11 // pred_check_branch
          %713 = sbr.rel (%p711) target = $region24
        $region23: #{tpu_custom_call.1} parent=11 // pred_region
          %s715 = ssub.s32 128, 128
          %716 = vsyncadd [#allocation10], %s715
          %s718 = sshll.u32 [#allocation9], 4
          %s719 = int_to_ptr.vmem [resolvable:$true] %s718
          %721 = dma.hbm_to_vmem [thread:$0]  %s6, 128, %s719, [#allocation10]
        $region24: #{tpu_custom_call.1} parent=11 // pred_fallthru
          _
        // Predicated region
        $region25: #{tpu_custom_call.1} parent=11 // pred_check
          %p722 = pneg %p245
        $region26: #{tpu_custom_call.1} parent=11 // pred_check_branch
          %724 = sbr.rel (%p722) target = $region28
        $region27: #{tpu_custom_call.1} parent=11 // pred_region
          %s726 = ssub.s32 16, 16
          %727 = vsyncadd [#allocation10], %s726
          %s729 = sshll.u32 [#allocation11], 4
          %s730 = int_to_ptr.vmem [resolvable:$true] %s729
          %732 = dma.hbm_to_vmem [thread:$0]  %s7, 16, %s730, [#allocation10]
        $region28: #{tpu_custom_call.1} parent=11 // pred_fallthru
          _
      $region12: #{tpu_custom_call.1} parent=5 // pred_fallthru
        _
      %p733 = scmp.lt.s32.totalorder %s45, 8
      // Predicated region
      $region29: #{tpu_custom_call.1} parent=5 // pred_check
        %p734 = pneg %p733
      $region30: #{tpu_custom_call.1} parent=5 // pred_check_branch
        %736 = sbr.rel (%p734) target = $region32
      $region31: #{tpu_custom_call.1} parent=5 // pred_region
        // Predicated region
        $region33: #{tpu_custom_call.1} parent=31 // pred_check
          %p737 = pneg %p119
        $region34: #{tpu_custom_call.1} parent=31 // pred_check_branch
          %739 = sbr.rel (%p737) target = $region36
        $region35: #{tpu_custom_call.1} parent=31 // pred_region
          %s740 = smul.u32 2, %s53
          %p741 = scmp.lt.s32.totalorder %s740, 7
          %s742 = scalar_select %p741, %s740, 7
          %s743 = smul.addr %s742, 8
          %s744 = scalar_lea.vmem %s2, %s743
          %s745 = smul.u32 2, %s53
        $region36: #{tpu_custom_call.1} parent=31 // pred_fallthru
          _
        // Predicated region
        $region37: #{tpu_custom_call.1} parent=31 // pred_check
          %p746 = pneg %p145
        $region38: #{tpu_custom_call.1} parent=31 // pred_check_branch
          %748 = sbr.rel (%p746) target = $region40
        $region39: #{tpu_custom_call.1} parent=31 // pred_region
          %s749 = smul.u32 2, %s53
          %p750 = scmp.lt.s32.totalorder %s749, 7
          %s751 = scalar_select %p750, %s749, 7
          %s752 = smul.addr %s751, 8
          %s753 = scalar_lea.vmem %s3, %s752
          %s754 = smul.u32 2, %s53
        $region40: #{tpu_custom_call.1} parent=31 // pred_fallthru
          _
        // Predicated region
        $region41: #{tpu_custom_call.1} parent=31 // pred_check
          %p755 = pneg %p171
        $region42: #{tpu_custom_call.1} parent=31 // pred_check_branch
          %757 = sbr.rel (%p755) target = $region44
        $region43: #{tpu_custom_call.1} parent=31 // pred_region
          %s758 = smul.u32 2, %s53
          %p759 = scmp.lt.s32.totalorder %s758, 7
          %s760 = scalar_select %p759, %s758, 7
          %s761 = smul.addr %s760, 8
          %s762 = scalar_lea.vmem %s4, %s761
          %s763 = smul.u32 2, %s53
        $region44: #{tpu_custom_call.1} parent=31 // pred_fallthru
          _
        // Predicated region
        $region45: #{tpu_custom_call.1} parent=31 // pred_check
          %p764 = pneg %p197
        $region46: #{tpu_custom_call.1} parent=31 // pred_check_branch
          %766 = sbr.rel (%p764) target = $region48
        $region47: #{tpu_custom_call.1} parent=31 // pred_region
          %s767 = smul.u32 2, %s53
          %p768 = scmp.lt.s32.totalorder %s767, 7
          %s769 = scalar_select %p768, %s767, 7
          %s770 = smul.addr %s769, 8
          %s771 = scalar_lea.vmem %s5, %s770
          %s772 = smul.u32 2, %s53
        $region48: #{tpu_custom_call.1} parent=31 // pred_fallthru
          _
        // Predicated region
        $region49: #{tpu_custom_call.1} parent=31 // pred_check
          %p773 = pneg %p265
        $region50: #{tpu_custom_call.1} parent=31 // pred_check_branch
          %775 = sbr.rel (%p773) target = $region52
        $region51: #{tpu_custom_call.1} parent=31 // pred_region
          %s776 = sand.u32 %s45, 1
          %s777 = scalar_lea.sflag [#allocation13], %s776
          %s778 = sand.u32 %s255, 1
          %s779 = scalar_lea.vmem [#allocation12], %s778
          %s781 = ssub.s32 16, 16
          %782 = vsyncadd %s777, %s781
          %s783 = smul.addr %s52, 16
          %s784 = scalar_lea.hbm %s8, %s783
          %s786 = sshll.u32 %s779, 4
          %s787 = int_to_ptr.vmem [resolvable:$true] %s786
          %789 = dma.hbm_to_vmem [thread:$0]  %s784, 16, %s787, %s777
        $region52: #{tpu_custom_call.1} parent=31 // pred_fallthru
          _
        // Predicated region
        $region53: #{tpu_custom_call.1} parent=31 // pred_check
          %p790 = pneg %p291
        $region54: #{tpu_custom_call.1} parent=31 // pred_check_branch
          %792 = sbr.rel (%p790) target = $region56
        $region55: #{tpu_custom_call.1} parent=31 // pred_region
          %p793 = scmp.lt.s32.totalorder %s52, 1
          %s794 = scalar_select %p793, %s52, 1
          %s795 = smul.addr %s794, 4
          %s796 = smul.addr %s795, 8
          %s797 = scalar_lea.vmem %s9, %s796
        $region56: #{tpu_custom_call.1} parent=31 // pred_fallthru
          _
        // Predicated region
        $region57: #{tpu_custom_call.1} parent=31 // pred_check
          %p798 = pneg %p317
        $region58: #{tpu_custom_call.1} parent=31 // pred_check_branch
          %800 = sbr.rel (%p798) target = $region60
        $region59: #{tpu_custom_call.1} parent=31 // pred_region
          %p801 = scmp.lt.s32.totalorder %s52, 1
          %s802 = scalar_select %p801, %s52, 1
          %s803 = smul.addr %s802, 4
          %s804 = smul.addr %s803, 8
          %s805 = scalar_lea.vmem %s10, %s804
        $region60: #{tpu_custom_call.1} parent=31 // pred_fallthru
          _
        // Predicated region
        $region61: #{tpu_custom_call.1} parent=31 // pred_check
          %p806 = pneg %p343
        $region62: #{tpu_custom_call.1} parent=31 // pred_check_branch
          %808 = sbr.rel (%p806) target = $region64
        $region63: #{tpu_custom_call.1} parent=31 // pred_region
          %s809 = sand.u32 %s45, 1
          %s810 = scalar_lea.sflag [#allocation13], %s809
          %s811 = sand.u32 %s333, 1
          %s812 = smul.addr %s811, 4
          %s813 = scalar_lea.vmem [#allocation14], %s812
          %s815 = ssub.s32 64, 64
          %816 = vsyncadd %s810, %s815
          %s817 = smul.addr %s52, 64
          %s818 = scalar_lea.hbm %s11, %s817
          %s820 = sshll.u32 %s813, 4
          %s821 = int_to_ptr.vmem [resolvable:$true] %s820
          %823 = dma.hbm_to_vmem [thread:$0]  %s818, 64, %s821, %s810
        $region64: #{tpu_custom_call.1} parent=31 // pred_fallthru
          _
        // Predicated region
        $region65: #{tpu_custom_call.1} parent=31 // pred_check
          %p824 = pneg %p369
        $region66: #{tpu_custom_call.1} parent=31 // pred_check_branch
          %826 = sbr.rel (%p824) target = $region68
        $region67: #{tpu_custom_call.1} parent=31 // pred_region
          %s827 = sand.u32 %s45, 1
          %s828 = scalar_lea.sflag [#allocation16], %s827
          %s829 = sand.u32 %s359, 1
          %s830 = scalar_lea.vmem [#allocation15], %s829
          %s832 = ssub.s32 16, 16
          %833 = vsyncadd %s828, %s832
          %s834 = smul.addr %s52, 16
          %s835 = scalar_lea.hbm %s12, %s834
          %s837 = sshll.u32 %s830, 4
          %s838 = int_to_ptr.vmem [resolvable:$true] %s837
          %840 = dma.hbm_to_vmem [thread:$0]  %s835, 16, %s838, %s828
        $region68: #{tpu_custom_call.1} parent=31 // pred_fallthru
          _
        // Predicated region
        $region69: #{tpu_custom_call.1} parent=31 // pred_check
          %p841 = pneg %p395
        $region70: #{tpu_custom_call.1} parent=31 // pred_check_branch
          %843 = sbr.rel (%p841) target = $region72
        $region71: #{tpu_custom_call.1} parent=31 // pred_region
          %p844 = scmp.lt.s32.totalorder %s52, 1
          %s845 = scalar_select %p844, %s52, 1
          %s846 = smul.addr %s845, 4
          %s847 = smul.addr %s846, 8
          %s848 = scalar_lea.vmem %s13, %s847
        $region72: #{tpu_custom_call.1} parent=31 // pred_fallthru
          _
        // Predicated region
        $region73: #{tpu_custom_call.1} parent=31 // pred_check
          %p849 = pneg %p421
        $region74: #{tpu_custom_call.1} parent=31 // pred_check_branch
          %851 = sbr.rel (%p849) target = $region76
        $region75: #{tpu_custom_call.1} parent=31 // pred_region
          %s852 = sand.u32 %s45, 1
          %s853 = scalar_lea.sflag [#allocation16], %s852
          %s854 = sand.u32 %s411, 1
          %s855 = scalar_lea.vmem [#allocation17], %s854
          %s857 = ssub.s32 16, 16
          %858 = vsyncadd %s853, %s857
          %s859 = smul.addr %s52, 16
          %s860 = scalar_lea.hbm %s14, %s859
          %s862 = sshll.u32 %s855, 4
          %s863 = int_to_ptr.vmem [resolvable:$true] %s862
          %865 = dma.hbm_to_vmem [thread:$0]  %s860, 16, %s863, %s853
        $region76: #{tpu_custom_call.1} parent=31 // pred_fallthru
          _
        // Predicated region
        $region77: #{tpu_custom_call.1} parent=31 // pred_check
          %p866 = pneg %p447
        $region78: #{tpu_custom_call.1} parent=31 // pred_check_branch
          %868 = sbr.rel (%p866) target = $region80
        $region79: #{tpu_custom_call.1} parent=31 // pred_region
          %p869 = scmp.lt.s32.totalorder %s52, 1
          %s870 = scalar_select %p869, %s52, 1
          %s871 = smul.addr %s870, 4
          %s872 = smul.addr %s871, 8
          %s873 = scalar_lea.vmem %s15, %s872
        $region80: #{tpu_custom_call.1} parent=31 // pred_fallthru
          _
        // Predicated region
        $region81: #{tpu_custom_call.1} parent=31 // pred_check
          %p874 = pneg %p473
        $region82: #{tpu_custom_call.1} parent=31 // pred_check_branch
          %876 = sbr.rel (%p874) target = $region84
        $region83: #{tpu_custom_call.1} parent=31 // pred_region
          %s877 = sand.u32 %s45, 1
          %s878 = scalar_lea.sflag [#allocation19], %s877
          %s879 = sand.u32 %s463, 1
          %s880 = scalar_lea.vmem [#allocation18], %s879
          %s882 = ssub.s32 16, 16
          %883 = vsyncadd %s878, %s882
          %s884 = smul.addr %s52, 16
          %s885 = scalar_lea.hbm %s16, %s884
          %s887 = sshll.u32 %s880, 4
          %s888 = int_to_ptr.vmem [resolvable:$true] %s887
          %890 = dma.hbm_to_vmem [thread:$0]  %s885, 16, %s888, %s878
        $region84: #{tpu_custom_call.1} parent=31 // pred_fallthru
          _
        // Predicated region
        $region85: #{tpu_custom_call.1} parent=31 // pred_check
          %p891 = pneg %p499
        $region86: #{tpu_custom_call.1} parent=31 // pred_check_branch
          %893 = sbr.rel (%p891) target = $region88
        $region87: #{tpu_custom_call.1} parent=31 // pred_region
          %p894 = scmp.lt.s32.totalorder %s52, 1
          %s895 = scalar_select %p894, %s52, 1
          %s896 = smul.addr %s895, 4
          %s897 = smul.addr %s896, 8
          %s898 = scalar_lea.vmem %s17, %s897
        $region88: #{tpu_custom_call.1} parent=31 // pred_fallthru
          _
        // Predicated region
        $region89: #{tpu_custom_call.1} parent=31 // pred_check
          %p899 = pneg %p525
        $region90: #{tpu_custom_call.1} parent=31 // pred_check_branch
          %901 = sbr.rel (%p899) target = $region92
        $region91: #{tpu_custom_call.1} parent=31 // pred_region
          %p902 = scmp.lt.s32.totalorder %s52, 1
          %s903 = scalar_select %p902, %s52, 1
          %s904 = scalar_lea.vmem %s18, %s903
        $region92: #{tpu_custom_call.1} parent=31 // pred_fallthru
          _
        // Predicated region
        $region93: #{tpu_custom_call.1} parent=31 // pred_check
          %p905 = pneg %p551
        $region94: #{tpu_custom_call.1} parent=31 // pred_check_branch
          %907 = sbr.rel (%p905) target = $region96
        $region95: #{tpu_custom_call.1} parent=31 // pred_region
          %p908 = scmp.lt.s32.totalorder %s52, 1
          %s909 = scalar_select %p908, %s52, 1
          %s910 = smul.addr %s909, 4
          %s911 = smul.addr %s910, 8
          %s912 = scalar_lea.vmem %s19, %s911
        $region96: #{tpu_custom_call.1} parent=31 // pred_fallthru
          _
        // Predicated region
        $region97: #{tpu_custom_call.1} parent=31 // pred_check
          %p913 = pneg %p577
        $region98: #{tpu_custom_call.1} parent=31 // pred_check_branch
          %915 = sbr.rel (%p913) target = $region100
        $region99: #{tpu_custom_call.1} parent=31 // pred_region
          %s916 = sand.u32 %s45, 1
          %s917 = scalar_lea.sflag [#allocation19], %s916
          %s918 = sand.u32 %s567, 1
          %s919 = smul.addr %s918, 32
          %s920 = scalar_lea.vmem [#allocation20], %s919
          %s922 = ssub.s32 512, 512
          %923 = vsyncadd %s917, %s922
          %s924 = smul.addr %s52, 4
          %s925 = smul.addr %s924, 128
          %s926 = scalar_lea.hbm %s20, %s925
          %s927 = sshll.u32 %s920, 4
          %s928 = int_to_ptr.vmem [resolvable:$true] %s927
          %933 = dma.hbm_to_vmem [thread:$0]  %s926, 512, %s928, %s917, 128, 128, 8
        $region100: #{tpu_custom_call.1} parent=31 // pred_fallthru
          _
        // Predicated region
        $region101: #{tpu_custom_call.1} parent=31 // pred_check
          %p934 = pneg %p603
        $region102: #{tpu_custom_call.1} parent=31 // pred_check_branch
          %936 = sbr.rel (%p934) target = $region104
        $region103: #{tpu_custom_call.1} parent=31 // pred_region
          %s937 = sand.u32 %s45, 1
          %s938 = scalar_lea.sflag [#allocation22], %s937
          %s939 = sand.u32 %s593, 1
          %s940 = scalar_lea.vmem [#allocation21], %s939
          %s942 = ssub.s32 16, 16
          %943 = vsyncadd %s938, %s942
          %s944 = smul.addr %s52, 16
          %s945 = scalar_lea.hbm %s21, %s944
          %s947 = sshll.u32 %s940, 4
          %s948 = int_to_ptr.vmem [resolvable:$true] %s947
          %950 = dma.hbm_to_vmem [thread:$0]  %s945, 16, %s948, %s938
        $region104: #{tpu_custom_call.1} parent=31 // pred_fallthru
          _
        // Predicated region
        $region105: #{tpu_custom_call.1} parent=31 // pred_check
          %p951 = pneg %p629
        $region106: #{tpu_custom_call.1} parent=31 // pred_check_branch
          %953 = sbr.rel (%p951) target = $region108
        $region107: #{tpu_custom_call.1} parent=31 // pred_region
          %p954 = scmp.lt.s32.totalorder %s52, 1
          %s955 = scalar_select %p954, %s52, 1
          %s956 = smul.addr %s955, 4
          %s957 = smul.addr %s956, 8
          %s958 = scalar_lea.vmem %s22, %s957
        $region108: #{tpu_custom_call.1} parent=31 // pred_fallthru
          _
        // Predicated region
        $region109: #{tpu_custom_call.1} parent=31 // pred_check
          %p959 = pneg %p655
        $region110: #{tpu_custom_call.1} parent=31 // pred_check_branch
          %961 = sbr.rel (%p959) target = $region112
        $region111: #{tpu_custom_call.1} parent=31 // pred_region
          %s962 = sand.u32 %s45, 1
          %s963 = scalar_lea.sflag [#allocation22], %s962
          %s964 = sand.u32 %s645, 1
          %s965 = scalar_lea.vmem [#allocation23], %s964
          %s967 = ssub.s32 16, 16
          %968 = vsyncadd %s963, %s967
          %s969 = smul.addr %s52, 16
          %s970 = scalar_lea.hbm %s23, %s969
          %s972 = sshll.u32 %s965, 4
          %s973 = int_to_ptr.vmem [resolvable:$true] %s972
          %975 = dma.hbm_to_vmem [thread:$0]  %s970, 16, %s973, %s963
        $region112: #{tpu_custom_call.1} parent=31 // pred_fallthru
          _
      $region32: #{tpu_custom_call.1} parent=5 // pred_fallthru
        _
      %p976 = scmp.le.s32.totalorder 1, %s45
      %p977 = scmp.lt.s32.totalorder %s45, 9
      %p978 = pnand %p976, %p977
      %p979 = pneg %p978
      // Predicated region
      $region113: #{tpu_custom_call.1} parent=5 // pred_check
        _
      $region114: #{tpu_custom_call.1} parent=5 // pred_check_branch
        %981 = sbr.rel (%p978) target = $region116
      $region115: #{tpu_custom_call.1} parent=5 // pred_region
        %s982 = ssub.s32 %s45, 1
        // Predicated region
        $region117: #{tpu_custom_call.1} parent=115 // pred_check
          %p983 = pneg %p99
        $region118: #{tpu_custom_call.1} parent=115 // pred_check_branch
          %985 = sbr.rel (%p983) target = $region120
        $region119: #{tpu_custom_call.1} parent=115 // pred_region
          %986 = dma.done [#allocation7], 128
        $region120: #{tpu_custom_call.1} parent=115 // pred_fallthru
          _
        // Predicated region
        $region121: #{tpu_custom_call.1} parent=115 // pred_check
          %p987 = pneg %p224
        $region122: #{tpu_custom_call.1} parent=115 // pred_check_branch
          %989 = sbr.rel (%p987) target = $region124
        $region123: #{tpu_custom_call.1} parent=115 // pred_region
          %990 = dma.done [#allocation10], 128
        $region124: #{tpu_custom_call.1} parent=115 // pred_fallthru
          _
        // Predicated region
        $region125: #{tpu_custom_call.1} parent=115 // pred_check
          %p991 = pneg %p245
        $region126: #{tpu_custom_call.1} parent=115 // pred_check_branch
          %993 = sbr.rel (%p991) target = $region128
        $region127: #{tpu_custom_call.1} parent=115 // pred_region
          %994 = dma.done [#allocation10], 16
        $region128: #{tpu_custom_call.1} parent=115 // pred_fallthru
          _
        %s995 = sand.u32 %s50, 1
        %s996 = scalar_lea.sflag [#allocation13], %s995
        %s997 = sand.u32 %s258, 1
        %s998 = scalar_lea.vmem [#allocation12], %s997
        // Predicated region
        $region129: #{tpu_custom_call.1} parent=115 // pred_check
          %p999 = pneg %p271
        $region130: #{tpu_custom_call.1} parent=115 // pred_check_branch
          %1001 = sbr.rel (%p999) target = $region132
        $region131: #{tpu_custom_call.1} parent=115 // pred_region
          %1002 = dma.done %s996, 16
        $region132: #{tpu_custom_call.1} parent=115 // pred_fallthru
          _
        %s1003 = sand.u32 %s50, 1
        %s1004 = scalar_lea.sflag [#allocation13], %s1003
        %s1005 = sand.u32 %s336, 1
        %s1006 = smul.addr %s1005, 4
        %s1007 = scalar_lea.vmem [#allocation14], %s1006
        // Predicated region
        $region133: #{tpu_custom_call.1} parent=115 // pred_check
          %p1008 = pneg %p349
        $region134: #{tpu_custom_call.1} parent=115 // pred_check_branch
          %1010 = sbr.rel (%p1008) target = $region136
        $region135: #{tpu_custom_call.1} parent=115 // pred_region
          %1011 = dma.done %s1004, 64
        $region136: #{tpu_custom_call.1} parent=115 // pred_fallthru
          _
        %s1012 = sand.u32 %s50, 1
        %s1013 = scalar_lea.sflag [#allocation16], %s1012
        %s1014 = sand.u32 %s362, 1
        %s1015 = scalar_lea.vmem [#allocation15], %s1014
        // Predicated region
        $region137: #{tpu_custom_call.1} parent=115 // pred_check
          %p1016 = pneg %p375
        $region138: #{tpu_custom_call.1} parent=115 // pred_check_branch
          %1018 = sbr.rel (%p1016) target = $region140
        $region139: #{tpu_custom_call.1} parent=115 // pred_region
          %1019 = dma.done %s1013, 16
        $region140: #{tpu_custom_call.1} parent=115 // pred_fallthru
          _
        %s1020 = sand.u32 %s50, 1
        %s1021 = scalar_lea.sflag [#allocation16], %s1020
        %s1022 = sand.u32 %s414, 1
        %s1023 = scalar_lea.vmem [#allocation17], %s1022
        // Predicated region
        $region141: #{tpu_custom_call.1} parent=115 // pred_check
          %p1024 = pneg %p427
        $region142: #{tpu_custom_call.1} parent=115 // pred_check_branch
          %1026 = sbr.rel (%p1024) target = $region144
        $region143: #{tpu_custom_call.1} parent=115 // pred_region
          %1027 = dma.done %s1021, 16
        $region144: #{tpu_custom_call.1} parent=115 // pred_fallthru
          _
        %s1028 = sand.u32 %s50, 1
        %s1029 = scalar_lea.sflag [#allocation19], %s1028
        %s1030 = sand.u32 %s466, 1
        %s1031 = scalar_lea.vmem [#allocation18], %s1030
        // Predicated region
        $region145: #{tpu_custom_call.1} parent=115 // pred_check
          %p1032 = pneg %p479
        $region146: #{tpu_custom_call.1} parent=115 // pred_check_branch
          %1034 = sbr.rel (%p1032) target = $region148
        $region147: #{tpu_custom_call.1} parent=115 // pred_region
          %1035 = dma.done %s1029, 16
        $region148: #{tpu_custom_call.1} parent=115 // pred_fallthru
          _
        %s1036 = sand.u32 %s50, 1
        %s1037 = scalar_lea.sflag [#allocation19], %s1036
        %s1038 = sand.u32 %s570, 1
        %s1039 = smul.addr %s1038, 32
        %s1040 = scalar_lea.vmem [#allocation20], %s1039
        // Predicated region
        $region149: #{tpu_custom_call.1} parent=115 // pred_check
          %p1041 = pneg %p583
        $region150: #{tpu_custom_call.1} parent=115 // pred_check_branch
          %1043 = sbr.rel (%p1041) target = $region152
        $region151: #{tpu_custom_call.1} parent=115 // pred_region
          %1044 = dma.done %s1037, 512
        $region152: #{tpu_custom_call.1} parent=115 // pred_fallthru
          _
        %s1045 = sand.u32 %s50, 1
        %s1046 = scalar_lea.sflag [#allocation22], %s1045
        %s1047 = sand.u32 %s596, 1
        %s1048 = scalar_lea.vmem [#allocation21], %s1047
        // Predicated region
        $region153: #{tpu_custom_call.1} parent=115 // pred_check
          %p1049 = pneg %p609
        $region154: #{tpu_custom_call.1} parent=115 // pred_check_branch
          %1051 = sbr.rel (%p1049) target = $region156
        $region155: #{tpu_custom_call.1} parent=115 // pred_region
          %1052 = dma.done %s1046, 16
        $region156: #{tpu_custom_call.1} parent=115 // pred_fallthru
          _
        %s1053 = sand.u32 %s50, 1
        %s1054 = scalar_lea.sflag [#allocation22], %s1053
        %s1055 = sand.u32 %s648, 1
        %s1056 = scalar_lea.vmem [#allocation23], %s1055
        // Predicated region
        $region157: #{tpu_custom_call.1} parent=115 // pred_check
          %p1057 = pneg %p661
        $region158: #{tpu_custom_call.1} parent=115 // pred_check_branch
          %1059 = sbr.rel (%p1057) target = $region160
        $region159: #{tpu_custom_call.1} parent=115 // pred_region
          %1060 = dma.done %s1054, 16
        $region160: #{tpu_custom_call.1} parent=115 // pred_fallthru
          _
        %p1061 = pneg %p78
        %p1062 = pneg %p75
        %p1063 = pneg %p99
        %p1064 = pneg %p96
        %s1065 = smul.u32 2, %s55
        %p1066 = scmp.lt.s32.totalorder %s1065, 7
        %s1067 = scalar_select %p1066, %s1065, 7
        %s1068 = smul.addr %s1067, 8
        %s1069 = scalar_lea.vmem %s2, %s1068
        %p1070 = pneg %p125
        %p1071 = pneg %p122
        %s1072 = smul.u32 2, %s55
        %p1073 = scmp.lt.s32.totalorder %s1072, 7
        %s1074 = scalar_select %p1073, %s1072, 7
        %s1075 = smul.addr %s1074, 8
        %s1076 = scalar_lea.vmem %s3, %s1075
        %p1077 = pneg %p151
        %p1078 = pneg %p148
        %s1079 = smul.u32 2, %s55
        %p1080 = scmp.lt.s32.totalorder %s1079, 7
        %s1081 = scalar_select %p1080, %s1079, 7
        %s1082 = smul.addr %s1081, 8
        %s1083 = scalar_lea.vmem %s4, %s1082
        %p1084 = pneg %p177
        %p1085 = pneg %p174
        %s1086 = smul.u32 2, %s55
        %p1087 = scmp.lt.s32.totalorder %s1086, 7
        %s1088 = scalar_select %p1087, %s1086, 7
        %s1089 = smul.addr %s1088, 8
        %s1090 = scalar_lea.vmem %s5, %s1089
        %p1091 = pneg %p203
        %p1092 = pneg %p200
        %p1093 = pneg %p224
        %p1094 = pneg %p221
        %p1095 = pneg %p245
        %p1096 = pneg %p242
        %s1097 = sand.u32 %s50, 1
        %s1098 = scalar_lea.sflag [#allocation13], %s1097
        %s1099 = sand.u32 %s258, 1
        %s1100 = scalar_lea.vmem [#allocation12], %s1099
        %p1101 = pneg %p271
        %p1102 = pneg %p268
        %p1103 = scmp.lt.s32.totalorder %s54, 1
        %s1104 = scalar_select %p1103, %s54, 1
        %s1105 = smul.addr %s1104, 4
        %s1106 = smul.addr %s1105, 8
        %s1107 = scalar_lea.vmem %s9, %s1106
        %p1108 = pneg %p297
        %p1109 = pneg %p294
        %p1110 = scmp.lt.s32.totalorder %s54, 1
        %s1111 = scalar_select %p1110, %s54, 1
        %s1112 = smul.addr %s1111, 4
        %s1113 = smul.addr %s1112, 8
        %s1114 = scalar_lea.vmem %s10, %s1113
        %p1115 = pneg %p323
        %p1116 = pneg %p320
        %s1117 = sand.u32 %s50, 1
        %s1118 = scalar_lea.sflag [#allocation13], %s1117
        %s1119 = sand.u32 %s336, 1
        %s1120 = smul.addr %s1119, 4
        %s1121 = scalar_lea.vmem [#allocation14], %s1120
        %p1122 = pneg %p349
        %p1123 = pneg %p346
        %s1124 = sand.u32 %s50, 1
        %s1125 = scalar_lea.sflag [#allocation16], %s1124
        %s1126 = sand.u32 %s362, 1
        %s1127 = scalar_lea.vmem [#allocation15], %s1126
        %p1128 = pneg %p375
        %p1129 = pneg %p372
        %p1130 = scmp.lt.s32.totalorder %s54, 1
        %s1131 = scalar_select %p1130, %s54, 1
        %s1132 = smul.addr %s1131, 4
        %s1133 = smul.addr %s1132, 8
        %s1134 = scalar_lea.vmem %s13, %s1133
        %p1135 = pneg %p401
        %p1136 = pneg %p398
        %s1137 = sand.u32 %s50, 1
        %s1138 = scalar_lea.sflag [#allocation16], %s1137
        %s1139 = sand.u32 %s414, 1
        %s1140 = scalar_lea.vmem [#allocation17], %s1139
        %p1141 = pneg %p427
        %p1142 = pneg %p424
        %p1143 = scmp.lt.s32.totalorder %s54, 1
        %s1144 = scalar_select %p1143, %s54, 1
        %s1145 = smul.addr %s1144, 4
        %s1146 = smul.addr %s1145, 8
        %s1147 = scalar_lea.vmem %s15, %s1146
        %p1148 = pneg %p453
        %p1149 = pneg %p450
        %s1150 = sand.u32 %s50, 1
        %s1151 = scalar_lea.sflag [#allocation19], %s1150
        %s1152 = sand.u32 %s466, 1
        %s1153 = scalar_lea.vmem [#allocation18], %s1152
        %p1154 = pneg %p479
        %p1155 = pneg %p476
        %p1156 = scmp.lt.s32.totalorder %s54, 1
        %s1157 = scalar_select %p1156, %s54, 1
        %s1158 = smul.addr %s1157, 4
        %s1159 = smul.addr %s1158, 8
        %s1160 = scalar_lea.vmem %s17, %s1159
        %p1161 = pneg %p505
        %p1162 = pneg %p502
        %p1163 = scmp.lt.s32.totalorder %s54, 1
        %s1164 = scalar_select %p1163, %s54, 1
        %s1165 = scalar_lea.vmem %s18, %s1164
        %p1166 = pneg %p531
        %p1167 = pneg %p528
        %p1168 = scmp.lt.s32.totalorder %s54, 1
        %s1169 = scalar_select %p1168, %s54, 1
        %s1170 = smul.addr %s1169, 4
        %s1171 = smul.addr %s1170, 8
        %s1172 = scalar_lea.vmem %s19, %s1171
        %p1173 = pneg %p557
        %p1174 = pneg %p554
        %s1175 = sand.u32 %s50, 1
        %s1176 = scalar_lea.sflag [#allocation19], %s1175
        %s1177 = sand.u32 %s570, 1
        %s1178 = smul.addr %s1177, 32
        %s1179 = scalar_lea.vmem [#allocation20], %s1178
        %p1180 = pneg %p583
        %p1181 = pneg %p580
        %s1182 = sand.u32 %s50, 1
        %s1183 = scalar_lea.sflag [#allocation22], %s1182
        %s1184 = sand.u32 %s596, 1
        %s1185 = scalar_lea.vmem [#allocation21], %s1184
        %p1186 = pneg %p609
        %p1187 = pneg %p606
        %p1188 = scmp.lt.s32.totalorder %s54, 1
        %s1189 = scalar_select %p1188, %s54, 1
        %s1190 = smul.addr %s1189, 4
        %s1191 = smul.addr %s1190, 8
        %s1192 = scalar_lea.vmem %s22, %s1191
        %p1193 = pneg %p635
        %p1194 = pneg %p632
        %s1195 = sand.u32 %s50, 1
        %s1196 = scalar_lea.sflag [#allocation22], %s1195
        %s1197 = sand.u32 %s648, 1
        %s1198 = scalar_lea.vmem [#allocation23], %s1197
        %p1199 = pneg %p661
        %p1200 = pneg %p658
        %p1201 = pneg %p682
        %p1202 = pneg %p679
        %s1203 = smul.u32 2, %s55
        %p1204 = scmp.lt.s32.totalorder %s1203, 7
        %s1205 = scalar_select %p1204, %s1203, 7
        %s1206 = smul.addr %s1205, 8
        %s1207 = scalar_lea.vmem %s2, %s1206
        %s1208 = smul.u32 2, %s55
        %s1209 = smul.u32 2, %s55
        %p1210 = scmp.lt.s32.totalorder %s1209, 7
        %s1211 = scalar_select %p1210, %s1209, 7
        %s1212 = smul.addr %s1211, 8
        %s1213 = scalar_lea.vmem %s3, %s1212
        %s1214 = smul.u32 2, %s55
        %s1215 = smul.u32 2, %s55
        %p1216 = scmp.lt.s32.totalorder %s1215, 7
        %s1217 = scalar_select %p1216, %s1215, 7
        %s1218 = smul.addr %s1217, 8
        %s1219 = scalar_lea.vmem %s4, %s1218
        %s1220 = smul.u32 2, %s55
        %s1221 = smul.u32 2, %s55
        %p1222 = scmp.lt.s32.totalorder %s1221, 7
        %s1223 = scalar_select %p1222, %s1221, 7
        %s1224 = smul.addr %s1223, 8
        %s1225 = scalar_lea.vmem %s5, %s1224
        %s1226 = smul.u32 2, %s55
        %p1227 = scmp.lt.s32.totalorder %s54, 1
        %s1228 = scalar_select %p1227, %s54, 1
        %s1229 = smul.addr %s1228, 4
        %s1230 = smul.addr %s1229, 8
        %s1231 = scalar_lea.vmem %s9, %s1230
        %p1232 = scmp.lt.s32.totalorder %s54, 1
        %s1233 = scalar_select %p1232, %s54, 1
        %s1234 = smul.addr %s1233, 4
        %s1235 = smul.addr %s1234, 8
        %s1236 = scalar_lea.vmem %s10, %s1235
        %p1237 = scmp.lt.s32.totalorder %s54, 1
        %s1238 = scalar_select %p1237, %s54, 1
        %s1239 = smul.addr %s1238, 4
        %s1240 = smul.addr %s1239, 8
        %s1241 = scalar_lea.vmem %s13, %s1240
        %p1242 = scmp.lt.s32.totalorder %s54, 1
        %s1243 = scalar_select %p1242, %s54, 1
        %s1244 = smul.addr %s1243, 4
        %s1245 = smul.addr %s1244, 8
        %s1246 = scalar_lea.vmem %s15, %s1245
        %p1247 = scmp.lt.s32.totalorder %s54, 1
        %s1248 = scalar_select %p1247, %s54, 1
        %s1249 = smul.addr %s1248, 4
        %s1250 = smul.addr %s1249, 8
        %s1251 = scalar_lea.vmem %s17, %s1250
        %p1252 = scmp.lt.s32.totalorder %s54, 1
        %s1253 = scalar_select %p1252, %s54, 1
        %s1254 = scalar_lea.vmem %s18, %s1253
        %p1255 = scmp.lt.s32.totalorder %s54, 1
        %s1256 = scalar_select %p1255, %s54, 1
        %s1257 = smul.addr %s1256, 4
        %s1258 = smul.addr %s1257, 8
        %s1259 = scalar_lea.vmem %s19, %s1258
        %p1260 = scmp.lt.s32.totalorder %s54, 1
        %s1261 = scalar_select %p1260, %s54, 1
        %s1262 = smul.addr %s1261, 4
        %s1263 = smul.addr %s1262, 8
        %s1264 = scalar_lea.vmem %s22, %s1263
        %p1266 = scmp.eq.s32.totalorder %s54, 0
        %p1267 = scmp.eq.s32.totalorder %s55, 0
        %p1268 = pnand %p1266, %p1267
        %p1269 = pneg %p1268
        // Predicated region
        $region161: #{tpu_custom_call.1} parent=115 // pred_check
          _
        $region162: #{tpu_custom_call.1} parent=115 // pred_check_branch
          %1271 = sbr.rel (%p1268) target = $region164
        $region163: #{tpu_custom_call.1} parent=115 // pred_region
          %v1272 = vld [vmem:[%s0] sm:$0xff]
          %vm1273 = vcmask 23552
          %1274 = vst.msk [vmem:[#allocation2] sm:$0xff] %vm1273, %v1272
          %v1275 = vld [vmem:[#allocation6] sm:$0xff]
          %v1276 = vld [vmem:[#allocation9] sm:$0xff]
          %v1277 = vld [vmem:[#allocation11] sm:$0x1]
          %v1279 = vlaneseq
          %v1280 = vshrl.u32 %v1279, 7
          %v1281 = vsub.s32 0, %v1280
          %v1282 = vrot.slane %v1277, %v1281
          %vm1284 = vcmask 64512
          %v1286 = vsel %vm1284, %v1275, 0
          %1288 = vmatprep.subr.mxu0 0.0
          %1289 = vmatpush1.msra.mxu0 0.0
          %1290 = vmatprep.subr.mxu0 0.0
          %1291 = vmatpush1.msra.mxu0 0.0
          %1292 = vmatprep.subr.mxu0 0.0
          %1293 = vmatpush1.msra.mxu0 0.0
          %1294 = vmatprep.subr.mxu0 0.0
          %1295 = vmatpush1.msra.mxu0 0.0
          %1296 = vmatprep.subr.mxu0 0.0
          %1297 = vmatpush1.msra.mxu0 0.0
          %1298 = vmatprep.subr.mxu0 0.0
          %1299 = vmatpush1.msra.mxu0 0.0
          %1300 = vmatprep.subr.mxu0 0.0
          %1301 = vmatpush1.msra.mxu0 0.0
          %1302 = vmatprep.subr.mxu0 0.0
          %1303 = vmatpush1.msra.mxu0 0.0
          %1304 = vmatprep.subr.mxu0 0.0
          %1305 = vmatpush1.msra.mxu0 0.0
          %1306 = vmatprep.subr.mxu0 0.0
          %1307 = vmatpush1.msra.mxu0 0.0
          %1308 = vmatprep.subr.mxu0 0.0
          %1309 = vmatpush1.msra.mxu0 0.0
          %1310 = vmatprep.subr.mxu0 0.0
          %1311 = vmatpush1.msra.mxu0 0.0
          %1312 = vmatprep.subr.mxu0 0.0
          %1313 = vmatpush1.msra.mxu0 0.0
          %1314 = vmatprep.subr.mxu0 0.0
          %1315 = vmatpush1.msra.mxu0 0.0
          %1316 = vmatprep.subr.mxu0 0.0
          %1317 = vmatpush1.msra.mxu0 0.0
          %1318 = vmatprep.subr.mxu0 0.0
          %1319 = vmatpush1.msra.mxu0 %v1276
          %1320 = vmatprep.subr.mxu0 0.0
          %1321 = vmatpush2.msra.mxu0 0.0
          %1322 = vmatprep.subr.mxu0 0.0
          %1323 = vmatpush2.msra.mxu0 0.0
          %1324 = vmatprep.subr.mxu0 0.0
          %1325 = vmatpush2.msra.mxu0 0.0
          %1326 = vmatprep.subr.mxu0 0.0
          %1327 = vmatpush2.msra.mxu0 0.0
          %1328 = vmatprep.subr.mxu0 0.0
          %1329 = vmatpush2.msra.mxu0 0.0
          %1330 = vmatprep.subr.mxu0 0.0
          %1331 = vmatpush2.msra.mxu0 0.0
          %1332 = vmatprep.subr.mxu0 0.0
          %1333 = vmatpush2.msra.mxu0 0.0
          %1334 = vmatprep.subr.mxu0 0.0
          %1335 = vmatpush2.msra.mxu0 0.0
          %1336 = vmatprep.subr.mxu0 0.0
          %1337 = vmatpush2.msra.mxu0 0.0
          %1338 = vmatprep.subr.mxu0 0.0
          %1339 = vmatpush2.msra.mxu0 0.0
          %1340 = vmatprep.subr.mxu0 0.0
          %1341 = vmatpush2.msra.mxu0 0.0
          %1342 = vmatprep.subr.mxu0 0.0
          %1343 = vmatpush2.msra.mxu0 0.0
          %1344 = vmatprep.subr.mxu0 0.0
          %1345 = vmatpush2.msra.mxu0 0.0
          %1346 = vmatprep.subr.mxu0 0.0
          %1347 = vmatpush2.msra.mxu0 0.0
          %1348 = vmatprep.subr.mxu0 0.0
          %1349 = vmatpush2.msra.mxu0 0.0
          %1350 = vmatprep.subr.mxu0 0.0
          %1351 = vmatpush2.msra.mxu0 0.0
          %1352 = vmatprep.mubr.f32.mxu0 0.0
          %1353 = vmatmul.mubr.f32.gmra.mxu0 %v1286
          %v1354 = vpop.f32.mrf.mxu0
          %v1355 = vadd.f32 %v1282, %v1354
          %v1356 = vpop.f32.mrf.mxu0
          %1357 = vdwg.mxu0
          %vm1358 = vcmask 261120
          %1359 = vst.msk [vmem:[#allocation3] sm:$0xff] %vm1358, %v1355
        $region164: #{tpu_custom_call.1} parent=115 // pred_fallthru
          _
        // Predicated region
        $region165: #{tpu_custom_call.1} parent=115 // pred_check
          %p1360 = pneg %p1267
        $region166: #{tpu_custom_call.1} parent=115 // pred_check_branch
          %1362 = sbr.rel (%p1360) target = $region168
        $region167: #{tpu_custom_call.1} parent=115 // pred_region
          %v1363 = vld [vmem:[#allocation3] sm:$0xff]
          %v1364 = vld [vmem:[%s1231] sm:$0xff]
          %v1365 = vld [vmem:[%s1231 + $0x8] sm:$0xff]
          %v1366 = vld [vmem:[%s1231 + $0x10] sm:$0xff]
          %v1367 = vld [vmem:[%s1231 + $0x18] sm:$0xff]
          %vm1368 = vcmask 261120
          %v1370 = vsel %vm1368, %v1363, 0
          %1372 = vmatprep.subr.mxu0 0.0
          %1373 = vmatpush1.msra.mxu0 0.0
          %1374 = vmatprep.subr.mxu0 0.0
          %1375 = vmatpush1.msra.mxu0 0.0
          %1376 = vmatprep.subr.mxu0 0.0
          %1377 = vmatpush1.msra.mxu0 0.0
          %1378 = vmatprep.subr.mxu0 0.0
          %1379 = vmatpush1.msra.mxu0 0.0
          %1380 = vmatprep.subr.mxu0 0.0
          %1381 = vmatpush1.msra.mxu0 0.0
          %1382 = vmatprep.subr.mxu0 0.0
          %1383 = vmatpush1.msra.mxu0 0.0
          %1384 = vmatprep.subr.mxu0 0.0
          %1385 = vmatpush1.msra.mxu0 0.0
          %1386 = vmatprep.subr.mxu0 0.0
          %1387 = vmatpush1.msra.mxu0 0.0
          %1388 = vmatprep.subr.mxu0 0.0
          %1389 = vmatpush1.msra.mxu0 0.0
          %1390 = vmatprep.subr.mxu0 0.0
          %1391 = vmatpush1.msra.mxu0 0.0
          %1392 = vmatprep.subr.mxu0 0.0
          %1393 = vmatpush1.msra.mxu0 0.0
          %1394 = vmatprep.subr.mxu0 0.0
          %1395 = vmatpush1.msra.mxu0 0.0
          %1396 = vmatprep.subr.mxu0 0.0
          %1397 = vmatpush1.msra.mxu0 %v1367
          %1398 = vmatprep.subr.mxu0 0.0
          %1399 = vmatpush1.msra.mxu0 %v1366
          %1400 = vmatprep.subr.mxu0 0.0
          %1401 = vmatpush1.msra.mxu0 %v1365
          %1402 = vmatprep.subr.mxu0 0.0
          %1403 = vmatpush1.msra.mxu0 %v1364
          %1404 = vmatprep.subr.mxu0 0.0
          %1405 = vmatpush2.msra.mxu0 0.0
          %1406 = vmatprep.subr.mxu0 0.0
          %1407 = vmatpush2.msra.mxu0 0.0
          %1408 = vmatprep.subr.mxu0 0.0
          %1409 = vmatpush2.msra.mxu0 0.0
          %1410 = vmatprep.subr.mxu0 0.0
          %1411 = vmatpush2.msra.mxu0 0.0
          %1412 = vmatprep.subr.mxu0 0.0
          %1413 = vmatpush2.msra.mxu0 0.0
          %1414 = vmatprep.subr.mxu0 0.0
          %1415 = vmatpush2.msra.mxu0 0.0
          %1416 = vmatprep.subr.mxu0 0.0
          %1417 = vmatpush2.msra.mxu0 0.0
          %1418 = vmatprep.subr.mxu0 0.0
          %1419 = vmatpush2.msra.mxu0 0.0
          %1420 = vmatprep.subr.mxu0 0.0
          %1421 = vmatpush2.msra.mxu0 0.0
          %1422 = vmatprep.subr.mxu0 0.0
          %1423 = vmatpush2.msra.mxu0 0.0
          %1424 = vmatprep.subr.mxu0 0.0
          %1425 = vmatpush2.msra.mxu0 0.0
          %1426 = vmatprep.subr.mxu0 0.0
          %1427 = vmatpush2.msra.mxu0 0.0
          %1428 = vmatprep.subr.mxu0 0.0
          %1429 = vmatpush2.msra.mxu0 0.0
          %1430 = vmatprep.subr.mxu0 0.0
          %1431 = vmatpush2.msra.mxu0 0.0
          %1432 = vmatprep.subr.mxu0 0.0
          %1433 = vmatpush2.msra.mxu0 0.0
          %1434 = vmatprep.subr.mxu0 0.0
          %1435 = vmatpush2.msra.mxu0 0.0
          %1436 = vmatprep.mubr.f32.mxu0 0.0
          %1437 = vmatmul.mubr.f32.gmra.mxu0 %v1370
          %v1438 = vpop.f32.mrf.mxu0
          %v1439 = vadd.f32 0.0, %v1438
          %v1440 = vpop.f32.mrf.mxu0
          %1441 = vdwg.mxu0
          %v1442 = vld [vmem:[%s1236] sm:$0xff]
          %v1443 = vld [vmem:[%s1236 + $0x8] sm:$0xff]
          %v1444 = vld [vmem:[%s1236 + $0x10] sm:$0xff]
          %v1445 = vld [vmem:[%s1236 + $0x18] sm:$0xff]
          %1446 = vmatprep.subr.mxu0 0.0
          %1447 = vmatpush1.msra.mxu0 0.0
          %1448 = vmatprep.subr.mxu0 0.0
          %1449 = vmatpush1.msra.mxu0 0.0
          %1450 = vmatprep.subr.mxu0 0.0
          %1451 = vmatpush1.msra.mxu0 0.0
          %1452 = vmatprep.subr.mxu0 0.0
          %1453 = vmatpush1.msra.mxu0 0.0
          %1454 = vmatprep.subr.mxu0 0.0
          %1455 = vmatpush1.msra.mxu0 0.0
          %1456 = vmatprep.subr.mxu0 0.0
          %1457 = vmatpush1.msra.mxu0 0.0
          %1458 = vmatprep.subr.mxu0 0.0
          %1459 = vmatpush1.msra.mxu0 0.0
          %1460 = vmatprep.subr.mxu0 0.0
          %1461 = vmatpush1.msra.mxu0 0.0
          %1462 = vmatprep.subr.mxu0 0.0
          %1463 = vmatpush1.msra.mxu0 0.0
          %1464 = vmatprep.subr.mxu0 0.0
          %1465 = vmatpush1.msra.mxu0 0.0
          %1466 = vmatprep.subr.mxu0 0.0
          %1467 = vmatpush1.msra.mxu0 0.0
          %1468 = vmatprep.subr.mxu0 0.0
          %1469 = vmatpush1.msra.mxu0 0.0
          %1470 = vmatprep.subr.mxu0 0.0
          %1471 = vmatpush1.msra.mxu0 %v1445
          %1472 = vmatprep.subr.mxu0 0.0
          %1473 = vmatpush1.msra.mxu0 %v1444
          %1474 = vmatprep.subr.mxu0 0.0
          %1475 = vmatpush1.msra.mxu0 %v1443
          %1476 = vmatprep.subr.mxu0 0.0
          %1477 = vmatpush1.msra.mxu0 %v1442
          %1478 = vmatprep.subr.mxu0 0.0
          %1479 = vmatpush2.msra.mxu0 0.0
          %1480 = vmatprep.subr.mxu0 0.0
          %1481 = vmatpush2.msra.mxu0 0.0
          %1482 = vmatprep.subr.mxu0 0.0
          %1483 = vmatpush2.msra.mxu0 0.0
          %1484 = vmatprep.subr.mxu0 0.0
          %1485 = vmatpush2.msra.mxu0 0.0
          %1486 = vmatprep.subr.mxu0 0.0
          %1487 = vmatpush2.msra.mxu0 0.0
          %1488 = vmatprep.subr.mxu0 0.0
          %1489 = vmatpush2.msra.mxu0 0.0
          %1490 = vmatprep.subr.mxu0 0.0
          %1491 = vmatpush2.msra.mxu0 0.0
          %1492 = vmatprep.subr.mxu0 0.0
          %1493 = vmatpush2.msra.mxu0 0.0
          %1494 = vmatprep.subr.mxu0 0.0
          %1495 = vmatpush2.msra.mxu0 0.0
          %1496 = vmatprep.subr.mxu0 0.0
          %1497 = vmatpush2.msra.mxu0 0.0
          %1498 = vmatprep.subr.mxu0 0.0
          %1499 = vmatpush2.msra.mxu0 0.0
          %1500 = vmatprep.subr.mxu0 0.0
          %1501 = vmatpush2.msra.mxu0 0.0
          %1502 = vmatprep.subr.mxu0 0.0
          %1503 = vmatpush2.msra.mxu0 0.0
          %1504 = vmatprep.subr.mxu0 0.0
          %1505 = vmatpush2.msra.mxu0 0.0
          %1506 = vmatprep.subr.mxu0 0.0
          %1507 = vmatpush2.msra.mxu0 0.0
          %1508 = vmatprep.subr.mxu0 0.0
          %1509 = vmatpush2.msra.mxu0 0.0
          %1510 = vmatprep.mubr.f32.mxu0 0.0
          %1511 = vmatmul.mubr.f32.gmra.mxu0 %v1370
          %v1512 = vpop.f32.mrf.mxu0
          %v1513 = vadd.f32 0.0, %v1512
          %v1514 = vpop.f32.mrf.mxu0
          %1515 = vdwg.mxu0
          %v1516 = vld [vmem:[#allocation2] sm:$0xff]
          %1518 = vrot.lane.b32.xlu0 %v1439, 3
          %v1519 = vpop.permute.xlu0 %1518
          %1522 = vrot.lane.b32.xlu0 %v1513, 35
          %v1523 = vpop.permute.xlu0 %1522
          %vm1525 = vcmask 23552
          %v1526 = vsel %vm1525, %v1516, %v1519
          %vm1527 = vcmask 285696
          %v1528 = vsel %vm1527, %v1526, %v1523
          %v1529 = vpack.c.bf16 %v1528, %v1528
          %vm1530 = vcmask 543744
          %1531 = vst.msk [vmem:[#allocation4] sm:$0xf] %vm1530, %v1529
          %vm1532 = vcmask 293888
          %1533 = vst.msk [vmem:[#allocation5] sm:$0xff] %vm1532, 0.0
        $region168: #{tpu_custom_call.1} parent=115 // pred_fallthru
          _
        %v1534 = vld [vmem:[%s1207] sm:$0xff]
        %v1535 = vld [vmem:[%s1207 + $0x8] sm:$0xff]
        %v1536 = vld [vmem:[%s1213] sm:$0xff]
        %v1537 = vld [vmem:[%s1213 + $0x8] sm:$0xff]
        %v1538 = vlaneseq
        %v1539 = vand.u32 %v1538, 127
        %1540 = vset.pattern.permute.xlu0 0
        %1541 = vperm.xlu0 %1540, %v1534
        %v1542 = vpop.permute.xlu0 %1541
        %1543 = vset.pattern.permute.xlu0 0
        %1544 = vperm.xlu0 %1543, %v1535
        %v1545 = vpop.permute.xlu0 %1544
        %1546 = vset.pattern.permute.xlu0 0
        %1547 = vperm.xlu0 %1546, %v1536
        %v1548 = vpop.permute.xlu0 %1547
        %1549 = vset.pattern.permute.xlu0 0
        %1550 = vperm.xlu0 %1549, %v1537
        %v1551 = vpop.permute.xlu0 %1550
        %vm1552 = vcmp.eq.s32.totalorder %v1542, %v1539
        %vm1553 = vcmp.eq.s32.totalorder %v1545, %v1539
        %vm1554 = vcmp.eq.s32.totalorder %v1548, %v1539
        %vm1555 = vcmp.eq.s32.totalorder %v1551, %v1539
        %v1556 = vsel %vm1552, 1, 0
        %v1557 = vsel %vm1553, 1, 0
        %v1558 = vsel %vm1554, 1, 0
        %v1559 = vsel %vm1555, 1, 0
        %v1560 = vcvt.s32.f32 %v1556
        %v1561 = vcvt.s32.f32 %v1557
        %v1562 = vcvt.s32.f32 %v1558
        %v1563 = vcvt.s32.f32 %v1559
        %v1564 = vpack.c.bf16 %v1561, %v1560
        %v1565 = vpack.c.bf16 %v1563, %v1562
        %v1566 = vld [vmem:[#allocation4] sm:$0xf]
        %vm1567 = vcmask 64512
        %v1569 = vsel %vm1567, %v1564, 0
        %v1572 = vsel %vm1567, %v1565, 0
        %vm1574 = vcmask 1043456
        %v1576 = vsel %vm1574, %v1566, 0
        %1578 = vmatprep.subr.bf16.mxu0 0
        %1579 = vmatpush1.bf16.msra.mxu0 0
        %1580 = vmatprep.subr.bf16.mxu0 0
        %1581 = vmatpush1.bf16.msra.mxu0 0
        %1582 = vmatprep.subr.bf16.mxu0 0
        %1583 = vmatpush1.bf16.msra.mxu0 0
        %1584 = vmatprep.subr.bf16.mxu0 0
        %1585 = vmatpush1.bf16.msra.mxu0 0
        %1586 = vmatprep.subr.bf16.mxu0 0
        %1587 = vmatpush1.bf16.msra.mxu0 0
        %1588 = vmatprep.subr.bf16.mxu0 0
        %1589 = vmatpush1.bf16.msra.mxu0 0
        %1590 = vmatprep.subr.bf16.mxu0 0
        %1591 = vmatpush1.bf16.msra.mxu0 0
        %1592 = vmatprep.subr.bf16.mxu0 0
        %1593 = vmatpush1.bf16.msra.mxu0 %v1576
        %1594 = vmatprep.subr.bf16.mxu0 0
        %1595 = vmatpush2.bf16.msra.mxu0 0
        %1596 = vmatprep.subr.bf16.mxu0 0
        %1597 = vmatpush2.bf16.msra.mxu0 0
        %1598 = vmatprep.subr.bf16.mxu0 0
        %1599 = vmatpush2.bf16.msra.mxu0 0
        %1600 = vmatprep.subr.bf16.mxu0 0
        %1601 = vmatpush2.bf16.msra.mxu0 0
        %1602 = vmatprep.subr.bf16.mxu0 0
        %1603 = vmatpush2.bf16.msra.mxu0 0
        %1604 = vmatprep.subr.bf16.mxu0 0
        %1605 = vmatpush2.bf16.msra.mxu0 0
        %1606 = vmatprep.subr.bf16.mxu0 0
        %1607 = vmatpush2.bf16.msra.mxu0 0
        %1608 = vmatprep.subr.bf16.mxu0 0
        %1609 = vmatpush2.bf16.msra.mxu0 0
        %1610 = vmatprep.mubr.bf16.mxu0 0
        %1611 = vmatmul.mubr.bf16.gmra.mxu0 %v1569
        %v1612 = vpop.f32.mrf.mxu0
        %v1613 = vadd.f32 0.0, %v1612
        %v1614 = vpop.f32.mrf.mxu0
        %v1615 = vpop.f32.mrf.mxu0
        %v1616 = vadd.f32 0.0, %v1615
        %v1617 = vpop.f32.mrf.mxu0
        %1618 = vmatprep.mubr.bf16.mxu0 0
        %1619 = vmatmul.mubr.bf16.gmra.mxu0 %v1572
        %v1620 = vpop.f32.mrf.mxu0
        %v1621 = vadd.f32 0.0, %v1620
        %v1622 = vpop.f32.mrf.mxu0
        %v1623 = vpop.f32.mrf.mxu0
        %v1624 = vadd.f32 0.0, %v1623
        %v1625 = vpop.f32.mrf.mxu0
        %1626 = vdwg.mxu0
        %v1627 = vsub.f32 %v1613, %v1621
        %v1628 = vsub.f32 %v1616, %v1624
        %v1629 = vmul.f32 %v1627, %v1627
        %v1630 = vmul.f32 %v1628, %v1628
        %vm1631 = vcmask 23552
        %v1632 = vsel %vm1631, %v1629, 0.0
        %1633 = vadd.xlane.f32.xlu0 %v1632
        %v1634 = vpop.xlane.xlu0 %1633
        %v1635 = vsel %vm1631, %v1630, 0.0
        %1636 = vadd.xlane.f32.xlu0 %v1635
        %v1637 = vpop.xlane.xlu0 %1636
        %v1638 = vld [vmem:[%s998] sm:$0x1]
        %v1640 = vlaneseq
        %v1641 = vshrl.u32 %v1640, 7
        %v1642 = vsub.s32 0, %v1641
        %v1643 = vrot.slane %v1638, %v1642
        %v1645 = vmul.f32 %v1634, %v1643
        %v1646 = vmul.f32 %v1637, %v1643
        %1649 = vrot.lane.b32.xlu0 %v1613, 125
        %v1650 = vpop.permute.xlu0 %1649
        %1651 = vrot.lane.b32.xlu0 %v1616, 125
        %v1652 = vpop.permute.xlu0 %1651
        %v1655 = vadd.f32 %v1645, %v1650
        %v1656 = vadd.f32 %v1646, %v1652
        %1659 = vrot.lane.b32.xlu0 %v1621, 93
        %v1660 = vpop.permute.xlu0 %1659
        %1661 = vrot.lane.b32.xlu0 %v1624, 93
        %v1662 = vpop.permute.xlu0 %1661
        %v1665 = vadd.f32 %v1655, %v1660
        %v1666 = vadd.f32 %v1656, %v1662
        %v1667 = vld [vmem:[%s1219] sm:$0xff]
        %v1668 = vld [vmem:[%s1219 + $0x8] sm:$0xff]
        %v1669 = vld [vmem:[%s1007] sm:$0xf]
        %vm1670 = vcmask 31744
        %v1672 = vsel %vm1670, %v1667, 0
        %v1675 = vsel %vm1670, %v1668, 0
        %v1678 = vsel %vm1574, %v1669, 0
        %1680 = vmatprep.subr.mxu0 0.0
        %1681 = vmatpush1.msra.mxu0 0.0
        %1682 = vmatprep.subr.mxu0 0.0
        %1683 = vmatpush1.msra.mxu0 0.0
        %1684 = vmatprep.subr.mxu0 0.0
        %1685 = vmatpush1.msra.mxu0 0.0
        %1686 = vmatprep.subr.mxu0 0.0
        %1687 = vmatpush1.msra.mxu0 0.0
        %1688 = vmatprep.subr.mxu0 0.0
        %1689 = vmatpush1.msra.mxu0 0.0
        %1690 = vmatprep.subr.mxu0 0.0
        %1691 = vmatpush1.msra.mxu0 0.0
        %1692 = vmatprep.subr.mxu0 0.0
        %1693 = vmatpush1.msra.mxu0 0.0
        %1694 = vmatprep.subr.mxu0 0.0
        %1695 = vmatpush1.msra.mxu0 0.0
        %1696 = vmatprep.subr.mxu0 0.0
        %1697 = vmatpush1.msra.mxu0 0.0
        %1698 = vmatprep.subr.mxu0 0.0
        %1699 = vmatpush1.msra.mxu0 0.0
        %1700 = vmatprep.subr.mxu0 0.0
        %1701 = vmatpush1.msra.mxu0 0.0
        %1702 = vmatprep.subr.mxu0 0.0
        %1703 = vmatpush1.msra.mxu0 0.0
        %1704 = vmatprep.subr.mxu0 0.0
        %1705 = vmatpush1.msra.mxu0 0.0
        %1706 = vmatprep.subr.mxu0 0.0
        %1707 = vmatpush1.msra.mxu0 0.0
        %1708 = vmatprep.subr.mxu0 0.0
        %1709 = vmatpush1.msra.mxu0 0.0
        %1710 = vmatprep.subr.mxu0 0.0
        %1711 = vmatpush1.msra.mxu0 %v1678
        %1712 = vmatprep.subr.mxu0 0.0
        %1713 = vmatpush2.msra.mxu0 0.0
        %1714 = vmatprep.subr.mxu0 0.0
        %1715 = vmatpush2.msra.mxu0 0.0
        %1716 = vmatprep.subr.mxu0 0.0
        %1717 = vmatpush2.msra.mxu0 0.0
        %1718 = vmatprep.subr.mxu0 0.0
        %1719 = vmatpush2.msra.mxu0 0.0
        %1720 = vmatprep.subr.mxu0 0.0
        %1721 = vmatpush2.msra.mxu0 0.0
        %1722 = vmatprep.subr.mxu0 0.0
        %1723 = vmatpush2.msra.mxu0 0.0
        %1724 = vmatprep.subr.mxu0 0.0
        %1725 = vmatpush2.msra.mxu0 0.0
        %1726 = vmatprep.subr.mxu0 0.0
        %1727 = vmatpush2.msra.mxu0 0.0
        %1728 = vmatprep.subr.mxu0 0.0
        %1729 = vmatpush2.msra.mxu0 0.0
        %1730 = vmatprep.subr.mxu0 0.0
        %1731 = vmatpush2.msra.mxu0 0.0
        %1732 = vmatprep.subr.mxu0 0.0
        %1733 = vmatpush2.msra.mxu0 0.0
        %1734 = vmatprep.subr.mxu0 0.0
        %1735 = vmatpush2.msra.mxu0 0.0
        %1736 = vmatprep.subr.mxu0 0.0
        %1737 = vmatpush2.msra.mxu0 0.0
        %1738 = vmatprep.subr.mxu0 0.0
        %1739 = vmatpush2.msra.mxu0 0.0
        %1740 = vmatprep.subr.mxu0 0.0
        %1741 = vmatpush2.msra.mxu0 0.0
        %1742 = vmatprep.subr.mxu0 0.0
        %1743 = vmatpush2.msra.mxu0 0.0
        %1744 = vmatprep.mubr.f32.mxu0 0.0
        %1745 = vmatmul.mubr.f32.gmra.mxu0 %v1672
        %v1746 = vpop.f32.mrf.mxu0
        %v1747 = vadd.f32 0.0, %v1746
        %v1748 = vpop.f32.mrf.mxu0
        %1749 = vmatprep.mubr.f32.mxu0 0.0
        %1750 = vmatmul.mubr.f32.gmra.mxu0 %v1675
        %v1751 = vpop.f32.mrf.mxu0
        %v1752 = vadd.f32 0.0, %v1751
        %v1753 = vpop.f32.mrf.mxu0
        %1754 = vdwg.mxu0
        %v1755 = vadd.f32 %v1665, %v1747
        %v1756 = vadd.f32 %v1666, %v1752
        %v1757 = vld [vmem:[%s1015] sm:$0x1]
        %v1759 = vlaneseq
        %v1760 = vshrl.u32 %v1759, 7
        %v1761 = vsub.s32 0, %v1760
        %v1762 = vrot.slane %v1757, %v1761
        %v1764 = vadd.f32 %v1755, %v1762
        %v1765 = vadd.f32 %v1756, %v1762
        %v1766 = vsub.f32 0.0, %v1764
        %v1767 = vsub.f32 0.0, %v1765
        %v1768 = vmul.f32 %v1766, 1.442695
        %v1769 = vpow.pop %v1768
        %v1770 = vmul.f32 %v1767, 1.442695
        %v1771 = vpow.pop %v1770
        %v1772 = vadd.f32 %v1769, 1.0
        %v1773 = vadd.f32 %v1771, 1.0
        %v1774 = vrcp.pop %v1772
        %v1775 = vrcp.pop %v1773
        %v1776 = vmul.f32 %v1764, %v1774
        %v1777 = vmul.f32 %v1765, %v1775
        %v1778 = vld [vmem:[%s1241] sm:$0xff]
        %v1779 = vld [vmem:[%s1241 + $0x8] sm:$0xff]
        %v1780 = vld [vmem:[%s1241 + $0x10] sm:$0xff]
        %v1781 = vld [vmem:[%s1241 + $0x18] sm:$0xff]
        %v1782 = vld [vmem:[%s1023] sm:$0x1]
        %v1784 = vlaneseq
        %v1785 = vshrl.u32 %v1784, 7
        %v1786 = vsub.s32 0, %v1785
        %v1787 = vrot.slane %v1782, %v1786
        %vm1789 = vcmask 261120
        %v1791 = vsel %vm1789, %v1776, 0
        %v1794 = vsel %vm1789, %v1777, 0
        %1796 = vmatprep.subr.mxu0 0.0
        %1797 = vmatpush1.msra.mxu0 0.0
        %1798 = vmatprep.subr.mxu0 0.0
        %1799 = vmatpush1.msra.mxu0 0.0
        %1800 = vmatprep.subr.mxu0 0.0
        %1801 = vmatpush1.msra.mxu0 0.0
        %1802 = vmatprep.subr.mxu0 0.0
        %1803 = vmatpush1.msra.mxu0 0.0
        %1804 = vmatprep.subr.mxu0 0.0
        %1805 = vmatpush1.msra.mxu0 0.0
        %1806 = vmatprep.subr.mxu0 0.0
        %1807 = vmatpush1.msra.mxu0 0.0
        %1808 = vmatprep.subr.mxu0 0.0
        %1809 = vmatpush1.msra.mxu0 0.0
        %1810 = vmatprep.subr.mxu0 0.0
        %1811 = vmatpush1.msra.mxu0 0.0
        %1812 = vmatprep.subr.mxu0 0.0
        %1813 = vmatpush1.msra.mxu0 0.0
        %1814 = vmatprep.subr.mxu0 0.0
        %1815 = vmatpush1.msra.mxu0 0.0
        %1816 = vmatprep.subr.mxu0 0.0
        %1817 = vmatpush1.msra.mxu0 0.0
        %1818 = vmatprep.subr.mxu0 0.0
        %1819 = vmatpush1.msra.mxu0 0.0
        %1820 = vmatprep.subr.mxu0 0.0
        %1821 = vmatpush1.msra.mxu0 %v1781
        %1822 = vmatprep.subr.mxu0 0.0
        %1823 = vmatpush1.msra.mxu0 %v1780
        %1824 = vmatprep.subr.mxu0 0.0
        %1825 = vmatpush1.msra.mxu0 %v1779
        %1826 = vmatprep.subr.mxu0 0.0
        %1827 = vmatpush1.msra.mxu0 %v1778
        %1828 = vmatprep.subr.mxu0 0.0
        %1829 = vmatpush2.msra.mxu0 0.0
        %1830 = vmatprep.subr.mxu0 0.0
        %1831 = vmatpush2.msra.mxu0 0.0
        %1832 = vmatprep.subr.mxu0 0.0
        %1833 = vmatpush2.msra.mxu0 0.0
        %1834 = vmatprep.subr.mxu0 0.0
        %1835 = vmatpush2.msra.mxu0 0.0
        %1836 = vmatprep.subr.mxu0 0.0
        %1837 = vmatpush2.msra.mxu0 0.0
        %1838 = vmatprep.subr.mxu0 0.0
        %1839 = vmatpush2.msra.mxu0 0.0
        %1840 = vmatprep.subr.mxu0 0.0
        %1841 = vmatpush2.msra.mxu0 0.0
        %1842 = vmatprep.subr.mxu0 0.0
        %1843 = vmatpush2.msra.mxu0 0.0
        %1844 = vmatprep.subr.mxu0 0.0
        %1845 = vmatpush2.msra.mxu0 0.0
        %1846 = vmatprep.subr.mxu0 0.0
        %1847 = vmatpush2.msra.mxu0 0.0
        %1848 = vmatprep.subr.mxu0 0.0
        %1849 = vmatpush2.msra.mxu0 0.0
        %1850 = vmatprep.subr.mxu0 0.0
        %1851 = vmatpush2.msra.mxu0 0.0
        %1852 = vmatprep.subr.mxu0 0.0
        %1853 = vmatpush2.msra.mxu0 0.0
        %1854 = vmatprep.subr.mxu0 0.0
        %1855 = vmatpush2.msra.mxu0 0.0
        %1856 = vmatprep.subr.mxu0 0.0
        %1857 = vmatpush2.msra.mxu0 0.0
        %1858 = vmatprep.subr.mxu0 0.0
        %1859 = vmatpush2.msra.mxu0 0.0
        %1860 = vmatprep.mubr.f32.mxu0 0.0
        %1861 = vmatmul.mubr.f32.gmra.mxu0 %v1791
        %v1862 = vpop.f32.mrf.mxu0
        %v1863 = vadd.f32 %v1787, %v1862
        %v1864 = vpop.f32.mrf.mxu0
        %1865 = vmatprep.mubr.f32.mxu0 0.0
        %1866 = vmatmul.mubr.f32.gmra.mxu0 %v1794
        %v1867 = vpop.f32.mrf.mxu0
        %v1868 = vadd.f32 %v1787, %v1867
        %v1869 = vpop.f32.mrf.mxu0
        %1870 = vdwg.mxu0
        %v1871 = vsub.f32 0.0, %v1863
        %v1872 = vsub.f32 0.0, %v1868
        %v1873 = vmul.f32 %v1871, 1.442695
        %v1874 = vpow.pop %v1873
        %v1875 = vmul.f32 %v1872, 1.442695
        %v1876 = vpow.pop %v1875
        %v1877 = vadd.f32 %v1874, 1.0
        %v1878 = vadd.f32 %v1876, 1.0
        %v1879 = vrcp.pop %v1877
        %v1880 = vrcp.pop %v1878
        %v1881 = vmul.f32 %v1863, %v1879
        %v1882 = vmul.f32 %v1868, %v1880
        %v1883 = vld [vmem:[%s1246] sm:$0xff]
        %v1884 = vld [vmem:[%s1246 + $0x8] sm:$0xff]
        %v1885 = vld [vmem:[%s1246 + $0x10] sm:$0xff]
        %v1886 = vld [vmem:[%s1246 + $0x18] sm:$0xff]
        %v1887 = vld [vmem:[%s1031] sm:$0x1]
        %v1889 = vlaneseq
        %v1890 = vshrl.u32 %v1889, 7
        %v1891 = vsub.s32 0, %v1890
        %v1892 = vrot.slane %v1887, %v1891
        %v1895 = vsel %vm1789, %v1881, 0
        %v1898 = vsel %vm1789, %v1882, 0
        %1900 = vmatprep.subr.mxu0 0.0
        %1901 = vmatpush1.msra.mxu0 0.0
        %1902 = vmatprep.subr.mxu0 0.0
        %1903 = vmatpush1.msra.mxu0 0.0
        %1904 = vmatprep.subr.mxu0 0.0
        %1905 = vmatpush1.msra.mxu0 0.0
        %1906 = vmatprep.subr.mxu0 0.0
        %1907 = vmatpush1.msra.mxu0 0.0
        %1908 = vmatprep.subr.mxu0 0.0
        %1909 = vmatpush1.msra.mxu0 0.0
        %1910 = vmatprep.subr.mxu0 0.0
        %1911 = vmatpush1.msra.mxu0 0.0
        %1912 = vmatprep.subr.mxu0 0.0
        %1913 = vmatpush1.msra.mxu0 0.0
        %1914 = vmatprep.subr.mxu0 0.0
        %1915 = vmatpush1.msra.mxu0 0.0
        %1916 = vmatprep.subr.mxu0 0.0
        %1917 = vmatpush1.msra.mxu0 0.0
        %1918 = vmatprep.subr.mxu0 0.0
        %1919 = vmatpush1.msra.mxu0 0.0
        %1920 = vmatprep.subr.mxu0 0.0
        %1921 = vmatpush1.msra.mxu0 0.0
        %1922 = vmatprep.subr.mxu0 0.0
        %1923 = vmatpush1.msra.mxu0 0.0
        %1924 = vmatprep.subr.mxu0 0.0
        %1925 = vmatpush1.msra.mxu0 %v1886
        %1926 = vmatprep.subr.mxu0 0.0
        %1927 = vmatpush1.msra.mxu0 %v1885
        %1928 = vmatprep.subr.mxu0 0.0
        %1929 = vmatpush1.msra.mxu0 %v1884
        %1930 = vmatprep.subr.mxu0 0.0
        %1931 = vmatpush1.msra.mxu0 %v1883
        %1932 = vmatprep.subr.mxu0 0.0
        %1933 = vmatpush2.msra.mxu0 0.0
        %1934 = vmatprep.subr.mxu0 0.0
        %1935 = vmatpush2.msra.mxu0 0.0
        %1936 = vmatprep.subr.mxu0 0.0
        %1937 = vmatpush2.msra.mxu0 0.0
        %1938 = vmatprep.subr.mxu0 0.0
        %1939 = vmatpush2.msra.mxu0 0.0
        %1940 = vmatprep.subr.mxu0 0.0
        %1941 = vmatpush2.msra.mxu0 0.0
        %1942 = vmatprep.subr.mxu0 0.0
        %1943 = vmatpush2.msra.mxu0 0.0
        %1944 = vmatprep.subr.mxu0 0.0
        %1945 = vmatpush2.msra.mxu0 0.0
        %1946 = vmatprep.subr.mxu0 0.0
        %1947 = vmatpush2.msra.mxu0 0.0
        %1948 = vmatprep.subr.mxu0 0.0
        %1949 = vmatpush2.msra.mxu0 0.0
        %1950 = vmatprep.subr.mxu0 0.0
        %1951 = vmatpush2.msra.mxu0 0.0
        %1952 = vmatprep.subr.mxu0 0.0
        %1953 = vmatpush2.msra.mxu0 0.0
        %1954 = vmatprep.subr.mxu0 0.0
        %1955 = vmatpush2.msra.mxu0 0.0
        %1956 = vmatprep.subr.mxu0 0.0
        %1957 = vmatpush2.msra.mxu0 0.0
        %1958 = vmatprep.subr.mxu0 0.0
        %1959 = vmatpush2.msra.mxu0 0.0
        %1960 = vmatprep.subr.mxu0 0.0
        %1961 = vmatpush2.msra.mxu0 0.0
        %1962 = vmatprep.subr.mxu0 0.0
        %1963 = vmatpush2.msra.mxu0 0.0
        %1964 = vmatprep.mubr.f32.mxu0 0.0
        %1965 = vmatmul.mubr.f32.gmra.mxu0 %v1895
        %v1966 = vpop.f32.mrf.mxu0
        %v1967 = vadd.f32 %v1892, %v1966
        %v1968 = vpop.f32.mrf.mxu0
        %1969 = vmatprep.mubr.f32.mxu0 0.0
        %1970 = vmatmul.mubr.f32.gmra.mxu0 %v1898
        %v1971 = vpop.f32.mrf.mxu0
        %v1972 = vadd.f32 %v1892, %v1971
        %v1973 = vpop.f32.mrf.mxu0
        %1974 = vdwg.mxu0
        %v1975 = vsub.f32 0.0, %v1967
        %v1976 = vsub.f32 0.0, %v1972
        %v1977 = vmul.f32 %v1975, 1.442695
        %v1978 = vpow.pop %v1977
        %v1979 = vmul.f32 %v1976, 1.442695
        %v1980 = vpow.pop %v1979
        %v1981 = vadd.f32 %v1978, 1.0
        %v1982 = vadd.f32 %v1980, 1.0
        %v1983 = vrcp.pop %v1981
        %v1984 = vrcp.pop %v1982
        %v1985 = vmul.f32 %v1967, %v1983
        %v1986 = vmul.f32 %v1972, %v1984
        %v1987 = vld [vmem:[%s1251] sm:$0xff]
        %v1988 = vld [vmem:[%s1251 + $0x8] sm:$0xff]
        %v1989 = vld [vmem:[%s1251 + $0x10] sm:$0xff]
        %v1990 = vld [vmem:[%s1251 + $0x18] sm:$0xff]
        %v1991 = vld [vmem:[%s1254] sm:$0x1]
        %v1993 = vlaneseq
        %v1994 = vshrl.u32 %v1993, 7
        %v1995 = vsub.s32 0, %v1994
        %v1996 = vrot.slane %v1991, %v1995
        %v1999 = vsel %vm1789, %v1985, 0
        %v2002 = vsel %vm1789, %v1986, 0
        %2004 = vmatprep.subr.mxu0 0.0
        %2005 = vmatpush1.msra.mxu0 0.0
        %2006 = vmatprep.subr.mxu0 0.0
        %2007 = vmatpush1.msra.mxu0 0.0
        %2008 = vmatprep.subr.mxu0 0.0
        %2009 = vmatpush1.msra.mxu0 0.0
        %2010 = vmatprep.subr.mxu0 0.0
        %2011 = vmatpush1.msra.mxu0 0.0
        %2012 = vmatprep.subr.mxu0 0.0
        %2013 = vmatpush1.msra.mxu0 0.0
        %2014 = vmatprep.subr.mxu0 0.0
        %2015 = vmatpush1.msra.mxu0 0.0
        %2016 = vmatprep.subr.mxu0 0.0
        %2017 = vmatpush1.msra.mxu0 0.0
        %2018 = vmatprep.subr.mxu0 0.0
        %2019 = vmatpush1.msra.mxu0 0.0
        %2020 = vmatprep.subr.mxu0 0.0
        %2021 = vmatpush1.msra.mxu0 0.0
        %2022 = vmatprep.subr.mxu0 0.0
        %2023 = vmatpush1.msra.mxu0 0.0
        %2024 = vmatprep.subr.mxu0 0.0
        %2025 = vmatpush1.msra.mxu0 0.0
        %2026 = vmatprep.subr.mxu0 0.0
        %2027 = vmatpush1.msra.mxu0 0.0
        %2028 = vmatprep.subr.mxu0 0.0
        %2029 = vmatpush1.msra.mxu0 %v1990
        %2030 = vmatprep.subr.mxu0 0.0
        %2031 = vmatpush1.msra.mxu0 %v1989
        %2032 = vmatprep.subr.mxu0 0.0
        %2033 = vmatpush1.msra.mxu0 %v1988
        %2034 = vmatprep.subr.mxu0 0.0
        %2035 = vmatpush1.msra.mxu0 %v1987
        %2036 = vmatprep.subr.mxu0 0.0
        %2037 = vmatpush2.msra.mxu0 0.0
        %2038 = vmatprep.subr.mxu0 0.0
        %2039 = vmatpush2.msra.mxu0 0.0
        %2040 = vmatprep.subr.mxu0 0.0
        %2041 = vmatpush2.msra.mxu0 0.0
        %2042 = vmatprep.subr.mxu0 0.0
        %2043 = vmatpush2.msra.mxu0 0.0
        %2044 = vmatprep.subr.mxu0 0.0
        %2045 = vmatpush2.msra.mxu0 0.0
        %2046 = vmatprep.subr.mxu0 0.0
        %2047 = vmatpush2.msra.mxu0 0.0
        %2048 = vmatprep.subr.mxu0 0.0
        %2049 = vmatpush2.msra.mxu0 0.0
        %2050 = vmatprep.subr.mxu0 0.0
        %2051 = vmatpush2.msra.mxu0 0.0
        %2052 = vmatprep.subr.mxu0 0.0
        %2053 = vmatpush2.msra.mxu0 0.0
        %2054 = vmatprep.subr.mxu0 0.0
        %2055 = vmatpush2.msra.mxu0 0.0
        %2056 = vmatprep.subr.mxu0 0.0
        %2057 = vmatpush2.msra.mxu0 0.0
        %2058 = vmatprep.subr.mxu0 0.0
        %2059 = vmatpush2.msra.mxu0 0.0
        %2060 = vmatprep.subr.mxu0 0.0
        %2061 = vmatpush2.msra.mxu0 0.0
        %2062 = vmatprep.subr.mxu0 0.0
        %2063 = vmatpush2.msra.mxu0 0.0
        %2064 = vmatprep.subr.mxu0 0.0
        %2065 = vmatpush2.msra.mxu0 0.0
        %2066 = vmatprep.subr.mxu0 0.0
        %2067 = vmatpush2.msra.mxu0 0.0
        %2068 = vmatprep.mubr.f32.mxu0 0.0
        %2069 = vmatmul.mubr.f32.gmra.mxu0 %v1999
        %v2070 = vpop.f32.mrf.mxu0
        %v2071 = vadd.f32 %v1996, %v2070
        %v2072 = vpop.f32.mrf.mxu0
        %2073 = vmatprep.mubr.f32.mxu0 0.0
        %2074 = vmatmul.mubr.f32.gmra.mxu0 %v2002
        %v2075 = vpop.f32.mrf.mxu0
        %v2076 = vadd.f32 %v1996, %v2075
        %v2077 = vpop.f32.mrf.mxu0
        %2078 = vdwg.mxu0
        %2080 = vset.pattern.permute.xlu0 0
        %2081 = vperm.xlu0 %2080, %v2071
        %v2082 = vpop.permute.xlu0 %2081
        %2085 = vset.pattern.permute.xlu0 0
        %2086 = vperm.xlu0 %2085, %v2076
        %v2087 = vpop.permute.xlu0 %2086
        %v2089 = vmul.f32 %v1627, %v2082
        %v2090 = vmul.f32 %v1628, %v2087
        %v2091 = vld [vmem:[%s1225] sm:$0xff]
        %v2092 = vld [vmem:[%s1225 + $0x8] sm:$0xff]
        %2093 = vrot.lane.b32.xlu0 %v1881, 3
        %v2094 = vpop.permute.xlu0 %2093
        %2095 = vrot.lane.b32.xlu0 %v1882, 3
        %v2096 = vpop.permute.xlu0 %2095
        %v2099 = vsel %vm1631, %v2089, %v2094
        %v2100 = vsel %vm1631, %v2090, %v2096
        %vm2101 = vcmask 285696
        %v2102 = vsel %vm2101, %v2099, 1.0
        %v2103 = vsel %vm2101, %v2100, 1.0
        %2105 = vset.pattern.permute.xlu0 0
        %2106 = vperm.xlu0 %2105, %v2091
        %v2107 = vpop.permute.xlu0 %2106
        %2110 = vset.pattern.permute.xlu0 0
        %2111 = vperm.xlu0 %2110, %v2092
        %v2112 = vpop.permute.xlu0 %2111
        %v2114 = vmul.f32 %v2102, %v2107
        %v2115 = vmul.f32 %v2103, %v2112
        %v2116 = vld [vmem:[#allocation5] sm:$0xff]
        %v2117 = vpack.c.bf16 %v2115, %v2114
        %2118 = vxpose.xlu0.c.b16.start [1/8] %v1564, 128
        %2119 = vxpose.xlu0.c.b16.cont [2/8] 0, 128
        %2120 = vxpose.xlu0.c.b16.cont [3/8] 0, 128
        %2121 = vxpose.xlu0.c.b16.cont [4/8] 0, 128
        %2122 = vxpose.xlu0.c.b16.cont [5/8] 0, 128
        %2123 = vxpose.xlu0.c.b16.cont [6/8] 0, 128
        %2124 = vxpose.xlu0.c.b16.cont [7/8] 0, 128
        %2125 = vxpose.xlu0.c.b16.end [8/8] 0, 128
        %v2126 = vpop.trf.xlu0
        %v2127 = vpop.trf.xlu0
        %v2128 = vpop.trf.xlu0
        %v2129 = vpop.trf.xlu0
        %v2130 = vpop.trf.xlu0
        %v2131 = vpop.trf.xlu0
        %v2132 = vpop.trf.xlu0
        %v2133 = vpop.trf.xlu0
        %vm2134 = vcmask 130048
        %v2136 = vsel %vm2134, %v2126, 0
        %2138 = vmatprep.subr.bf16.mxu0 0
        %2139 = vmatpush1.bf16.msra.mxu0 0
        %2140 = vmatprep.subr.bf16.mxu0 0
        %2141 = vmatpush1.bf16.msra.mxu0 0
        %2142 = vmatprep.subr.bf16.mxu0 0
        %2143 = vmatpush1.bf16.msra.mxu0 0
        %2144 = vmatprep.subr.bf16.mxu0 0
        %2145 = vmatpush1.bf16.msra.mxu0 0
        %2146 = vmatprep.subr.bf16.mxu0 0
        %2147 = vmatpush1.bf16.msra.mxu0 0
        %2148 = vmatprep.subr.bf16.mxu0 0
        %2149 = vmatpush1.bf16.msra.mxu0 0
        %2150 = vmatprep.subr.bf16.mxu0 0
        %2151 = vmatpush1.bf16.msra.mxu0 0
        %2152 = vmatprep.subr.bf16.mxu0 0
        %2153 = vmatpush1.bf16.msra.mxu0 %v2117
        %2154 = vmatprep.subr.bf16.mxu0 0
        %2155 = vmatpush2.bf16.msra.mxu0 0
        %2156 = vmatprep.subr.bf16.mxu0 0
        %2157 = vmatpush2.bf16.msra.mxu0 0
        %2158 = vmatprep.subr.bf16.mxu0 0
        %2159 = vmatpush2.bf16.msra.mxu0 0
        %2160 = vmatprep.subr.bf16.mxu0 0
        %2161 = vmatpush2.bf16.msra.mxu0 0
        %2162 = vmatprep.subr.bf16.mxu0 0
        %2163 = vmatpush2.bf16.msra.mxu0 0
        %2164 = vmatprep.subr.bf16.mxu0 0
        %2165 = vmatpush2.bf16.msra.mxu0 0
        %2166 = vmatprep.subr.bf16.mxu0 0
        %2167 = vmatpush2.bf16.msra.mxu0 0
        %2168 = vmatprep.subr.bf16.mxu0 0
        %2169 = vmatpush2.bf16.msra.mxu0 0
        %2170 = vmatprep.mubr.bf16.mxu0 0
        %2171 = vmatmul.mubr.bf16.gmra.mxu0 %v2136
        %v2172 = vpop.f32.mrf.mxu0
        %v2173 = vadd.f32 0.0, %v2172
        %v2174 = vpop.f32.mrf.mxu0
        %v2175 = vpop.f32.mrf.mxu0
        %v2176 = vpop.f32.mrf.mxu0
        %2177 = vdwg.mxu0
        %v2178 = vadd.f32 %v2116, %v2173
        %vm2179 = vcmask 293888
        %2180 = vst.msk [vmem:[#allocation5] sm:$0xff] %vm2179, %v2178
        %p2181 = scmp.eq.s32.totalorder %s55, 3
        // Predicated region
        $region169: #{tpu_custom_call.1} parent=115 // pred_check
          %p2182 = pneg %p2181
        $region170: #{tpu_custom_call.1} parent=115 // pred_check_branch
          %2184 = sbr.rel (%p2182) target = $region172
        $region171: #{tpu_custom_call.1} parent=115 // pred_region
          %v2185 = vld [vmem:[#allocation5] sm:$0xff]
          %v2186 = vmax.f32 %v2185, 1.0
          %2188 = vset.pattern.permute.xlu0 35
          %2189 = vperm.xlu0 %2188, %v2186
          %v2190 = vpop.permute.xlu0 %2189
          %v2192 = vrcp.pop %v2190
          %v2193 = vmul.f32 %v2185, %v2192
          %v2194 = vmax.f32 %v2193, -100.0
          %v2195 = vmin.f32 %v2194, 100.0
          %v2196 = vld [vmem:[#allocation2] sm:$0xff]
          %v2197 = vadd.f32 %v2196, %v2195
          %2198 = vst.msk [vmem:[#allocation2] sm:$0xff] %vm1631, %v2197
          %v2199 = vld [vmem:[#allocation3] sm:$0xff]
          %v2200 = vld [vmem:[%s1259] sm:$0xff]
          %v2201 = vld [vmem:[%s1259 + $0x8] sm:$0xff]
          %v2202 = vld [vmem:[%s1259 + $0x10] sm:$0xff]
          %v2203 = vld [vmem:[%s1259 + $0x18] sm:$0xff]
          %v2204 = vld [vmem:[%s1040] sm:$0xff]
          %v2205 = vld [vmem:[%s1040 + $0x8] sm:$0xff]
          %v2206 = vld [vmem:[%s1040 + $0x10] sm:$0xff]
          %v2207 = vld [vmem:[%s1040 + $0x18] sm:$0xff]
          %2209 = vrot.lane.b32.xlu0 %v2185, 125
          %v2210 = vpop.permute.xlu0 %2209
          %v2211 = vsel %vm1789, %v2210, 0
          %2213 = vmatprep.subr.mxu0 0.0
          %2214 = vmatpush1.msra.mxu0 0.0
          %2215 = vmatprep.subr.mxu0 0.0
          %2216 = vmatpush1.msra.mxu0 0.0
          %2217 = vmatprep.subr.mxu0 0.0
          %2218 = vmatpush1.msra.mxu0 0.0
          %2219 = vmatprep.subr.mxu0 0.0
          %2220 = vmatpush1.msra.mxu0 0.0
          %2221 = vmatprep.subr.mxu0 0.0
          %2222 = vmatpush1.msra.mxu0 0.0
          %2223 = vmatprep.subr.mxu0 0.0
          %2224 = vmatpush1.msra.mxu0 0.0
          %2225 = vmatprep.subr.mxu0 0.0
          %2226 = vmatpush1.msra.mxu0 0.0
          %2227 = vmatprep.subr.mxu0 0.0
          %2228 = vmatpush1.msra.mxu0 0.0
          %2229 = vmatprep.subr.mxu0 0.0
          %2230 = vmatpush1.msra.mxu0 0.0
          %2231 = vmatprep.subr.mxu0 0.0
          %2232 = vmatpush1.msra.mxu0 0.0
          %2233 = vmatprep.subr.mxu0 0.0
          %2234 = vmatpush1.msra.mxu0 0.0
          %2235 = vmatprep.subr.mxu0 0.0
          %2236 = vmatpush1.msra.mxu0 0.0
          %2237 = vmatprep.subr.mxu0 0.0
          %2238 = vmatpush1.msra.mxu0 %v2207
          %2239 = vmatprep.subr.mxu0 0.0
          %2240 = vmatpush1.msra.mxu0 %v2206
          %2241 = vmatprep.subr.mxu0 0.0
          %2242 = vmatpush1.msra.mxu0 %v2205
          %2243 = vmatprep.subr.mxu0 0.0
          %2244 = vmatpush1.msra.mxu0 %v2204
          %2245 = vmatprep.subr.mxu0 0.0
          %2246 = vmatpush2.msra.mxu0 0.0
          %2247 = vmatprep.subr.mxu0 0.0
          %2248 = vmatpush2.msra.mxu0 0.0
          %2249 = vmatprep.subr.mxu0 0.0
          %2250 = vmatpush2.msra.mxu0 0.0
          %2251 = vmatprep.subr.mxu0 0.0
          %2252 = vmatpush2.msra.mxu0 0.0
          %2253 = vmatprep.subr.mxu0 0.0
          %2254 = vmatpush2.msra.mxu0 0.0
          %2255 = vmatprep.subr.mxu0 0.0
          %2256 = vmatpush2.msra.mxu0 0.0
          %2257 = vmatprep.subr.mxu0 0.0
          %2258 = vmatpush2.msra.mxu0 0.0
          %2259 = vmatprep.subr.mxu0 0.0
          %2260 = vmatpush2.msra.mxu0 0.0
          %2261 = vmatprep.subr.mxu0 0.0
          %2262 = vmatpush2.msra.mxu0 0.0
          %2263 = vmatprep.subr.mxu0 0.0
          %2264 = vmatpush2.msra.mxu0 0.0
          %2265 = vmatprep.subr.mxu0 0.0
          %2266 = vmatpush2.msra.mxu0 0.0
          %2267 = vmatprep.subr.mxu0 0.0
          %2268 = vmatpush2.msra.mxu0 0.0
          %2269 = vmatprep.subr.mxu0 0.0
          %2270 = vmatpush2.msra.mxu0 0.0
          %2271 = vmatprep.subr.mxu0 0.0
          %2272 = vmatpush2.msra.mxu0 0.0
          %2273 = vmatprep.subr.mxu0 0.0
          %2274 = vmatpush2.msra.mxu0 0.0
          %2275 = vmatprep.subr.mxu0 0.0
          %2276 = vmatpush2.msra.mxu0 0.0
          %2277 = vmatprep.mubr.f32.mxu0 0.0
          %2278 = vmatmul.mubr.f32.gmra.mxu0 %v2211
          %v2279 = vpop.f32.mrf.mxu0
          %v2280 = vadd.f32 0.0, %v2279
          %v2281 = vpop.f32.mrf.mxu0
          %2282 = vdwg.mxu0
          %v2284 = vsel %vm1789, %v2199, 0
          %2286 = vmatprep.subr.mxu0 0.0
          %2287 = vmatpush1.msra.mxu0 0.0
          %2288 = vmatprep.subr.mxu0 0.0
          %2289 = vmatpush1.msra.mxu0 0.0
          %2290 = vmatprep.subr.mxu0 0.0
          %2291 = vmatpush1.msra.mxu0 0.0
          %2292 = vmatprep.subr.mxu0 0.0
          %2293 = vmatpush1.msra.mxu0 0.0
          %2294 = vmatprep.subr.mxu0 0.0
          %2295 = vmatpush1.msra.mxu0 0.0
          %2296 = vmatprep.subr.mxu0 0.0
          %2297 = vmatpush1.msra.mxu0 0.0
          %2298 = vmatprep.subr.mxu0 0.0
          %2299 = vmatpush1.msra.mxu0 0.0
          %2300 = vmatprep.subr.mxu0 0.0
          %2301 = vmatpush1.msra.mxu0 0.0
          %2302 = vmatprep.subr.mxu0 0.0
          %2303 = vmatpush1.msra.mxu0 0.0
          %2304 = vmatprep.subr.mxu0 0.0
          %2305 = vmatpush1.msra.mxu0 0.0
          %2306 = vmatprep.subr.mxu0 0.0
          %2307 = vmatpush1.msra.mxu0 0.0
          %2308 = vmatprep.subr.mxu0 0.0
          %2309 = vmatpush1.msra.mxu0 0.0
          %2310 = vmatprep.subr.mxu0 0.0
          %2311 = vmatpush1.msra.mxu0 %v2203
          %2312 = vmatprep.subr.mxu0 0.0
          %2313 = vmatpush1.msra.mxu0 %v2202
          %2314 = vmatprep.subr.mxu0 0.0
          %2315 = vmatpush1.msra.mxu0 %v2201
          %2316 = vmatprep.subr.mxu0 0.0
          %2317 = vmatpush1.msra.mxu0 %v2200
          %2318 = vmatprep.subr.mxu0 0.0
          %2319 = vmatpush2.msra.mxu0 0.0
          %2320 = vmatprep.subr.mxu0 0.0
          %2321 = vmatpush2.msra.mxu0 0.0
          %2322 = vmatprep.subr.mxu0 0.0
          %2323 = vmatpush2.msra.mxu0 0.0
          %2324 = vmatprep.subr.mxu0 0.0
          %2325 = vmatpush2.msra.mxu0 0.0
          %2326 = vmatprep.subr.mxu0 0.0
          %2327 = vmatpush2.msra.mxu0 0.0
          %2328 = vmatprep.subr.mxu0 0.0
          %2329 = vmatpush2.msra.mxu0 0.0
          %2330 = vmatprep.subr.mxu0 0.0
          %2331 = vmatpush2.msra.mxu0 0.0
          %2332 = vmatprep.subr.mxu0 0.0
          %2333 = vmatpush2.msra.mxu0 0.0
          %2334 = vmatprep.subr.mxu0 0.0
          %2335 = vmatpush2.msra.mxu0 0.0
          %2336 = vmatprep.subr.mxu0 0.0
          %2337 = vmatpush2.msra.mxu0 0.0
          %2338 = vmatprep.subr.mxu0 0.0
          %2339 = vmatpush2.msra.mxu0 0.0
          %2340 = vmatprep.subr.mxu0 0.0
          %2341 = vmatpush2.msra.mxu0 0.0
          %2342 = vmatprep.subr.mxu0 0.0
          %2343 = vmatpush2.msra.mxu0 0.0
          %2344 = vmatprep.subr.mxu0 0.0
          %2345 = vmatpush2.msra.mxu0 0.0
          %2346 = vmatprep.subr.mxu0 0.0
          %2347 = vmatpush2.msra.mxu0 0.0
          %2348 = vmatprep.subr.mxu0 0.0
          %2349 = vmatpush2.msra.mxu0 0.0
          %2350 = vmatprep.mubr.f32.mxu0 0.0
          %2351 = vmatmul.mubr.f32.gmra.mxu0 %v2284
          %v2352 = vpop.f32.mrf.mxu0
          %v2353 = vadd.f32 %v2280, %v2352
          %v2354 = vpop.f32.mrf.mxu0
          %2355 = vdwg.mxu0
          %v2356 = vld [vmem:[%s1048] sm:$0x1]
          %v2358 = vlaneseq
          %v2359 = vshrl.u32 %v2358, 7
          %v2360 = vsub.s32 0, %v2359
          %v2361 = vrot.slane %v2356, %v2360
          %v2363 = vadd.f32 %v2353, %v2361
          %v2364 = vsub.f32 0.0, %v2363
          %v2365 = vmul.f32 %v2364, 1.442695
          %v2366 = vpow.pop %v2365
          %v2367 = vadd.f32 %v2366, 1.0
          %v2368 = vrcp.pop %v2367
          %v2369 = vmul.f32 %v2363, %v2368
          %v2370 = vld [vmem:[%s1264] sm:$0xff]
          %v2371 = vld [vmem:[%s1264 + $0x8] sm:$0xff]
          %v2372 = vld [vmem:[%s1264 + $0x10] sm:$0xff]
          %v2373 = vld [vmem:[%s1264 + $0x18] sm:$0xff]
          %v2374 = vld [vmem:[%s1056] sm:$0x1]
          %v2376 = vlaneseq
          %v2377 = vshrl.u32 %v2376, 7
          %v2378 = vsub.s32 0, %v2377
          %v2379 = vrot.slane %v2374, %v2378
          %v2382 = vsel %vm1789, %v2369, 0
          %2384 = vmatprep.subr.mxu0 0.0
          %2385 = vmatpush1.msra.mxu0 0.0
          %2386 = vmatprep.subr.mxu0 0.0
          %2387 = vmatpush1.msra.mxu0 0.0
          %2388 = vmatprep.subr.mxu0 0.0
          %2389 = vmatpush1.msra.mxu0 0.0
          %2390 = vmatprep.subr.mxu0 0.0
          %2391 = vmatpush1.msra.mxu0 0.0
          %2392 = vmatprep.subr.mxu0 0.0
          %2393 = vmatpush1.msra.mxu0 0.0
          %2394 = vmatprep.subr.mxu0 0.0
          %2395 = vmatpush1.msra.mxu0 0.0
          %2396 = vmatprep.subr.mxu0 0.0
          %2397 = vmatpush1.msra.mxu0 0.0
          %2398 = vmatprep.subr.mxu0 0.0
          %2399 = vmatpush1.msra.mxu0 0.0
          %2400 = vmatprep.subr.mxu0 0.0
          %2401 = vmatpush1.msra.mxu0 0.0
          %2402 = vmatprep.subr.mxu0 0.0
          %2403 = vmatpush1.msra.mxu0 0.0
          %2404 = vmatprep.subr.mxu0 0.0
          %2405 = vmatpush1.msra.mxu0 0.0
          %2406 = vmatprep.subr.mxu0 0.0
          %2407 = vmatpush1.msra.mxu0 0.0
          %2408 = vmatprep.subr.mxu0 0.0
          %2409 = vmatpush1.msra.mxu0 %v2373
          %2410 = vmatprep.subr.mxu0 0.0
          %2411 = vmatpush1.msra.mxu0 %v2372
          %2412 = vmatprep.subr.mxu0 0.0
          %2413 = vmatpush1.msra.mxu0 %v2371
          %2414 = vmatprep.subr.mxu0 0.0
          %2415 = vmatpush1.msra.mxu0 %v2370
          %2416 = vmatprep.subr.mxu0 0.0
          %2417 = vmatpush2.msra.mxu0 0.0
          %2418 = vmatprep.subr.mxu0 0.0
          %2419 = vmatpush2.msra.mxu0 0.0
          %2420 = vmatprep.subr.mxu0 0.0
          %2421 = vmatpush2.msra.mxu0 0.0
          %2422 = vmatprep.subr.mxu0 0.0
          %2423 = vmatpush2.msra.mxu0 0.0
          %2424 = vmatprep.subr.mxu0 0.0
          %2425 = vmatpush2.msra.mxu0 0.0
          %2426 = vmatprep.subr.mxu0 0.0
          %2427 = vmatpush2.msra.mxu0 0.0
          %2428 = vmatprep.subr.mxu0 0.0
          %2429 = vmatpush2.msra.mxu0 0.0
          %2430 = vmatprep.subr.mxu0 0.0
          %2431 = vmatpush2.msra.mxu0 0.0
          %2432 = vmatprep.subr.mxu0 0.0
          %2433 = vmatpush2.msra.mxu0 0.0
          %2434 = vmatprep.subr.mxu0 0.0
          %2435 = vmatpush2.msra.mxu0 0.0
          %2436 = vmatprep.subr.mxu0 0.0
          %2437 = vmatpush2.msra.mxu0 0.0
          %2438 = vmatprep.subr.mxu0 0.0
          %2439 = vmatpush2.msra.mxu0 0.0
          %2440 = vmatprep.subr.mxu0 0.0
          %2441 = vmatpush2.msra.mxu0 0.0
          %2442 = vmatprep.subr.mxu0 0.0
          %2443 = vmatpush2.msra.mxu0 0.0
          %2444 = vmatprep.subr.mxu0 0.0
          %2445 = vmatpush2.msra.mxu0 0.0
          %2446 = vmatprep.subr.mxu0 0.0
          %2447 = vmatpush2.msra.mxu0 0.0
          %2448 = vmatprep.mubr.f32.mxu0 0.0
          %2449 = vmatmul.mubr.f32.gmra.mxu0 %v2382
          %v2450 = vpop.f32.mrf.mxu0
          %v2451 = vadd.f32 %v2379, %v2450
          %v2452 = vpop.f32.mrf.mxu0
          %2453 = vdwg.mxu0
          %2454 = vst.msk [vmem:[#allocation3] sm:$0xff] %vm1789, %v2451
        $region172: #{tpu_custom_call.1} parent=115 // pred_fallthru
          _
        %p2455 = scmp.eq.s32.totalorder %s54, 1
        %p2456 = pnand %p2455, %p2181
        %p2457 = pneg %p2456
        // Predicated region
        $region173: #{tpu_custom_call.1} parent=115 // pred_check
          _
        $region174: #{tpu_custom_call.1} parent=115 // pred_check_branch
          %2459 = sbr.rel (%p2456) target = $region176
        $region175: #{tpu_custom_call.1} parent=115 // pred_region
          %v2460 = vld [vmem:[#allocation2] sm:$0xff]
          %v2461 = vld [vmem:[#allocation3] sm:$0xff]
          %2463 = vrot.lane.b32.xlu0 %v2461, 3
          %v2464 = vpop.permute.xlu0 %2463
          %v2466 = vsel %vm1631, %v2460, %v2464
          %v2467 = vsel %vm2101, %v2466, 0.0
          %2468 = vst [vmem:[#allocation24] sm:$0xff] %v2467
        $region176: #{tpu_custom_call.1} parent=115 // pred_fallthru
          _
        // Predicated region
        $region177: #{tpu_custom_call.1} parent=115 // pred_check
          %p2469 = pneg %p679
        $region178: #{tpu_custom_call.1} parent=115 // pred_check_branch
          %2471 = sbr.rel (%p2469) target = $region180
        $region179: #{tpu_custom_call.1} parent=115 // pred_region
          %s2473 = ssub.s32 128, 128
          %2474 = vsyncadd [#allocation8], %s2473
          %s2476 = sshll.u32 [#allocation24], 4
          %s2477 = int_to_ptr.vmem [resolvable:$true] %s2476
          %2479 = dma.vmem_to_hbm [thread:$0]  %s2477, 128, %s24, [#allocation8]
        $region180: #{tpu_custom_call.1} parent=115 // pred_fallthru
          _
        // Predicated region
        $region181: #{tpu_custom_call.1} parent=115 // pred_check
          %p2480 = pneg %p679
        $region182: #{tpu_custom_call.1} parent=115 // pred_check_branch
          %2482 = sbr.rel (%p2480) target = $region184
        $region183: #{tpu_custom_call.1} parent=115 // pred_region
          %2483 = dma.done [#allocation8], 128
        $region184: #{tpu_custom_call.1} parent=115 // pred_fallthru
          _
      $region116: #{tpu_custom_call.1} parent=5 // pred_fallthru
        _
      %p2484 = scmp.le.s32.totalorder 2, %s45
      // Predicated region
      $region185: #{tpu_custom_call.1} parent=5 // pred_check
        %p2485 = pneg %p2484
      $region186: #{tpu_custom_call.1} parent=5 // pred_check_branch
        %2487 = sbr.rel (%p2485) target = $region188
      $region187: #{tpu_custom_call.1} parent=5 // pred_region
        %s2488 = ssub.s32 %s45, 2
      $region188: #{tpu_custom_call.1} parent=5 // pred_fallthru
        _
    $region6: #{tpu_custom_call.1} parent=1 // loop_footer
      %s49 = sadd.s32 1, %s45
    $region7: #{tpu_custom_call.1} parent=1 // loop_footer_branch
      %44 = sbr.rel target = $region3
    $region8: #{tpu_custom_call.1} parent=1 // loop_exit
      _
    %2489 = vsyncpa [#allocation7], 1
    %s2490 = scalar_lea.sflag [#allocation7], 1
    %2491 = vsyncpa %s2490, 1
    %2492 = vsyncpa [#allocation10], 1
    %2493 = vsyncpa [#allocation13], 1
    %s2494 = scalar_lea.sflag [#allocation13], 1
    %2495 = vsyncpa %s2494, 1
    %2496 = vsyncpa [#allocation16], 1
    %s2497 = scalar_lea.sflag [#allocation16], 1
    %2498 = vsyncpa %s2497, 1
    %2499 = vsyncpa [#allocation19], 1
    %s2500 = scalar_lea.sflag [#allocation19], 1
    %2501 = vsyncpa %s2500, 1
    %2502 = vsyncpa [#allocation22], 1
    %s2503 = scalar_lea.sflag [#allocation22], 1
    %2504 = vsyncpa %s2503, 1
    %2505 = vsyncpa [#allocation8], 1
    %s2506 = scalar_lea.sflag [#allocation8], 1
    %2507 = vsyncpa %s2506, 1

</llo_original>
